<compile_context>
chip_gen: v6e
topology: v6e:2x2x1
jax: 0.10.0
libtpu: 0.0.40
codegen_flags: <defaults>
</compile_context>

<pallas_src>
import math
import functools

import jax
import jax.numpy as jnp
from jax import lax
from jax.experimental import pallas as pl
from jax.experimental.pallas import tpu as pltpu


_NEG_INF = -1e30   # large-negative mask value: exp() underflows to exactly 0.


# ----------------------------- in-kernel helpers -----------------------------

def _layernorm(x, g, b, eps=1e-5):
    # x: (T, E) f32, g/b: (1, E) f32
    mu = jnp.mean(x, axis=-1, keepdims=True)
    var = jnp.mean((x - mu) ** 2, axis=-1, keepdims=True)
    return (x - mu) * lax.rsqrt(var + eps) * g + b


def _gelu_exact(x):
    # nn.GELU() default: exact erf formulation (f32).
    return 0.5 * x * (1.0 + lax.erf(x * (1.0 / math.sqrt(2.0))))


def _split_heads(x2d, n_head, hd):
    # (T, n_head*hd) -> (n_head, T, hd) via static lane slices + major-axis
    # stack (avoids lane-splitting reshapes).
    return jnp.stack([x2d[:, h * hd:(h + 1) * hd] for h in range(n_head)], axis=0)


def _merge_heads(x3d, n_head):
    # (n_head, T, hd) -> (T, n_head*hd) via lane-axis concatenate (no scratch
    # round trip).
    return jnp.concatenate([x3d[h] for h in range(n_head)], axis=-1)


# ------------------------------- Pallas kernels -------------------------------

def qkv_kernel(x_ref, ln1_g_ref, ln1_b_ref, w_qkv_ref, b_qkv_ref,
               q_ref, k_ref, v_ref):
    """ln1 + fused QKV projection for one (batch, seq-tile) block."""
    x = x_ref[0]                                            # (TS, E) f32
    xn = _layernorm(x, ln1_g_ref[...], ln1_b_ref[...])      # f32

    # One full-width matmul (K = E, N = 3E) on the MXU: bf16 operands, f32 acc.
    qkv = (jnp.dot(xn.astype(jnp.bfloat16), w_qkv_ref[...],
                   preferred_element_type=jnp.float32) + b_qkv_ref[...])

    emb = q_ref.shape[-1]
    # Three lane-dense (TS, E) stores -- no per-head masked stores here.
    q_ref[0] = qkv[:, 0 * emb:1 * emb].astype(q_ref.dtype)
    k_ref[0] = qkv[:, 1 * emb:2 * emb].astype(k_ref.dtype)
    v_ref[0] = qkv[:, 2 * emb:3 * emb].astype(v_ref.dtype)


def attn_mlp_kernel(x_ref, q_ref, k_ref, v_ref,
                    ln1_g_ref, ln1_b_ref,
                    w_ap_ref, b_ap_ref, ln2_g_ref, ln2_b_ref,
                    w_fc_ref, b_fc_ref, w_mp_ref, b_mp_ref,
                    *rest, n_head, final_ln):
    """Flash causal attention (online softmax over KV tiles) + proj + residual
    + ln2 + MLP (+ optional fused ln_f) for one (batch, q-tile) block."""
    if final_ln:
        lnf_g_ref, lnf_b_ref, o_ref, qh_scr, m_scr, l_scr, acc_scr = rest
    else:
        o_ref, qh_scr, m_scr, l_scr, acc_scr = rest
        lnf_g_ref = lnf_b_ref = None

    qi = pl.program_id(1)
    kv = pl.program_id(2)
    n_kv = pl.num_programs(2)

    tq = q_ref.shape[1]
    tk = k_ref.shape[1]
    emb = q_ref.shape[2]
    hd = emb // n_head
    scale = 1.0 / math.sqrt(hd)

    @pl.when(kv == 0)
    def _init():
        # Head-split q once per q-tile into persistent VMEM scratch.
        qh_scr[...] = _split_heads(q_ref[0], n_head, hd)
        m_scr[...] = jnp.full_like(m_scr, _NEG_INF)
        l_scr[...] = jnp.zeros_like(l_scr)
        acc_scr[...] = jnp.zeros_like(acc_scr)

    # Skip KV blocks that lie entirely above the causal diagonal.
    @pl.when(kv * tk <= qi * tq + (tq - 1))
    def _compute():
        k = _split_heads(k_ref[0], n_head, hd)       # (H, TK, D) bf16
        v = _split_heads(v_ref[0], n_head, hd)       # (H, TK, D) bf16

        # Head-batched QK^T on the MXU (bf16 in, f32 out).
        # TODO(synk): QK^T contracts over D (=head_dim), filling only part of
        # the MXU depth on v6e/v7x; the full-width E/3E/4E projections remain
        # the dominant MXU work by design.
        s = jnp.einsum("hqd,hkd->hqk", qh_scr[...], k,
                       preferred_element_type=jnp.float32) * scale

        # In-block causal mask using global row/col offsets.
        row = qi * tq + lax.broadcasted_iota(jnp.int32, (tq, tk), 0)
        col = kv * tk + lax.broadcasted_iota(jnp.int32, (tq, tk), 1)
        s = jnp.where((col <= row)[None, :, :], s, _NEG_INF)

        # Online-softmax update (f32).
        m_prev = m_scr[...]
        m_new = jnp.maximum(m_prev, jnp.max(s, axis=-1, keepdims=True))
        alpha = jnp.exp(m_prev - m_new)
        p = jnp.exp(s - m_new)
        l_scr[...] = alpha * l_scr[...] + jnp.sum(p, axis=-1, keepdims=True)
        acc_scr[...] = alpha * acc_scr[...] + jnp.einsum(
            "hqk,hkd->hqd", p.astype(jnp.bfloat16), v,
            preferred_element_type=jnp.float32)
        m_scr[...] = m_new

    @pl.when(kv == n_kv - 1)
    def _finalize():
        # Normalize (EUP reciprocal), regroup heads lane-dense, project.
        ctx = acc_scr[...] * pl.reciprocal(l_scr[...], approx=True)   # (H,TQ,D) f32
        ctx2d = _merge_heads(ctx, n_head)                             # (TQ, E) f32
        attn = (jnp.dot(ctx2d.astype(jnp.bfloat16), w_ap_ref[...],
                        preferred_element_type=jnp.float32) + b_ap_ref[...])

        # Recompute the post-ln1 stream for the residual (saves the xn HBM
        # round trip that kernel A used to emit).
        xn = _layernorm(x_ref[0], ln1_g_ref[...], ln1_b_ref[...])
        h = xn + attn
        h = _layernorm(h, ln2_g_ref[...], ln2_b_ref[...])
        ff = (jnp.dot(h.astype(jnp.bfloat16), w_fc_ref[...],
                      preferred_element_type=jnp.float32) + b_fc_ref[...])
        ff = _gelu_exact(ff)
        mlp = (jnp.dot(ff.astype(jnp.bfloat16), w_mp_ref[...],
                       preferred_element_type=jnp.float32) + b_mp_ref[...])
        out = h + mlp

        if final_ln:   # fused ln_f on the last layer (saves one HBM round trip)
            out = _layernorm(out, lnf_g_ref[...], lnf_b_ref[...])
        o_ref[0] = out.astype(o_ref.dtype)


# ------------------------------- wrappers -------------------------------------

@functools.lru_cache(maxsize=None)
def _vmem_limit_bytes():
    cap = 64 * 1024 * 1024
    try:
        cap = int(pltpu.get_tpu_info().vmem_capacity_bytes)
    except Exception:
        pass
    # Leave ~25% headroom for compiler-internal scratch / double buffers:
    # ≈48 MiB on v7x (64 MiB physical), capped at 96 MiB on v5e/v6e (128 MiB).
    return min(int(cap * 3 // 4), 96 * 1024 * 1024)


def _const_spec(shape):
    # Weights/biases: same block for every grid point -> fetched once, VMEM
    # resident, and single-buffered (no wasted second pipeline buffer).
    return pl.BlockSpec(shape, lambda *_: (0,) * len(shape),
                        pipeline_mode=pl.Buffered(1))


def _seq_tile(seq, target=256):
    if seq <= target:
        return seq
    t = target
    while t >= 8:
        if seq % t == 0:
            return t
        t //= 2
    return seq


def run_qkv(x, blk, ts):
    B, S, E = x.shape
    tile_spec = pl.BlockSpec((1, ts, E), lambda b, s: (b, s, 0))
    return pl.pallas_call(
        qkv_kernel,
        out_shape=tuple(jax.ShapeDtypeStruct((B, S, E), jnp.bfloat16)
                        for _ in range(3)),
        grid=(B, S // ts),
        in_specs=[tile_spec,                                          # x tile
                  _const_spec((1, E)), _const_spec((1, E)),           # ln1 g/b
                  _const_spec((E, 3 * E)), _const_spec((1, 3 * E))],  # c_attn
        out_specs=(tile_spec, tile_spec, tile_spec),                  # q, k, v
        compiler_params=pltpu.CompilerParams(
            dimension_semantics=("parallel", "parallel"),
            vmem_limit_bytes=_vmem_limit_bytes()),
    )(x, blk["ln1_g"], blk["ln1_b"], blk["w_qkv"], blk["b_qkv"])


def run_attn_mlp(x, q, k, v, blk, n_head, tq, ln_f=None):
    B, S, E = x.shape
    D = E // n_head
    final_ln = ln_f is not None
    kern = functools.partial(attn_mlp_kernel, n_head=n_head, final_ln=final_ln)
    n_kv = S // tq    # TK == TQ

    q_tile = pl.BlockSpec((1, tq, E), lambda b, qi, kv: (b, qi, 0))
    # Clamp skipped (above-diagonal) KV blocks to the last needed block so the
    # pipeline does not DMA tiles that pl.when will skip anyway.
    kv_tile = pl.BlockSpec((1, tq, E),
                           lambda b, qi, kv: (b, jnp.minimum(kv, qi), 0))

    in_specs = [
        pl.BlockSpec((1, tq, E), lambda b, qi, kv: (b, qi, 0)),   # x tile (f32)
        q_tile, kv_tile, kv_tile,                                 # q / k / v
        _const_spec((1, E)), _const_spec((1, E)),                 # ln1 g/b
        _const_spec((E, E)), _const_spec((1, E)),                 # attn c_proj
        _const_spec((1, E)), _const_spec((1, E)),                 # ln2 g/b
        _const_spec((E, 4 * E)), _const_spec((1, 4 * E)),         # c_fc
        _const_spec((4 * E, E)), _const_spec((1, E)),             # mlp c_proj
    ]
    args = [x, q, k, v, blk["ln1_g"], blk["ln1_b"],
            blk["w_aproj"], blk["b_aproj"], blk["ln2_g"], blk["ln2_b"],
            blk["w_fc"], blk["b_fc"], blk["w_mproj"], blk["b_mproj"]]
    if final_ln:
        in_specs += [_const_spec((1, E)), _const_spec((1, E))]
        args += [ln_f[0], ln_f[1]]

    return pl.pallas_call(
        kern,
        out_shape=jax.ShapeDtypeStruct((B, S, E), jnp.float32),
        grid=(B, S // tq, n_kv),
        in_specs=in_specs,
        out_specs=pl.BlockSpec((1, tq, E), lambda b, qi, kv: (b, qi, 0)),
        scratch_shapes=[pltpu.VMEM((n_head, tq, D), jnp.bfloat16),  # q heads
                        pltpu.VMEM((n_head, tq, 1), jnp.float32),   # m
                        pltpu.VMEM((n_head, tq, 1), jnp.float32),   # l
                        pltpu.VMEM((n_head, tq, D), jnp.float32)],  # acc
        compiler_params=pltpu.CompilerParams(
            # batch and q-tile axes are both "parallel" so megacore (v7x) can
            # split whichever has extent, even at batch=1.
            dimension_semantics=("parallel", "parallel", "arbitrary"),
            vmem_limit_bytes=_vmem_limit_bytes()),
    )(*args)


def gpt_forward(idx, params, n_head):
    B, S = idx.shape
    # embedding gathers + positional add (glue, plain JAX); dropout = identity
    tok_emb = params["wte"][idx]                          # (B, S, E)
    pos_emb = params["wpe"][jnp.arange(S)][None, :, :]    # (1, S, E)
    x = tok_emb + pos_emb

    blocks = params["blocks"]
    n_layer = len(blocks)
    assert n_layer >= 1
    ts = _seq_tile(S)
    for li, blk in enumerate(blocks):
        q, k, v = run_qkv(x, blk, ts)
        ln_f = (params["ln_f_g"], params["ln_f_b"]) if li == n_layer - 1 else None
        x = run_attn_mlp(x, q, k, v, blk, n_head, ts, ln_f)
    return x


# --------------------------- deterministic init --------------------------------

def init_params(key, vocab_size, seq_len, n_embd, n_head, n_layer):
    std = 0.02
    proj_std = 0.02 / math.sqrt(2 * n_layer)
    keys = iter(jax.random.split(key, 8 + 8 * n_layer))

    def nrm(shape, s=std, dtype=jnp.float32):
        w = s * jax.random.normal(next(keys), shape, dtype=jnp.float32)
        return w.astype(dtype)

    params = {
        "wte": nrm((vocab_size, n_embd)),     # tied with lm_head (unused in fwd)
        "wpe": nrm((seq_len, n_embd)),
        "ln_f_g": jnp.ones((1, n_embd), jnp.float32),
        "ln_f_b": jnp.zeros((1, n_embd), jnp.float32),
        "blocks": [],
    }
    for _ in range(n_layer):
        blk = {
            "ln1_g": jnp.ones((1, n_embd), jnp.float32),
            "ln1_b": jnp.zeros((1, n_embd), jnp.float32),
            # Matmul weights pre-cast to bf16 once (MXU operand dtype) so no
            # per-step f32->bf16 cast traffic exists at runtime.
            "w_qkv": nrm((n_embd, 3 * n_embd), dtype=jnp.bfloat16),
            "b_qkv": nrm((1, 3 * n_embd)),
            "w_aproj": nrm((n_embd, n_embd), proj_std, dtype=jnp.bfloat16),
            "b_aproj": nrm((1, n_embd)),
            "ln2_g": jnp.ones((1, n_embd), jnp.float32),
            "ln2_b": jnp.zeros((1, n_embd), jnp.float32),
            "w_fc": nrm((n_embd, 4 * n_embd), dtype=jnp.bfloat16),
            "b_fc": nrm((1, 4 * n_embd)),
            "w_mproj": nrm((4 * n_embd, n_embd), proj_std, dtype=jnp.bfloat16),
            "b_mproj": nrm((1, n_embd)),
        }
        params["blocks"].append(blk)
    return params


# ---------------------------- pure-JAX reference --------------------------------

def _ref_forward(idx, params, n_head):
    def ln(x, g, b):
        mu = x.mean(-1, keepdims=True)
        var = ((x - mu) ** 2).mean(-1, keepdims=True)
        return (x - mu) / jnp.sqrt(var + 1e-5) * g + b

    B, S = idx.shape
    x = params["wte"][idx] + params["wpe"][jnp.arange(S)][None]
    for p in params["blocks"]:
        E = x.shape[-1]
        D = E // n_head
        x = ln(x, p["ln1_g"], p["ln1_b"])
        qkv = x @ p["w_qkv"] + p["b_qkv"]
        q, k, v = jnp.split(qkv, 3, axis=-1)
        q = q.reshape(B, S, n_head, D).transpose(0, 2, 1, 3)
        k = k.reshape(B, S, n_head, D).transpose(0, 2, 1, 3)
        v = v.reshape(B, S, n_head, D).transpose(0, 2, 1, 3)
        s = (q @ k.transpose(0, 1, 3, 2)) / math.sqrt(D)
        mask = jnp.tril(jnp.ones((S, S), bool))
        s = jnp.where(mask, s, -jnp.inf)
        a = jax.nn.softmax(s, axis=-1)
        o = (a @ v).transpose(0, 2, 1, 3).reshape(B, S, E)
        x = x + (o @ p["w_aproj"] + p["b_aproj"])
        x = ln(x, p["ln2_g"], p["ln2_b"])
        h = jax.nn.gelu(x @ p["w_fc"] + p["b_fc"], approximate=False)
        x = x + (h @ p["w_mproj"] + p["b_mproj"])
    return ln(x, params["ln_f_g"], params["ln_f_b"])


# ------------------------------------ main --------------------------------------

if __name__ == "__main__":
    # Small config consistent with GPTConfig fields used in forward().
    vocab_size, seq_len, n_embd, n_head, n_layer = 64, 8, 32, 4, 2
    batch = 2

    key = jax.random.PRNGKey(0)
    pkey, ikey = jax.random.split(key)
    params = init_params(pkey, vocab_size, seq_len, n_embd, n_head, n_layer)
    idx = jax.random.randint(ikey, (batch, seq_len), 0, vocab_size, dtype=jnp.int32)

    fwd = jax.jit(functools.partial(gpt_forward, n_head=n_head))
    out = jax.block_until_ready(fwd(idx, params))

    ref = jax.block_until_ready(_ref_forward(idx, params, n_head))
    assert out.shape == (batch, seq_len, n_embd)
    max_err = float(jnp.abs(out - ref).max())
    # bf16 matmul operands (f32 accumulation) vs f32 reference math.
    assert jnp.allclose(out, ref, atol=2e-2, rtol=2e-2), max_err

    print("KERNEL_OK")
</pallas_src>

<mosaic_0001>
module attributes {stable_mosaic.version = 11 : i64} {
  func.func @qkv_kernel(%arg0: i32, %arg1: i32, %arg2: memref<1x8x32xf32, #tpu.memory_space<vmem>>, %arg3: memref<1x32xf32, #tpu.memory_space<vmem>>, %arg4: memref<1x32xf32, #tpu.memory_space<vmem>>, %arg5: memref<32x96xbf16, #tpu.memory_space<vmem>>, %arg6: memref<1x96xf32, #tpu.memory_space<vmem>>, %arg7: memref<1x8x32xbf16, #tpu.memory_space<vmem>>, %arg8: memref<1x8x32xbf16, #tpu.memory_space<vmem>>, %arg9: memref<1x8x32xbf16, #tpu.memory_space<vmem>>) attributes {dimension_semantics = [#tpu.dimension_semantics<parallel>, #tpu.dimension_semantics<parallel>], iteration_bounds = array<i64: 2, 1>, scalar_prefetch = 0 : i64, scratch_operands = 0 : i64, tpu.core_type = #tpu.core_type<tc>, window_params = [{transform_indices = @transform_0, window_bounds = array<i64: 1, 8, 32>}, {pipeline_mode = #tpu.pipeline_mode<synchronous>, transform_indices = @transform_1, window_bounds = array<i64: 1, 32>}, {pipeline_mode = #tpu.pipeline_mode<synchronous>, transform_indices = @transform_2, window_bounds = array<i64: 1, 32>}, {pipeline_mode = #tpu.pipeline_mode<synchronous>, transform_indices = @transform_3, window_bounds = array<i64: 32, 96>}, {pipeline_mode = #tpu.pipeline_mode<synchronous>, transform_indices = @transform_4, window_bounds = array<i64: 1, 96>}, {transform_indices = @transform_5, window_bounds = array<i64: 1, 8, 32>}, {transform_indices = @transform_6, window_bounds = array<i64: 1, 8, 32>}, {transform_indices = @transform_7, window_bounds = array<i64: 1, 8, 32>}]} {
    %c0 = arith.constant 0 : index
    %c0_0 = arith.constant 0 : index
    %c0_1 = arith.constant 0 : index
    %0 = vector.load %arg2[%c0, %c0_0, %c0_1] : memref<1x8x32xf32, #tpu.memory_space<vmem>>, vector<1x8x32xf32>
    %1 = vector.shape_cast %0 : vector<1x8x32xf32> to vector<8x32xf32>
    %c0_2 = arith.constant 0 : index
    %c0_3 = arith.constant 0 : index
    %2 = vector.load %arg3[%c0_2, %c0_3] : memref<1x32xf32, #tpu.memory_space<vmem>>, vector<1x32xf32>
    %c0_4 = arith.constant 0 : index
    %c0_5 = arith.constant 0 : index
    %3 = vector.load %arg4[%c0_4, %c0_5] : memref<1x32xf32, #tpu.memory_space<vmem>>, vector<1x32xf32>
    %cst = arith.constant dense<0.000000e+00> : vector<8xf32>
    %4 = vector.multi_reduction <add>, %1, %cst [1] : vector<8x32xf32> to vector<8xf32>
    %5 = vector.shape_cast %4 : vector<8xf32> to vector<8x1xf32>
    %cst_6 = arith.constant 3.200000e+01 : f32
    %6 = vector.broadcast %cst_6 : f32 to vector<8x1xf32>
    %7 = arith.divf %5, %6 : vector<8x1xf32>
    %8 = vector.broadcast %7 : vector<8x1xf32> to vector<8x32xf32>
    %9 = arith.subf %1, %8 : vector<8x32xf32>
    %10 = arith.mulf %9, %9 : vector<8x32xf32>
    %cst_7 = arith.constant dense<0.000000e+00> : vector<8xf32>
    %11 = vector.multi_reduction <add>, %10, %cst_7 [1] : vector<8x32xf32> to vector<8xf32>
    %12 = vector.shape_cast %11 : vector<8xf32> to vector<8x1xf32>
    %cst_8 = arith.constant 3.200000e+01 : f32
    %13 = vector.broadcast %cst_8 : f32 to vector<8x1xf32>
    %14 = arith.divf %12, %13 : vector<8x1xf32>
    %15 = vector.broadcast %7 : vector<8x1xf32> to vector<8x32xf32>
    %16 = arith.subf %1, %15 : vector<8x32xf32>
    %cst_9 = arith.constant 9.99999974E-6 : f32
    %17 = vector.broadcast %cst_9 : f32 to vector<8x1xf32>
    %18 = arith.addf %14, %17 : vector<8x1xf32>
    %19 = math.rsqrt %18 : vector<8x1xf32>
    %20 = vector.broadcast %19 : vector<8x1xf32> to vector<8x32xf32>
    %21 = arith.mulf %16, %20 : vector<8x32xf32>
    %22 = vector.broadcast %2 : vector<1x32xf32> to vector<8x32xf32>
    %23 = arith.mulf %21, %22 : vector<8x32xf32>
    %24 = vector.broadcast %3 : vector<1x32xf32> to vector<8x32xf32>
    %25 = arith.addf %23, %24 : vector<8x32xf32>
    %26 = arith.truncf %25 : vector<8x32xf32> to vector<8x32xbf16>
    %c0_10 = arith.constant 0 : index
    %c0_11 = arith.constant 0 : index
    %27 = vector.load %arg5[%c0_10, %c0_11] : memref<32x96xbf16, #tpu.memory_space<vmem>>, vector<32x96xbf16>
    %cst_12 = arith.constant dense<0.000000e+00> : vector<8x96xf32>
    %28 = tpu.matmul %26, %27, %cst_12 {dimension_numbers = #tpu.dot_dimension_numbers<[1], [0], [0], [1], [0, 0, 1, 1], [], []>} : vector<8x32xbf16>, vector<32x96xbf16>, vector<8x96xf32> -> vector<8x96xf32>
    %c0_13 = arith.constant 0 : index
    %c0_14 = arith.constant 0 : index
    %29 = vector.load %arg6[%c0_13, %c0_14] : memref<1x96xf32, #tpu.memory_space<vmem>>, vector<1x96xf32>
    %30 = vector.broadcast %29 : vector<1x96xf32> to vector<8x96xf32>
    %31 = arith.addf %28, %30 : vector<8x96xf32>
    %32 = vector.extract_strided_slice %31 {offsets = [0, 0], sizes = [8, 32], strides = [1, 1]} : vector<8x96xf32> to vector<8x32xf32>
    %33 = arith.truncf %32 : vector<8x32xf32> to vector<8x32xbf16>
    %c0_15 = arith.constant 0 : index
    %c0_16 = arith.constant 0 : index
    %c0_17 = arith.constant 0 : index
    %34 = vector.load %arg7[%c0_15, %c0_16, %c0_17] : memref<1x8x32xbf16, #tpu.memory_space<vmem>>, vector<1x8x32xbf16>
    %35 = vector.shape_cast %34 : vector<1x8x32xbf16> to vector<8x32xbf16>
    %36 = vector.shape_cast %33 : vector<8x32xbf16> to vector<1x8x32xbf16>
    tpu.vector_store %arg7[%c0_15, %c0_16, %c0_17], %36 {strides = array<i32>} : memref<1x8x32xbf16, #tpu.memory_space<vmem>>, vector<1x8x32xbf16>,
    %37 = vector.extract_strided_slice %31 {offsets = [0, 32], sizes = [8, 32], strides = [1, 1]} : vector<8x96xf32> to vector<8x32xf32>
    %38 = arith.truncf %37 : vector<8x32xf32> to vector<8x32xbf16>
    %c0_18 = arith.constant 0 : index
    %c0_19 = arith.constant 0 : index
    %c0_20 = arith.constant 0 : index
    %39 = vector.load %arg8[%c0_18, %c0_19, %c0_20] : memref<1x8x32xbf16, #tpu.memory_space<vmem>>, vector<1x8x32xbf16>
    %40 = vector.shape_cast %39 : vector<1x8x32xbf16> to vector<8x32xbf16>
    %41 = vector.shape_cast %38 : vector<8x32xbf16> to vector<1x8x32xbf16>
    tpu.vector_store %arg8[%c0_18, %c0_19, %c0_20], %41 {strides = array<i32>} : memref<1x8x32xbf16, #tpu.memory_space<vmem>>, vector<1x8x32xbf16>,
    %42 = vector.extract_strided_slice %31 {offsets = [0, 64], sizes = [8, 32], strides = [1, 1]} : vector<8x96xf32> to vector<8x32xf32>
    %43 = arith.truncf %42 : vector<8x32xf32> to vector<8x32xbf16>
    %c0_21 = arith.constant 0 : index
    %c0_22 = arith.constant 0 : index
    %c0_23 = arith.constant 0 : index
    %44 = vector.load %arg9[%c0_21, %c0_22, %c0_23] : memref<1x8x32xbf16, #tpu.memory_space<vmem>>, vector<1x8x32xbf16>
    %45 = vector.shape_cast %44 : vector<1x8x32xbf16> to vector<8x32xbf16>
    %46 = vector.shape_cast %43 : vector<8x32xbf16> to vector<1x8x32xbf16>
    tpu.vector_store %arg9[%c0_21, %c0_22, %c0_23], %46 {strides = array<i32>} : memref<1x8x32xbf16, #tpu.memory_space<vmem>>, vector<1x8x32xbf16>,
    return
  }
  func.func @transform_0(%arg0: i32, %arg1: i32) -> (i32, i32, i32) {
    %c0_i32 = arith.constant 0 : i32
    %c0_i32_0 = arith.constant 0 : i32
    return %arg0, %arg1, %c0_i32 : i32, i32, i32
  }
  func.func @transform_1(%arg0: i32, %arg1: i32) -> (i32, i32) {
    %c0_i32 = arith.constant 0 : i32
    %c0_i32_0 = arith.constant 0 : i32
    %c0_i32_1 = arith.constant 0 : i32
    return %c0_i32, %c0_i32_0 : i32, i32
  }
  func.func @transform_2(%arg0: i32, %arg1: i32) -> (i32, i32) {
    %c0_i32 = arith.constant 0 : i32
    %c0_i32_0 = arith.constant 0 : i32
    %c0_i32_1 = arith.constant 0 : i32
    return %c0_i32, %c0_i32_0 : i32, i32
  }
  func.func @transform_3(%arg0: i32, %arg1: i32) -> (i32, i32) {
    %c0_i32 = arith.constant 0 : i32
    %c0_i32_0 = arith.constant 0 : i32
    %c0_i32_1 = arith.constant 0 : i32
    return %c0_i32, %c0_i32_0 : i32, i32
  }
  func.func @transform_4(%arg0: i32, %arg1: i32) -> (i32, i32) {
    %c0_i32 = arith.constant 0 : i32
    %c0_i32_0 = arith.constant 0 : i32
    %c0_i32_1 = arith.constant 0 : i32
    return %c0_i32, %c0_i32_0 : i32, i32
  }
  func.func @transform_5(%arg0: i32, %arg1: i32) -> (i32, i32, i32) {
    %c0_i32 = arith.constant 0 : i32
    %c0_i32_0 = arith.constant 0 : i32
    return %arg0, %arg1, %c0_i32 : i32, i32, i32
  }
  func.func @transform_6(%arg0: i32, %arg1: i32) -> (i32, i32, i32) {
    %c0_i32 = arith.constant 0 : i32
    %c0_i32_0 = arith.constant 0 : i32
    return %arg0, %arg1, %c0_i32 : i32, i32, i32
  }
  func.func @transform_7(%arg0: i32, %arg1: i32) -> (i32, i32, i32) {
    %c0_i32 = arith.constant 0 : i32
    %c0_i32_0 = arith.constant 0 : i32
    return %arg0, %arg1, %c0_i32 : i32, i32, i32
  }
}

module attributes {stable_mosaic.version = 11 : i64} {
  func.func @attn_mlp_kernel(%arg0: i32, %arg1: i32, %arg2: i32, %arg3: memref<1x8x32xf32, #tpu.memory_space<vmem>>, %arg4: memref<1x8x32xbf16, #tpu.memory_space<vmem>>, %arg5: memref<1x8x32xbf16, #tpu.memory_space<vmem>>, %arg6: memref<1x8x32xbf16, #tpu.memory_space<vmem>>, %arg7: memref<1x32xf32, #tpu.memory_space<vmem>>, %arg8: memref<1x32xf32, #tpu.memory_space<vmem>>, %arg9: memref<32x32xbf16, #tpu.memory_space<vmem>>, %arg10: memref<1x32xf32, #tpu.memory_space<vmem>>, %arg11: memref<1x32xf32, #tpu.memory_space<vmem>>, %arg12: memref<1x32xf32, #tpu.memory_space<vmem>>, %arg13: memref<32x128xbf16, #tpu.memory_space<vmem>>, %arg14: memref<1x128xf32, #tpu.memory_space<vmem>>, %arg15: memref<128x32xbf16, #tpu.memory_space<vmem>>, %arg16: memref<1x32xf32, #tpu.memory_space<vmem>>, %arg17: memref<1x8x32xf32, #tpu.memory_space<vmem>>, %arg18: memref<4x8x8xbf16, #tpu.memory_space<vmem>>, %arg19: memref<4x8x1xf32, #tpu.memory_space<vmem>>, %arg20: memref<4x8x1xf32, #tpu.memory_space<vmem>>, %arg21: memref<4x8x8xf32, #tpu.memory_space<vmem>>) attributes {dimension_semantics = [#tpu.dimension_semantics<parallel>, #tpu.dimension_semantics<parallel>, #tpu.dimension_semantics<arbitrary>], iteration_bounds = array<i64: 2, 1, 1>, scalar_prefetch = 0 : i64, scratch_operands = 4 : i64, tpu.core_type = #tpu.core_type<tc>, window_params = [{transform_indices = @transform_0, window_bounds = array<i64: 1, 8, 32>}, {transform_indices = @transform_1, window_bounds = array<i64: 1, 8, 32>}, {transform_indices = @transform_2, window_bounds = array<i64: 1, 8, 32>}, {transform_indices = @transform_3, window_bounds = array<i64: 1, 8, 32>}, {pipeline_mode = #tpu.pipeline_mode<synchronous>, transform_indices = @transform_4, window_bounds = array<i64: 1, 32>}, {pipeline_mode = #tpu.pipeline_mode<synchronous>, transform_indices = @transform_5, window_bounds = array<i64: 1, 32>}, {pipeline_mode = #tpu.pipeline_mode<synchronous>, transform_indices = @transform_6, window_bounds = array<i64: 32, 32>}, {pipeline_mode = #tpu.pipeline_mode<synchronous>, transform_indices = @transform_7, window_bounds = array<i64: 1, 32>}, {pipeline_mode = #tpu.pipeline_mode<synchronous>, transform_indices = @transform_8, window_bounds = array<i64: 1, 32>}, {pipeline_mode = #tpu.pipeline_mode<synchronous>, transform_indices = @transform_9, window_bounds = array<i64: 1, 32>}, {pipeline_mode = #tpu.pipeline_mode<synchronous>, transform_indices = @transform_10, window_bounds = array<i64: 32, 128>}, {pipeline_mode = #tpu.pipeline_mode<synchronous>, transform_indices = @transform_11, window_bounds = array<i64: 1, 128>}, {pipeline_mode = #tpu.pipeline_mode<synchronous>, transform_indices = @transform_12, window_bounds = array<i64: 128, 32>}, {pipeline_mode = #tpu.pipeline_mode<synchronous>, transform_indices = @transform_13, window_bounds = array<i64: 1, 32>}, {transform_indices = @transform_14, window_bounds = array<i64: 1, 8, 32>}]} {
    %c0_i32 = arith.constant 0 : i32
    %0 = arith.cmpi eq, %arg2, %c0_i32 : i32
    %1 = arith.extui %0 : i1 to i32
    %c0_i32_0 = arith.constant 0 : i32
    %2 = arith.cmpi ne, %1, %c0_i32_0 : i32
    scf.if %2 {
      %c0 = arith.constant 0 : index
      %c0_5 = arith.constant 0 : index
      %c0_6 = arith.constant 0 : index
      %12 = vector.load %arg4[%c0, %c0_5, %c0_6] : memref<1x8x32xbf16, #tpu.memory_space<vmem>>, vector<1x8x32xbf16>
      %13 = vector.shape_cast %12 : vector<1x8x32xbf16> to vector<8x32xbf16>
      %14 = vector.extract_strided_slice %13 {offsets = [0, 0], sizes = [8, 8], strides = [1, 1]} : vector<8x32xbf16> to vector<8x8xbf16>
      %15 = vector.extract_strided_slice %13 {offsets = [0, 8], sizes = [8, 8], strides = [1, 1]} : vector<8x32xbf16> to vector<8x8xbf16>
      %16 = vector.extract_strided_slice %13 {offsets = [0, 16], sizes = [8, 8], strides = [1, 1]} : vector<8x32xbf16> to vector<8x8xbf16>
      %17 = vector.extract_strided_slice %13 {offsets = [0, 24], sizes = [8, 8], strides = [1, 1]} : vector<8x32xbf16> to vector<8x8xbf16>
      %18 = vector.shape_cast %14 : vector<8x8xbf16> to vector<1x8x8xbf16>
      %19 = vector.shape_cast %15 : vector<8x8xbf16> to vector<1x8x8xbf16>
      %20 = vector.shape_cast %16 : vector<8x8xbf16> to vector<1x8x8xbf16>
      %21 = vector.shape_cast %17 : vector<8x8xbf16> to vector<1x8x8xbf16>
      %22 = tpu.concatenate %18, %19, %20, %21 in 0 : vector<1x8x8xbf16>, vector<1x8x8xbf16>, vector<1x8x8xbf16>, vector<1x8x8xbf16> -> vector<4x8x8xbf16>
      %c0_7 = arith.constant 0 : index
      %c0_8 = arith.constant 0 : index
      %c0_9 = arith.constant 0 : index
      %23 = vector.load %arg18[%c0_7, %c0_8, %c0_9] : memref<4x8x8xbf16, #tpu.memory_space<vmem>>, vector<4x8x8xbf16>
      tpu.vector_store %arg18[%c0_7, %c0_8, %c0_9], %22 {strides = array<i32>} : memref<4x8x8xbf16, #tpu.memory_space<vmem>>, vector<4x8x8xbf16>,
      %cst = arith.constant -1.000000e+30 : f32
      %24 = vector.broadcast %cst : f32 to vector<4x8x1xf32>
      %c0_10 = arith.constant 0 : index
      %c0_11 = arith.constant 0 : index
      %c0_12 = arith.constant 0 : index
      %25 = vector.load %arg19[%c0_10, %c0_11, %c0_12] : memref<4x8x1xf32, #tpu.memory_space<vmem>>, vector<4x8x1xf32>
      tpu.vector_store %arg19[%c0_10, %c0_11, %c0_12], %24 {strides = array<i32>} : memref<4x8x1xf32, #tpu.memory_space<vmem>>, vector<4x8x1xf32>,
      %cst_13 = arith.constant 0.000000e+00 : f32
      %26 = vector.broadcast %cst_13 : f32 to vector<4x8x1xf32>
      %c0_14 = arith.constant 0 : index
      %c0_15 = arith.constant 0 : index
      %c0_16 = arith.constant 0 : index
      %27 = vector.load %arg20[%c0_14, %c0_15, %c0_16] : memref<4x8x1xf32, #tpu.memory_space<vmem>>, vector<4x8x1xf32>
      tpu.vector_store %arg20[%c0_14, %c0_15, %c0_16], %26 {strides = array<i32>} : memref<4x8x1xf32, #tpu.memory_space<vmem>>, vector<4x8x1xf32>,
      %cst_17 = arith.constant 0.000000e+00 : f32
      %28 = vector.broadcast %cst_17 : f32 to vector<4x8x8xf32>
      %c0_18 = arith.constant 0 : index
      %c0_19 = arith.constant 0 : index
      %c0_20 = arith.constant 0 : index
      %29 = vector.load %arg21[%c0_18, %c0_19, %c0_20] : memref<4x8x8xf32, #tpu.memory_space<vmem>>, vector<4x8x8xf32>
      tpu.vector_store %arg21[%c0_18, %c0_19, %c0_20], %28 {strides = array<i32>} : memref<4x8x8xf32, #tpu.memory_space<vmem>>, vector<4x8x8xf32>,
    } else {
    }
    %c8_i32 = arith.constant 8 : i32
    %3 = arith.muli %arg2, %c8_i32 : i32
    %c8_i32_1 = arith.constant 8 : i32
    %4 = arith.muli %arg1, %c8_i32_1 : i32
    %c7_i32 = arith.constant 7 : i32
    %5 = arith.addi %4, %c7_i32 : i32
    %6 = arith.cmpi sle, %3, %5 : i32
    %7 = arith.extui %6 : i1 to i32
    %c0_i32_2 = arith.constant 0 : i32
    %8 = arith.cmpi ne, %7, %c0_i32_2 : i32
    scf.if %8 {
      %c0 = arith.constant 0 : index
      %c0_5 = arith.constant 0 : index
      %c0_6 = arith.constant 0 : index
      %12 = vector.load %arg5[%c0, %c0_5, %c0_6] : memref<1x8x32xbf16, #tpu.memory_space<vmem>>, vector<1x8x32xbf16>
      %13 = vector.shape_cast %12 : vector<1x8x32xbf16> to vector<8x32xbf16>
      %14 = vector.extract_strided_slice %13 {offsets = [0, 0], sizes = [8, 8], strides = [1, 1]} : vector<8x32xbf16> to vector<8x8xbf16>
      %15 = vector.extract_strided_slice %13 {offsets = [0, 8], sizes = [8, 8], strides = [1, 1]} : vector<8x32xbf16> to vector<8x8xbf16>
      %16 = vector.extract_strided_slice %13 {offsets = [0, 16], sizes = [8, 8], strides = [1, 1]} : vector<8x32xbf16> to vector<8x8xbf16>
      %17 = vector.extract_strided_slice %13 {offsets = [0, 24], sizes = [8, 8], strides = [1, 1]} : vector<8x32xbf16> to vector<8x8xbf16>
      %18 = vector.shape_cast %14 : vector<8x8xbf16> to vector<1x8x8xbf16>
      %19 = vector.shape_cast %15 : vector<8x8xbf16> to vector<1x8x8xbf16>
      %20 = vector.shape_cast %16 : vector<8x8xbf16> to vector<1x8x8xbf16>
      %21 = vector.shape_cast %17 : vector<8x8xbf16> to vector<1x8x8xbf16>
      %22 = tpu.concatenate %18, %19, %20, %21 in 0 : vector<1x8x8xbf16>, vector<1x8x8xbf16>, vector<1x8x8xbf16>, vector<1x8x8xbf16> -> vector<4x8x8xbf16>
      %c0_7 = arith.constant 0 : index
      %c0_8 = arith.constant 0 : index
      %c0_9 = arith.constant 0 : index
      %23 = vector.load %arg6[%c0_7, %c0_8, %c0_9] : memref<1x8x32xbf16, #tpu.memory_space<vmem>>, vector<1x8x32xbf16>
      %24 = vector.shape_cast %23 : vector<1x8x32xbf16> to vector<8x32xbf16>
      %25 = vector.extract_strided_slice %24 {offsets = [0, 0], sizes = [8, 8], strides = [1, 1]} : vector<8x32xbf16> to vector<8x8xbf16>
      %26 = vector.extract_strided_slice %24 {offsets = [0, 8], sizes = [8, 8], strides = [1, 1]} : vector<8x32xbf16> to vector<8x8xbf16>
      %27 = vector.extract_strided_slice %24 {offsets = [0, 16], sizes = [8, 8], strides = [1, 1]} : vector<8x32xbf16> to vector<8x8xbf16>
      %28 = vector.extract_strided_slice %24 {offsets = [0, 24], sizes = [8, 8], strides = [1, 1]} : vector<8x32xbf16> to vector<8x8xbf16>
      %29 = vector.shape_cast %25 : vector<8x8xbf16> to vector<1x8x8xbf16>
      %30 = vector.shape_cast %26 : vector<8x8xbf16> to vector<1x8x8xbf16>
      %31 = vector.shape_cast %27 : vector<8x8xbf16> to vector<1x8x8xbf16>
      %32 = vector.shape_cast %28 : vector<8x8xbf16> to vector<1x8x8xbf16>
      %33 = tpu.concatenate %29, %30, %31, %32 in 0 : vector<1x8x8xbf16>, vector<1x8x8xbf16>, vector<1x8x8xbf16>, vector<1x8x8xbf16> -> vector<4x8x8xbf16>
      %c0_10 = arith.constant 0 : index
      %c0_11 = arith.constant 0 : index
      %c0_12 = arith.constant 0 : index
      %34 = vector.load %arg18[%c0_10, %c0_11, %c0_12] : memref<4x8x8xbf16, #tpu.memory_space<vmem>>, vector<4x8x8xbf16>
      "tpu.trace_start"() <{level = 10 : i32, message = "hqd,hkd->hqk"}> : () -> ()
      %cst = arith.constant dense<0.000000e+00> : vector<4x8x8xf32>
      %35 = tpu.matmul %34, %22, %cst {dimension_numbers = #tpu.dot_dimension_numbers<[2], [2], [1], [1], [0, 0, 0, 1, 1, 1], [0], [0]>} : vector<4x8x8xbf16>, vector<4x8x8xbf16>, vector<4x8x8xf32> -> vector<4x8x8xf32>
      "tpu.trace_stop"() : () -> ()
      %cst_13 = arith.constant 0.353553385 : f32
      %36 = vector.broadcast %cst_13 : f32 to vector<4x8x8xf32>
      %37 = arith.mulf %35, %36 : vector<4x8x8xf32>
      %c8_i32_14 = arith.constant 8 : i32
      %38 = arith.muli %arg1, %c8_i32_14 : i32
      %39 = tpu.iota {dimensions = array<i32: 0>} : vector<8x8xi32>
      %40 = vector.broadcast %38 : i32 to vector<8x8xi32>
      %41 = arith.addi %40, %39 : vector<8x8xi32>
      %c8_i32_15 = arith.constant 8 : i32
      %42 = arith.muli %arg2, %c8_i32_15 : i32
      %43 = tpu.iota {dimensions = array<i32: 1>} : vector<8x8xi32>
      %44 = vector.broadcast %42 : i32 to vector<8x8xi32>
      %45 = arith.addi %44, %43 : vector<8x8xi32>
      %46 = arith.cmpi sle, %45, %41 : vector<8x8xi32>
      %47 = vector.shape_cast %46 : vector<8x8xi1> to vector<1x8x8xi1>
      %cst_16 = arith.constant -1.000000e+30 : f32
      %48 = vector.shape_cast %47 : vector<1x8x8xi1> to vector<1x8x8xi1>
      %49 = vector.broadcast %48 : vector<1x8x8xi1> to vector<4x8x8xi1>
      %50 = vector.broadcast %cst_16 : f32 to vector<4x8x8xf32>
      %51 = arith.select %49, %37, %50 : vector<4x8x8xi1>, vector<4x8x8xf32>
      %c0_17 = arith.constant 0 : index
      %c0_18 = arith.constant 0 : index
      %c0_19 = arith.constant 0 : index
      %52 = vector.load %arg19[%c0_17, %c0_18, %c0_19] : memref<4x8x1xf32, #tpu.memory_space<vmem>>, vector<4x8x1xf32>
      %cst_20 = arith.constant dense<0xFF800000> : vector<4x8xf32>
      %53 = vector.multi_reduction <maximumf>, %51, %cst_20 [2] : vector<4x8x8xf32> to vector<4x8xf32>
      %54 = vector.shape_cast %53 : vector<4x8xf32> to vector<4x8x1xf32>
      %55 = arith.maximumf %52, %54 : vector<4x8x1xf32>
      %56 = arith.subf %52, %55 : vector<4x8x1xf32>
      %57 = math.exp %56 : vector<4x8x1xf32>
      %58 = vector.broadcast %55 : vector<4x8x1xf32> to vector<4x8x8xf32>
      %59 = arith.subf %51, %58 : vector<4x8x8xf32>
      %60 = math.exp %59 : vector<4x8x8xf32>
      %c0_21 = arith.constant 0 : index
      %c0_22 = arith.constant 0 : index
      %c0_23 = arith.constant 0 : index
      %61 = vector.load %arg20[%c0_21, %c0_22, %c0_23] : memref<4x8x1xf32, #tpu.memory_space<vmem>>, vector<4x8x1xf32>
      %62 = arith.mulf %57, %61 : vector<4x8x1xf32>
      %cst_24 = arith.constant dense<0.000000e+00> : vector<4x8xf32>
      %63 = vector.multi_reduction <add>, %60, %cst_24 [2] : vector<4x8x8xf32> to vector<4x8xf32>
      %64 = vector.shape_cast %63 : vector<4x8xf32> to vector<4x8x1xf32>
      %65 = arith.addf %62, %64 : vector<4x8x1xf32>
      %c0_25 = arith.constant 0 : index
      %c0_26 = arith.constant 0 : index
      %c0_27 = arith.constant 0 : index
      %66 = vector.load %arg20[%c0_25, %c0_26, %c0_27] : memref<4x8x1xf32, #tpu.memory_space<vmem>>, vector<4x8x1xf32>
      tpu.vector_store %arg20[%c0_25, %c0_26, %c0_27], %65 {strides = array<i32>} : memref<4x8x1xf32, #tpu.memory_space<vmem>>, vector<4x8x1xf32>,
      %c0_28 = arith.constant 0 : index
      %c0_29 = arith.constant 0 : index
      %c0_30 = arith.constant 0 : index
      %67 = vector.load %arg21[%c0_28, %c0_29, %c0_30] : memref<4x8x8xf32, #tpu.memory_space<vmem>>, vector<4x8x8xf32>
      %68 = vector.broadcast %57 : vector<4x8x1xf32> to vector<4x8x8xf32>
      %69 = arith.mulf %68, %67 : vector<4x8x8xf32>
      %70 = arith.truncf %60 : vector<4x8x8xf32> to vector<4x8x8xbf16>
      "tpu.trace_start"() <{level = 10 : i32, message = "hqk,hkd->hqd"}> : () -> ()
      %cst_31 = arith.constant dense<0.000000e+00> : vector<4x8x8xf32>
      %71 = tpu.matmul %70, %33, %cst_31 {dimension_numbers = #tpu.dot_dimension_numbers<[2], [1], [1], [2], [0, 0, 0, 1, 1, 2], [0], [0]>} : vector<4x8x8xbf16>, vector<4x8x8xbf16>, vector<4x8x8xf32> -> vector<4x8x8xf32>
      "tpu.trace_stop"() : () -> ()
      %72 = arith.addf %69, %71 : vector<4x8x8xf32>
      %c0_32 = arith.constant 0 : index
      %c0_33 = arith.constant 0 : index
      %c0_34 = arith.constant 0 : index
      %73 = vector.load %arg21[%c0_32, %c0_33, %c0_34] : memref<4x8x8xf32, #tpu.memory_space<vmem>>, vector<4x8x8xf32>
      tpu.vector_store %arg21[%c0_32, %c0_33, %c0_34], %72 {strides = array<i32>} : memref<4x8x8xf32, #tpu.memory_space<vmem>>, vector<4x8x8xf32>,
      %c0_35 = arith.constant 0 : index
      %c0_36 = arith.constant 0 : index
      %c0_37 = arith.constant 0 : index
      %74 = vector.load %arg19[%c0_35, %c0_36, %c0_37] : memref<4x8x1xf32, #tpu.memory_space<vmem>>, vector<4x8x1xf32>
      tpu.vector_store %arg19[%c0_35, %c0_36, %c0_37], %55 {strides = array<i32>} : memref<4x8x1xf32, #tpu.memory_space<vmem>>, vector<4x8x1xf32>,
    } else {
    }
    %c0_i32_3 = arith.constant 0 : i32
    %9 = arith.cmpi eq, %arg2, %c0_i32_3 : i32
    %10 = arith.extui %9 : i1 to i32
    %c0_i32_4 = arith.constant 0 : i32
    %11 = arith.cmpi ne, %10, %c0_i32_4 : i32
    scf.if %11 {
      %c0 = arith.constant 0 : index
      %c0_5 = arith.constant 0 : index
      %c0_6 = arith.constant 0 : index
      %12 = vector.load %arg21[%c0, %c0_5, %c0_6] : memref<4x8x8xf32, #tpu.memory_space<vmem>>, vector<4x8x8xf32>
      %c0_7 = arith.constant 0 : index
      %c0_8 = arith.constant 0 : index
      %c0_9 = arith.constant 0 : index
      %13 = vector.load %arg20[%c0_7, %c0_8, %c0_9] : memref<4x8x1xf32, #tpu.memory_space<vmem>>, vector<4x8x1xf32>
      %14 = tpu.reciprocal %13 {approx = true} : vector<4x8x1xf32> -> vector<4x8x1xf32>
      %15 = vector.broadcast %14 : vector<4x8x1xf32> to vector<4x8x8xf32>
      %16 = arith.mulf %12, %15 : vector<4x8x8xf32>
      %17 = vector.extract_strided_slice %16 {offsets = [0, 0, 0], sizes = [1, 8, 8], strides = [1, 1, 1]} : vector<4x8x8xf32> to vector<1x8x8xf32>
      %18 = vector.shape_cast %17 : vector<1x8x8xf32> to vector<8x8xf32>
      %19 = vector.extract_strided_slice %16 {offsets = [1, 0, 0], sizes = [1, 8, 8], strides = [1, 1, 1]} : vector<4x8x8xf32> to vector<1x8x8xf32>
      %20 = vector.shape_cast %19 : vector<1x8x8xf32> to vector<8x8xf32>
      %21 = vector.extract_strided_slice %16 {offsets = [2, 0, 0], sizes = [1, 8, 8], strides = [1, 1, 1]} : vector<4x8x8xf32> to vector<1x8x8xf32>
      %22 = vector.shape_cast %21 : vector<1x8x8xf32> to vector<8x8xf32>
      %23 = vector.extract_strided_slice %16 {offsets = [3, 0, 0], sizes = [1, 8, 8], strides = [1, 1, 1]} : vector<4x8x8xf32> to vector<1x8x8xf32>
      %24 = vector.shape_cast %23 : vector<1x8x8xf32> to vector<8x8xf32>
      %25 = tpu.concatenate %18, %20, %22, %24 in 1 : vector<8x8xf32>, vector<8x8xf32>, vector<8x8xf32>, vector<8x8xf32> -> vector<8x32xf32>
      %26 = arith.truncf %25 : vector<8x32xf32> to vector<8x32xbf16>
      %c0_10 = arith.constant 0 : index
      %c0_11 = arith.constant 0 : index
      %27 = vector.load %arg9[%c0_10, %c0_11] : memref<32x32xbf16, #tpu.memory_space<vmem>>, vector<32x32xbf16>
      %cst = arith.constant dense<0.000000e+00> : vector<8x32xf32>
      %28 = tpu.matmul %26, %27, %cst {dimension_numbers = #tpu.dot_dimension_numbers<[1], [0], [0], [1], [0, 0, 1, 1], [], []>} : vector<8x32xbf16>, vector<32x32xbf16>, vector<8x32xf32> -> vector<8x32xf32>
      %c0_12 = arith.constant 0 : index
      %c0_13 = arith.constant 0 : index
      %29 = vector.load %arg10[%c0_12, %c0_13] : memref<1x32xf32, #tpu.memory_space<vmem>>, vector<1x32xf32>
      %30 = vector.broadcast %29 : vector<1x32xf32> to vector<8x32xf32>
      %31 = arith.addf %28, %30 : vector<8x32xf32>
      %c0_14 = arith.constant 0 : index
      %c0_15 = arith.constant 0 : index
      %c0_16 = arith.constant 0 : index
      %32 = vector.load %arg3[%c0_14, %c0_15, %c0_16] : memref<1x8x32xf32, #tpu.memory_space<vmem>>, vector<1x8x32xf32>
      %33 = vector.shape_cast %32 : vector<1x8x32xf32> to vector<8x32xf32>
      %c0_17 = arith.constant 0 : index
      %c0_18 = arith.constant 0 : index
      %34 = vector.load %arg7[%c0_17, %c0_18] : memref<1x32xf32, #tpu.memory_space<vmem>>, vector<1x32xf32>
      %c0_19 = arith.constant 0 : index
      %c0_20 = arith.constant 0 : index
      %35 = vector.load %arg8[%c0_19, %c0_20] : memref<1x32xf32, #tpu.memory_space<vmem>>, vector<1x32xf32>
      %cst_21 = arith.constant dense<0.000000e+00> : vector<8xf32>
      %36 = vector.multi_reduction <add>, %33, %cst_21 [1] : vector<8x32xf32> to vector<8xf32>
      %37 = vector.shape_cast %36 : vector<8xf32> to vector<8x1xf32>
      %cst_22 = arith.constant 3.200000e+01 : f32
      %38 = vector.broadcast %cst_22 : f32 to vector<8x1xf32>
      %39 = arith.divf %37, %38 : vector<8x1xf32>
      %40 = vector.broadcast %39 : vector<8x1xf32> to vector<8x32xf32>
      %41 = arith.subf %33, %40 : vector<8x32xf32>
      %42 = arith.mulf %41, %41 : vector<8x32xf32>
      %cst_23 = arith.constant dense<0.000000e+00> : vector<8xf32>
      %43 = vector.multi_reduction <add>, %42, %cst_23 [1] : vector<8x32xf32> to vector<8xf32>
      %44 = vector.shape_cast %43 : vector<8xf32> to vector<8x1xf32>
      %cst_24 = arith.constant 3.200000e+01 : f32
      %45 = vector.broadcast %cst_24 : f32 to vector<8x1xf32>
      %46 = arith.divf %44, %45 : vector<8x1xf32>
      %47 = vector.broadcast %39 : vector<8x1xf32> to vector<8x32xf32>
      %48 = arith.subf %33, %47 : vector<8x32xf32>
      %cst_25 = arith.constant 9.99999974E-6 : f32
      %49 = vector.broadcast %cst_25 : f32 to vector<8x1xf32>
      %50 = arith.addf %46, %49 : vector<8x1xf32>
      %51 = math.rsqrt %50 : vector<8x1xf32>
      %52 = vector.broadcast %51 : vector<8x1xf32> to vector<8x32xf32>
      %53 = arith.mulf %48, %52 : vector<8x32xf32>
      %54 = vector.broadcast %34 : vector<1x32xf32> to vector<8x32xf32>
      %55 = arith.mulf %53, %54 : vector<8x32xf32>
      %56 = vector.broadcast %35 : vector<1x32xf32> to vector<8x32xf32>
      %57 = arith.addf %55, %56 : vector<8x32xf32>
      %58 = arith.addf %57, %31 : vector<8x32xf32>
      %c0_26 = arith.constant 0 : index
      %c0_27 = arith.constant 0 : index
      %59 = vector.load %arg11[%c0_26, %c0_27] : memref<1x32xf32, #tpu.memory_space<vmem>>, vector<1x32xf32>
      %c0_28 = arith.constant 0 : index
      %c0_29 = arith.constant 0 : index
      %60 = vector.load %arg12[%c0_28, %c0_29] : memref<1x32xf32, #tpu.memory_space<vmem>>, vector<1x32xf32>
      %cst_30 = arith.constant dense<0.000000e+00> : vector<8xf32>
      %61 = vector.multi_reduction <add>, %58, %cst_30 [1] : vector<8x32xf32> to vector<8xf32>
      %62 = vector.shape_cast %61 : vector<8xf32> to vector<8x1xf32>
      %cst_31 = arith.constant 3.200000e+01 : f32
      %63 = vector.broadcast %cst_31 : f32 to vector<8x1xf32>
      %64 = arith.divf %62, %63 : vector<8x1xf32>
      %65 = vector.broadcast %64 : vector<8x1xf32> to vector<8x32xf32>
      %66 = arith.subf %58, %65 : vector<8x32xf32>
      %67 = arith.mulf %66, %66 : vector<8x32xf32>
      %cst_32 = arith.constant dense<0.000000e+00> : vector<8xf32>
      %68 = vector.multi_reduction <add>, %67, %cst_32 [1] : vector<8x32xf32> to vector<8xf32>
      %69 = vector.shape_cast %68 : vector<8xf32> to vector<8x1xf32>
      %cst_33 = arith.constant 3.200000e+01 : f32
      %70 = vector.broadcast %cst_33 : f32 to vector<8x1xf32>
      %71 = arith.divf %69, %70 : vector<8x1xf32>
      %72 = vector.broadcast %64 : vector<8x1xf32> to vector<8x32xf32>
      %73 = arith.subf %58, %72 : vector<8x32xf32>
      %cst_34 = arith.constant 9.99999974E-6 : f32
      %74 = vector.broadcast %cst_34 : f32 to vector<8x1xf32>
      %75 = arith.addf %71, %74 : vector<8x1xf32>
      %76 = math.rsqrt %75 : vector<8x1xf32>
      %77 = vector.broadcast %76 : vector<8x1xf32> to vector<8x32xf32>
      %78 = arith.mulf %73, %77 : vector<8x32xf32>
      %79 = vector.broadcast %59 : vector<1x32xf32> to vector<8x32xf32>
      %80 = arith.mulf %78, %79 : vector<8x32xf32>
      %81 = vector.broadcast %60 : vector<1x32xf32> to vector<8x32xf32>
      %82 = arith.addf %80, %81 : vector<8x32xf32>
      %83 = arith.truncf %82 : vector<8x32xf32> to vector<8x32xbf16>
      %c0_35 = arith.constant 0 : index
      %c0_36 = arith.constant 0 : index
      %84 = vector.load %arg13[%c0_35, %c0_36] : memref<32x128xbf16, #tpu.memory_space<vmem>>, vector<32x128xbf16>
      %cst_37 = arith.constant dense<0.000000e+00> : vector<8x128xf32>
      %85 = tpu.matmul %83, %84, %cst_37 {dimension_numbers = #tpu.dot_dimension_numbers<[1], [0], [0], [1], [0, 0, 1, 1], [], []>} : vector<8x32xbf16>, vector<32x128xbf16>, vector<8x128xf32> -> vector<8x128xf32>
      %c0_38 = arith.constant 0 : index
      %c0_39 = arith.constant 0 : index
      %86 = vector.load %arg14[%c0_38, %c0_39] : memref<1x128xf32, #tpu.memory_space<vmem>>, vector<1x128xf32>
      %87 = vector.broadcast %86 : vector<1x128xf32> to vector<8x128xf32>
      %88 = arith.addf %85, %87 : vector<8x128xf32>
      %cst_40 = arith.constant 5.000000e-01 : f32
      %89 = vector.broadcast %cst_40 : f32 to vector<8x128xf32>
      %90 = arith.mulf %89, %88 : vector<8x128xf32>
      %cst_41 = arith.constant 0.707106769 : f32
      %91 = vector.broadcast %cst_41 : f32 to vector<8x128xf32>
      %92 = arith.mulf %88, %91 : vector<8x128xf32>
      %93 = math.erf %92 : vector<8x128xf32>
      %cst_42 = arith.constant 1.000000e+00 : f32
      %94 = vector.broadcast %cst_42 : f32 to vector<8x128xf32>
      %95 = arith.addf %94, %93 : vector<8x128xf32>
      %96 = arith.mulf %90, %95 : vector<8x128xf32>
      %97 = arith.truncf %96 : vector<8x128xf32> to vector<8x128xbf16>
      %c0_43 = arith.constant 0 : index
      %c0_44 = arith.constant 0 : index
      %98 = vector.load %arg15[%c0_43, %c0_44] : memref<128x32xbf16, #tpu.memory_space<vmem>>, vector<128x32xbf16>
      %cst_45 = arith.constant dense<0.000000e+00> : vector<8x32xf32>
      %99 = tpu.matmul %97, %98, %cst_45 {dimension_numbers = #tpu.dot_dimension_numbers<[1], [0], [0], [1], [0, 0, 1, 1], [], []>} : vector<8x128xbf16>, vector<128x32xbf16>, vector<8x32xf32> -> vector<8x32xf32>
      %c0_46 = arith.constant 0 : index
      %c0_47 = arith.constant 0 : index
      %100 = vector.load %arg16[%c0_46, %c0_47] : memref<1x32xf32, #tpu.memory_space<vmem>>, vector<1x32xf32>
      %101 = vector.broadcast %100 : vector<1x32xf32> to vector<8x32xf32>
      %102 = arith.addf %99, %101 : vector<8x32xf32>
      %103 = arith.addf %82, %102 : vector<8x32xf32>
      %c0_48 = arith.constant 0 : index
      %c0_49 = arith.constant 0 : index
      %c0_50 = arith.constant 0 : index
      %104 = vector.load %arg17[%c0_48, %c0_49, %c0_50] : memref<1x8x32xf32, #tpu.memory_space<vmem>>, vector<1x8x32xf32>
      %105 = vector.shape_cast %104 : vector<1x8x32xf32> to vector<8x32xf32>
      %106 = vector.shape_cast %103 : vector<8x32xf32> to vector<1x8x32xf32>
      tpu.vector_store %arg17[%c0_48, %c0_49, %c0_50], %106 {strides = array<i32>} : memref<1x8x32xf32, #tpu.memory_space<vmem>>, vector<1x8x32xf32>,
    } else {
    }
    return
  }
  func.func @transform_0(%arg0: i32, %arg1: i32, %arg2: i32) -> (i32, i32, i32) {
    %c0_i32 = arith.constant 0 : i32
    %c0_i32_0 = arith.constant 0 : i32
    return %arg0, %arg1, %c0_i32 : i32, i32, i32
  }
  func.func @transform_1(%arg0: i32, %arg1: i32, %arg2: i32) -> (i32, i32, i32) {
    %c0_i32 = arith.constant 0 : i32
    %c0_i32_0 = arith.constant 0 : i32
    return %arg0, %arg1, %c0_i32 : i32, i32, i32
  }
  func.func @transform_2(%arg0: i32, %arg1: i32, %arg2: i32) -> (i32, i32, i32) {
    %0 = arith.minsi %arg2, %arg1 : i32
    %c0_i32 = arith.constant 0 : i32
    %c0_i32_0 = arith.constant 0 : i32
    return %arg0, %0, %c0_i32 : i32, i32, i32
  }
  func.func @transform_3(%arg0: i32, %arg1: i32, %arg2: i32) -> (i32, i32, i32) {
    %0 = arith.minsi %arg2, %arg1 : i32
    %c0_i32 = arith.constant 0 : i32
    %c0_i32_0 = arith.constant 0 : i32
    return %arg0, %0, %c0_i32 : i32, i32, i32
  }
  func.func @transform_4(%arg0: i32, %arg1: i32, %arg2: i32) -> (i32, i32) {
    %c0_i32 = arith.constant 0 : i32
    %c0_i32_0 = arith.constant 0 : i32
    %c0_i32_1 = arith.constant 0 : i32
    return %c0_i32, %c0_i32_0 : i32, i32
  }
  func.func @transform_5(%arg0: i32, %arg1: i32, %arg2: i32) -> (i32, i32) {
    %c0_i32 = arith.constant 0 : i32
    %c0_i32_0 = arith.constant 0 : i32
    %c0_i32_1 = arith.constant 0 : i32
    return %c0_i32, %c0_i32_0 : i32, i32
  }
  func.func @transform_6(%arg0: i32, %arg1: i32, %arg2: i32) -> (i32, i32) {
    %c0_i32 = arith.constant 0 : i32
    %c0_i32_0 = arith.constant 0 : i32
    %c0_i32_1 = arith.constant 0 : i32
    return %c0_i32, %c0_i32_0 : i32, i32
  }
  func.func @transform_7(%arg0: i32, %arg1: i32, %arg2: i32) -> (i32, i32) {
    %c0_i32 = arith.constant 0 : i32
    %c0_i32_0 = arith.constant 0 : i32
    %c0_i32_1 = arith.constant 0 : i32
    return %c0_i32, %c0_i32_0 : i32, i32
  }
  func.func @transform_8(%arg0: i32, %arg1: i32, %arg2: i32) -> (i32, i32) {
    %c0_i32 = arith.constant 0 : i32
    %c0_i32_0 = arith.constant 0 : i32
    %c0_i32_1 = arith.constant 0 : i32
    return %c0_i32, %c0_i32_0 : i32, i32
  }
  func.func @transform_9(%arg0: i32, %arg1: i32, %arg2: i32) -> (i32, i32) {
    %c0_i32 = arith.constant 0 : i32
    %c0_i32_0 = arith.constant 0 : i32
    %c0_i32_1 = arith.constant 0 : i32
    return %c0_i32, %c0_i32_0 : i32, i32
  }
  func.func @transform_10(%arg0: i32, %arg1: i32, %arg2: i32) -> (i32, i32) {
    %c0_i32 = arith.constant 0 : i32
    %c0_i32_0 = arith.constant 0 : i32
    %c0_i32_1 = arith.constant 0 : i32
    return %c0_i32, %c0_i32_0 : i32, i32
  }
  func.func @transform_11(%arg0: i32, %arg1: i32, %arg2: i32) -> (i32, i32) {
    %c0_i32 = arith.constant 0 : i32
    %c0_i32_0 = arith.constant 0 : i32
    %c0_i32_1 = arith.constant 0 : i32
    return %c0_i32, %c0_i32_0 : i32, i32
  }
  func.func @transform_12(%arg0: i32, %arg1: i32, %arg2: i32) -> (i32, i32) {
    %c0_i32 = arith.constant 0 : i32
    %c0_i32_0 = arith.constant 0 : i32
    %c0_i32_1 = arith.constant 0 : i32
    return %c0_i32, %c0_i32_0 : i32, i32
  }
  func.func @transform_13(%arg0: i32, %arg1: i32, %arg2: i32) -> (i32, i32) {
    %c0_i32 = arith.constant 0 : i32
    %c0_i32_0 = arith.constant 0 : i32
    %c0_i32_1 = arith.constant 0 : i32
    return %c0_i32, %c0_i32_0 : i32, i32
  }
  func.func @transform_14(%arg0: i32, %arg1: i32, %arg2: i32) -> (i32, i32, i32) {
    %c0_i32 = arith.constant 0 : i32
    %c0_i32_0 = arith.constant 0 : i32
    return %arg0, %arg1, %c0_i32 : i32, i32, i32
  }
}

module attributes {stable_mosaic.version = 11 : i64} {
  func.func @attn_mlp_kernel(%arg0: i32, %arg1: i32, %arg2: i32, %arg3: memref<1x8x32xf32, #tpu.memory_space<vmem>>, %arg4: memref<1x8x32xbf16, #tpu.memory_space<vmem>>, %arg5: memref<1x8x32xbf16, #tpu.memory_space<vmem>>, %arg6: memref<1x8x32xbf16, #tpu.memory_space<vmem>>, %arg7: memref<1x32xf32, #tpu.memory_space<vmem>>, %arg8: memref<1x32xf32, #tpu.memory_space<vmem>>, %arg9: memref<32x32xbf16, #tpu.memory_space<vmem>>, %arg10: memref<1x32xf32, #tpu.memory_space<vmem>>, %arg11: memref<1x32xf32, #tpu.memory_space<vmem>>, %arg12: memref<1x32xf32, #tpu.memory_space<vmem>>, %arg13: memref<32x128xbf16, #tpu.memory_space<vmem>>, %arg14: memref<1x128xf32, #tpu.memory_space<vmem>>, %arg15: memref<128x32xbf16, #tpu.memory_space<vmem>>, %arg16: memref<1x32xf32, #tpu.memory_space<vmem>>, %arg17: memref<1x32xf32, #tpu.memory_space<vmem>>, %arg18: memref<1x32xf32, #tpu.memory_space<vmem>>, %arg19: memref<1x8x32xf32, #tpu.memory_space<vmem>>, %arg20: memref<4x8x8xbf16, #tpu.memory_space<vmem>>, %arg21: memref<4x8x1xf32, #tpu.memory_space<vmem>>, %arg22: memref<4x8x1xf32, #tpu.memory_space<vmem>>, %arg23: memref<4x8x8xf32, #tpu.memory_space<vmem>>) attributes {dimension_semantics = [#tpu.dimension_semantics<parallel>, #tpu.dimension_semantics<parallel>, #tpu.dimension_semantics<arbitrary>], iteration_bounds = array<i64: 2, 1, 1>, scalar_prefetch = 0 : i64, scratch_operands = 4 : i64, tpu.core_type = #tpu.core_type<tc>, window_params = [{transform_indices = @transform_0, window_bounds = array<i64: 1, 8, 32>}, {transform_indices = @transform_1, window_bounds = array<i64: 1, 8, 32>}, {transform_indices = @transform_2, window_bounds = array<i64: 1, 8, 32>}, {transform_indices = @transform_3, window_bounds = array<i64: 1, 8, 32>}, {pipeline_mode = #tpu.pipeline_mode<synchronous>, transform_indices = @transform_4, window_bounds = array<i64: 1, 32>}, {pipeline_mode = #tpu.pipeline_mode<synchronous>, transform_indices = @transform_5, window_bounds = array<i64: 1, 32>}, {pipeline_mode = #tpu.pipeline_mode<synchronous>, transform_indices = @transform_6, window_bounds = array<i64: 32, 32>}, {pipeline_mode = #tpu.pipeline_mode<synchronous>, transform_indices = @transform_7, window_bounds = array<i64: 1, 32>}, {pipeline_mode = #tpu.pipeline_mode<synchronous>, transform_indices = @transform_8, window_bounds = array<i64: 1, 32>}, {pipeline_mode = #tpu.pipeline_mode<synchronous>, transform_indices = @transform_9, window_bounds = array<i64: 1, 32>}, {pipeline_mode = #tpu.pipeline_mode<synchronous>, transform_indices = @transform_10, window_bounds = array<i64: 32, 128>}, {pipeline_mode = #tpu.pipeline_mode<synchronous>, transform_indices = @transform_11, window_bounds = array<i64: 1, 128>}, {pipeline_mode = #tpu.pipeline_mode<synchronous>, transform_indices = @transform_12, window_bounds = array<i64: 128, 32>}, {pipeline_mode = #tpu.pipeline_mode<synchronous>, transform_indices = @transform_13, window_bounds = array<i64: 1, 32>}, {pipeline_mode = #tpu.pipeline_mode<synchronous>, transform_indices = @transform_14, window_bounds = array<i64: 1, 32>}, {pipeline_mode = #tpu.pipeline_mode<synchronous>, transform_indices = @transform_15, window_bounds = array<i64: 1, 32>}, {transform_indices = @transform_16, window_bounds = array<i64: 1, 8, 32>}]} {
    %c0_i32 = arith.constant 0 : i32
    %0 = arith.cmpi eq, %arg2, %c0_i32 : i32
    %1 = arith.extui %0 : i1 to i32
    %c0_i32_0 = arith.constant 0 : i32
    %2 = arith.cmpi ne, %1, %c0_i32_0 : i32
    scf.if %2 {
      %c0 = arith.constant 0 : index
      %c0_5 = arith.constant 0 : index
      %c0_6 = arith.constant 0 : index
      %12 = vector.load %arg4[%c0, %c0_5, %c0_6] : memref<1x8x32xbf16, #tpu.memory_space<vmem>>, vector<1x8x32xbf16>
      %13 = vector.shape_cast %12 : vector<1x8x32xbf16> to vector<8x32xbf16>
      %14 = vector.extract_strided_slice %13 {offsets = [0, 0], sizes = [8, 8], strides = [1, 1]} : vector<8x32xbf16> to vector<8x8xbf16>
      %15 = vector.extract_strided_slice %13 {offsets = [0, 8], sizes = [8, 8], strides = [1, 1]} : vector<8x32xbf16> to vector<8x8xbf16>
      %16 = vector.extract_strided_slice %13 {offsets = [0, 16], sizes = [8, 8], strides = [1, 1]} : vector<8x32xbf16> to vector<8x8xbf16>
      %17 = vector.extract_strided_slice %13 {offsets = [0, 24], sizes = [8, 8], strides = [1, 1]} : vector<8x32xbf16> to vector<8x8xbf16>
      %18 = vector.shape_cast %14 : vector<8x8xbf16> to vector<1x8x8xbf16>
      %19 = vector.shape_cast %15 : vector<8x8xbf16> to vector<1x8x8xbf16>
      %20 = vector.shape_cast %16 : vector<8x8xbf16> to vector<1x8x8xbf16>
      %21 = vector.shape_cast %17 : vector<8x8xbf16> to vector<1x8x8xbf16>
      %22 = tpu.concatenate %18, %19, %20, %21 in 0 : vector<1x8x8xbf16>, vector<1x8x8xbf16>, vector<1x8x8xbf16>, vector<1x8x8xbf16> -> vector<4x8x8xbf16>
      %c0_7 = arith.constant 0 : index
      %c0_8 = arith.constant 0 : index
      %c0_9 = arith.constant 0 : index
      %23 = vector.load %arg20[%c0_7, %c0_8, %c0_9] : memref<4x8x8xbf16, #tpu.memory_space<vmem>>, vector<4x8x8xbf16>
      tpu.vector_store %arg20[%c0_7, %c0_8, %c0_9], %22 {strides = array<i32>} : memref<4x8x8xbf16, #tpu.memory_space<vmem>>, vector<4x8x8xbf16>,
      %cst = arith.constant -1.000000e+30 : f32
      %24 = vector.broadcast %cst : f32 to vector<4x8x1xf32>
      %c0_10 = arith.constant 0 : index
      %c0_11 = arith.constant 0 : index
      %c0_12 = arith.constant 0 : index
      %25 = vector.load %arg21[%c0_10, %c0_11, %c0_12] : memref<4x8x1xf32, #tpu.memory_space<vmem>>, vector<4x8x1xf32>
      tpu.vector_store %arg21[%c0_10, %c0_11, %c0_12], %24 {strides = array<i32>} : memref<4x8x1xf32, #tpu.memory_space<vmem>>, vector<4x8x1xf32>,
      %cst_13 = arith.constant 0.000000e+00 : f32
      %26 = vector.broadcast %cst_13 : f32 to vector<4x8x1xf32>
      %c0_14 = arith.constant 0 : index
      %c0_15 = arith.constant 0 : index
      %c0_16 = arith.constant 0 : index
      %27 = vector.load %arg22[%c0_14, %c0_15, %c0_16] : memref<4x8x1xf32, #tpu.memory_space<vmem>>, vector<4x8x1xf32>
      tpu.vector_store %arg22[%c0_14, %c0_15, %c0_16], %26 {strides = array<i32>} : memref<4x8x1xf32, #tpu.memory_space<vmem>>, vector<4x8x1xf32>,
      %cst_17 = arith.constant 0.000000e+00 : f32
      %28 = vector.broadcast %cst_17 : f32 to vector<4x8x8xf32>
      %c0_18 = arith.constant 0 : index
      %c0_19 = arith.constant 0 : index
      %c0_20 = arith.constant 0 : index
      %29 = vector.load %arg23[%c0_18, %c0_19, %c0_20] : memref<4x8x8xf32, #tpu.memory_space<vmem>>, vector<4x8x8xf32>
      tpu.vector_store %arg23[%c0_18, %c0_19, %c0_20], %28 {strides = array<i32>} : memref<4x8x8xf32, #tpu.memory_space<vmem>>, vector<4x8x8xf32>,
    } else {
    }
    %c8_i32 = arith.constant 8 : i32
    %3 = arith.muli %arg2, %c8_i32 : i32
    %c8_i32_1 = arith.constant 8 : i32
    %4 = arith.muli %arg1, %c8_i32_1 : i32
    %c7_i32 = arith.constant 7 : i32
    %5 = arith.addi %4, %c7_i32 : i32
    %6 = arith.cmpi sle, %3, %5 : i32
    %7 = arith.extui %6 : i1 to i32
    %c0_i32_2 = arith.constant 0 : i32
    %8 = arith.cmpi ne, %7, %c0_i32_2 : i32
    scf.if %8 {
      %c0 = arith.constant 0 : index
      %c0_5 = arith.constant 0 : index
      %c0_6 = arith.constant 0 : index
      %12 = vector.load %arg5[%c0, %c0_5, %c0_6] : memref<1x8x32xbf16, #tpu.memory_space<vmem>>, vector<1x8x32xbf16>
      %13 = vector.shape_cast %12 : vector<1x8x32xbf16> to vector<8x32xbf16>
      %14 = vector.extract_strided_slice %13 {offsets = [0, 0], sizes = [8, 8], strides = [1, 1]} : vector<8x32xbf16> to vector<8x8xbf16>
      %15 = vector.extract_strided_slice %13 {offsets = [0, 8], sizes = [8, 8], strides = [1, 1]} : vector<8x32xbf16> to vector<8x8xbf16>
      %16 = vector.extract_strided_slice %13 {offsets = [0, 16], sizes = [8, 8], strides = [1, 1]} : vector<8x32xbf16> to vector<8x8xbf16>
      %17 = vector.extract_strided_slice %13 {offsets = [0, 24], sizes = [8, 8], strides = [1, 1]} : vector<8x32xbf16> to vector<8x8xbf16>
      %18 = vector.shape_cast %14 : vector<8x8xbf16> to vector<1x8x8xbf16>
      %19 = vector.shape_cast %15 : vector<8x8xbf16> to vector<1x8x8xbf16>
      %20 = vector.shape_cast %16 : vector<8x8xbf16> to vector<1x8x8xbf16>
      %21 = vector.shape_cast %17 : vector<8x8xbf16> to vector<1x8x8xbf16>
      %22 = tpu.concatenate %18, %19, %20, %21 in 0 : vector<1x8x8xbf16>, vector<1x8x8xbf16>, vector<1x8x8xbf16>, vector<1x8x8xbf16> -> vector<4x8x8xbf16>
      %c0_7 = arith.constant 0 : index
      %c0_8 = arith.constant 0 : index
      %c0_9 = arith.constant 0 : index
      %23 = vector.load %arg6[%c0_7, %c0_8, %c0_9] : memref<1x8x32xbf16, #tpu.memory_space<vmem>>, vector<1x8x32xbf16>
      %24 = vector.shape_cast %23 : vector<1x8x32xbf16> to vector<8x32xbf16>
      %25 = vector.extract_strided_slice %24 {offsets = [0, 0], sizes = [8, 8], strides = [1, 1]} : vector<8x32xbf16> to vector<8x8xbf16>
      %26 = vector.extract_strided_slice %24 {offsets = [0, 8], sizes = [8, 8], strides = [1, 1]} : vector<8x32xbf16> to vector<8x8xbf16>
      %27 = vector.extract_strided_slice %24 {offsets = [0, 16], sizes = [8, 8], strides = [1, 1]} : vector<8x32xbf16> to vector<8x8xbf16>
      %28 = vector.extract_strided_slice %24 {offsets = [0, 24], sizes = [8, 8], strides = [1, 1]} : vector<8x32xbf16> to vector<8x8xbf16>
      %29 = vector.shape_cast %25 : vector<8x8xbf16> to vector<1x8x8xbf16>
      %30 = vector.shape_cast %26 : vector<8x8xbf16> to vector<1x8x8xbf16>
      %31 = vector.shape_cast %27 : vector<8x8xbf16> to vector<1x8x8xbf16>
      %32 = vector.shape_cast %28 : vector<8x8xbf16> to vector<1x8x8xbf16>
      %33 = tpu.concatenate %29, %30, %31, %32 in 0 : vector<1x8x8xbf16>, vector<1x8x8xbf16>, vector<1x8x8xbf16>, vector<1x8x8xbf16> -> vector<4x8x8xbf16>
      %c0_10 = arith.constant 0 : index
      %c0_11 = arith.constant 0 : index
      %c0_12 = arith.constant 0 : index
      %34 = vector.load %arg20[%c0_10, %c0_11, %c0_12] : memref<4x8x8xbf16, #tpu.memory_space<vmem>>, vector<4x8x8xbf16>
      "tpu.trace_start"() <{level = 10 : i32, message = "hqd,hkd->hqk"}> : () -> ()
      %cst = arith.constant dense<0.000000e+00> : vector<4x8x8xf32>
      %35 = tpu.matmul %34, %22, %cst {dimension_numbers = #tpu.dot_dimension_numbers<[2], [2], [1], [1], [0, 0, 0, 1, 1, 1], [0], [0]>} : vector<4x8x8xbf16>, vector<4x8x8xbf16>, vector<4x8x8xf32> -> vector<4x8x8xf32>
      "tpu.trace_stop"() : () -> ()
      %cst_13 = arith.constant 0.353553385 : f32
      %36 = vector.broadcast %cst_13 : f32 to vector<4x8x8xf32>
      %37 = arith.mulf %35, %36 : vector<4x8x8xf32>
      %c8_i32_14 = arith.constant 8 : i32
      %38 = arith.muli %arg1, %c8_i32_14 : i32
      %39 = tpu.iota {dimensions = array<i32: 0>} : vector<8x8xi32>
      %40 = vector.broadcast %38 : i32 to vector<8x8xi32>
      %41 = arith.addi %40, %39 : vector<8x8xi32>
      %c8_i32_15 = arith.constant 8 : i32
      %42 = arith.muli %arg2, %c8_i32_15 : i32
      %43 = tpu.iota {dimensions = array<i32: 1>} : vector<8x8xi32>
      %44 = vector.broadcast %42 : i32 to vector<8x8xi32>
      %45 = arith.addi %44, %43 : vector<8x8xi32>
      %46 = arith.cmpi sle, %45, %41 : vector<8x8xi32>
      %47 = vector.shape_cast %46 : vector<8x8xi1> to vector<1x8x8xi1>
      %cst_16 = arith.constant -1.000000e+30 : f32
      %48 = vector.shape_cast %47 : vector<1x8x8xi1> to vector<1x8x8xi1>
      %49 = vector.broadcast %48 : vector<1x8x8xi1> to vector<4x8x8xi1>
      %50 = vector.broadcast %cst_16 : f32 to vector<4x8x8xf32>
      %51 = arith.select %49, %37, %50 : vector<4x8x8xi1>, vector<4x8x8xf32>
      %c0_17 = arith.constant 0 : index
      %c0_18 = arith.constant 0 : index
      %c0_19 = arith.constant 0 : index
      %52 = vector.load %arg21[%c0_17, %c0_18, %c0_19] : memref<4x8x1xf32, #tpu.memory_space<vmem>>, vector<4x8x1xf32>
      %cst_20 = arith.constant dense<0xFF800000> : vector<4x8xf32>
      %53 = vector.multi_reduction <maximumf>, %51, %cst_20 [2] : vector<4x8x8xf32> to vector<4x8xf32>
      %54 = vector.shape_cast %53 : vector<4x8xf32> to vector<4x8x1xf32>
      %55 = arith.maximumf %52, %54 : vector<4x8x1xf32>
      %56 = arith.subf %52, %55 : vector<4x8x1xf32>
      %57 = math.exp %56 : vector<4x8x1xf32>
      %58 = vector.broadcast %55 : vector<4x8x1xf32> to vector<4x8x8xf32>
      %59 = arith.subf %51, %58 : vector<4x8x8xf32>
      %60 = math.exp %59 : vector<4x8x8xf32>
      %c0_21 = arith.constant 0 : index
      %c0_22 = arith.constant 0 : index
      %c0_23 = arith.constant 0 : index
      %61 = vector.load %arg22[%c0_21, %c0_22, %c0_23] : memref<4x8x1xf32, #tpu.memory_space<vmem>>, vector<4x8x1xf32>
      %62 = arith.mulf %57, %61 : vector<4x8x1xf32>
      %cst_24 = arith.constant dense<0.000000e+00> : vector<4x8xf32>
      %63 = vector.multi_reduction <add>, %60, %cst_24 [2] : vector<4x8x8xf32> to vector<4x8xf32>
      %64 = vector.shape_cast %63 : vector<4x8xf32> to vector<4x8x1xf32>
      %65 = arith.addf %62, %64 : vector<4x8x1xf32>
      %c0_25 = arith.constant 0 : index
      %c0_26 = arith.constant 0 : index
      %c0_27 = arith.constant 0 : index
      %66 = vector.load %arg22[%c0_25, %c0_26, %c0_27] : memref<4x8x1xf32, #tpu.memory_space<vmem>>, vector<4x8x1xf32>
      tpu.vector_store %arg22[%c0_25, %c0_26, %c0_27], %65 {strides = array<i32>} : memref<4x8x1xf32, #tpu.memory_space<vmem>>, vector<4x8x1xf32>,
      %c0_28 = arith.constant 0 : index
      %c0_29 = arith.constant 0 : index
      %c0_30 = arith.constant 0 : index
      %67 = vector.load %arg23[%c0_28, %c0_29, %c0_30] : memref<4x8x8xf32, #tpu.memory_space<vmem>>, vector<4x8x8xf32>
      %68 = vector.broadcast %57 : vector<4x8x1xf32> to vector<4x8x8xf32>
      %69 = arith.mulf %68, %67 : vector<4x8x8xf32>
      %70 = arith.truncf %60 : vector<4x8x8xf32> to vector<4x8x8xbf16>
      "tpu.trace_start"() <{level = 10 : i32, message = "hqk,hkd->hqd"}> : () -> ()
      %cst_31 = arith.constant dense<0.000000e+00> : vector<4x8x8xf32>
      %71 = tpu.matmul %70, %33, %cst_31 {dimension_numbers = #tpu.dot_dimension_numbers<[2], [1], [1], [2], [0, 0, 0, 1, 1, 2], [0], [0]>} : vector<4x8x8xbf16>, vector<4x8x8xbf16>, vector<4x8x8xf32> -> vector<4x8x8xf32>
      "tpu.trace_stop"() : () -> ()
      %72 = arith.addf %69, %71 : vector<4x8x8xf32>
      %c0_32 = arith.constant 0 : index
      %c0_33 = arith.constant 0 : index
      %c0_34 = arith.constant 0 : index
      %73 = vector.load %arg23[%c0_32, %c0_33, %c0_34] : memref<4x8x8xf32, #tpu.memory_space<vmem>>, vector<4x8x8xf32>
      tpu.vector_store %arg23[%c0_32, %c0_33, %c0_34], %72 {strides = array<i32>} : memref<4x8x8xf32, #tpu.memory_space<vmem>>, vector<4x8x8xf32>,
      %c0_35 = arith.constant 0 : index
      %c0_36 = arith.constant 0 : index
      %c0_37 = arith.constant 0 : index
      %74 = vector.load %arg21[%c0_35, %c0_36, %c0_37] : memref<4x8x1xf32, #tpu.memory_space<vmem>>, vector<4x8x1xf32>
      tpu.vector_store %arg21[%c0_35, %c0_36, %c0_37], %55 {strides = array<i32>} : memref<4x8x1xf32, #tpu.memory_space<vmem>>, vector<4x8x1xf32>,
    } else {
    }
    %c0_i32_3 = arith.constant 0 : i32
    %9 = arith.cmpi eq, %arg2, %c0_i32_3 : i32
    %10 = arith.extui %9 : i1 to i32
    %c0_i32_4 = arith.constant 0 : i32
    %11 = arith.cmpi ne, %10, %c0_i32_4 : i32
    scf.if %11 {
      %c0 = arith.constant 0 : index
      %c0_5 = arith.constant 0 : index
      %c0_6 = arith.constant 0 : index
      %12 = vector.load %arg23[%c0, %c0_5, %c0_6] : memref<4x8x8xf32, #tpu.memory_space<vmem>>, vector<4x8x8xf32>
      %c0_7 = arith.constant 0 : index
      %c0_8 = arith.constant 0 : index
      %c0_9 = arith.constant 0 : index
      %13 = vector.load %arg22[%c0_7, %c0_8, %c0_9] : memref<4x8x1xf32, #tpu.memory_space<vmem>>, vector<4x8x1xf32>
      %14 = tpu.reciprocal %13 {approx = true} : vector<4x8x1xf32> -> vector<4x8x1xf32>
      %15 = vector.broadcast %14 : vector<4x8x1xf32> to vector<4x8x8xf32>
      %16 = arith.mulf %12, %15 : vector<4x8x8xf32>
      %17 = vector.extract_strided_slice %16 {offsets = [0, 0, 0], sizes = [1, 8, 8], strides = [1, 1, 1]} : vector<4x8x8xf32> to vector<1x8x8xf32>
      %18 = vector.shape_cast %17 : vector<1x8x8xf32> to vector<8x8xf32>
      %19 = vector.extract_strided_slice %16 {offsets = [1, 0, 0], sizes = [1, 8, 8], strides = [1, 1, 1]} : vector<4x8x8xf32> to vector<1x8x8xf32>
      %20 = vector.shape_cast %19 : vector<1x8x8xf32> to vector<8x8xf32>
      %21 = vector.extract_strided_slice %16 {offsets = [2, 0, 0], sizes = [1, 8, 8], strides = [1, 1, 1]} : vector<4x8x8xf32> to vector<1x8x8xf32>
      %22 = vector.shape_cast %21 : vector<1x8x8xf32> to vector<8x8xf32>
      %23 = vector.extract_strided_slice %16 {offsets = [3, 0, 0], sizes = [1, 8, 8], strides = [1, 1, 1]} : vector<4x8x8xf32> to vector<1x8x8xf32>
      %24 = vector.shape_cast %23 : vector<1x8x8xf32> to vector<8x8xf32>
      %25 = tpu.concatenate %18, %20, %22, %24 in 1 : vector<8x8xf32>, vector<8x8xf32>, vector<8x8xf32>, vector<8x8xf32> -> vector<8x32xf32>
      %26 = arith.truncf %25 : vector<8x32xf32> to vector<8x32xbf16>
      %c0_10 = arith.constant 0 : index
      %c0_11 = arith.constant 0 : index
      %27 = vector.load %arg9[%c0_10, %c0_11] : memref<32x32xbf16, #tpu.memory_space<vmem>>, vector<32x32xbf16>
      %cst = arith.constant dense<0.000000e+00> : vector<8x32xf32>
      %28 = tpu.matmul %26, %27, %cst {dimension_numbers = #tpu.dot_dimension_numbers<[1], [0], [0], [1], [0, 0, 1, 1], [], []>} : vector<8x32xbf16>, vector<32x32xbf16>, vector<8x32xf32> -> vector<8x32xf32>
      %c0_12 = arith.constant 0 : index
      %c0_13 = arith.constant 0 : index
      %29 = vector.load %arg10[%c0_12, %c0_13] : memref<1x32xf32, #tpu.memory_space<vmem>>, vector<1x32xf32>
      %30 = vector.broadcast %29 : vector<1x32xf32> to vector<8x32xf32>
      %31 = arith.addf %28, %30 : vector<8x32xf32>
      %c0_14 = arith.constant 0 : index
      %c0_15 = arith.constant 0 : index
      %c0_16 = arith.constant 0 : index
      %32 = vector.load %arg3[%c0_14, %c0_15, %c0_16] : memref<1x8x32xf32, #tpu.memory_space<vmem>>, vector<1x8x32xf32>
      %33 = vector.shape_cast %32 : vector<1x8x32xf32> to vector<8x32xf32>
      %c0_17 = arith.constant 0 : index
      %c0_18 = arith.constant 0 : index
      %34 = vector.load %arg7[%c0_17, %c0_18] : memref<1x32xf32, #tpu.memory_space<vmem>>, vector<1x32xf32>
      %c0_19 = arith.constant 0 : index
      %c0_20 = arith.constant 0 : index
      %35 = vector.load %arg8[%c0_19, %c0_20] : memref<1x32xf32, #tpu.memory_space<vmem>>, vector<1x32xf32>
      %cst_21 = arith.constant dense<0.000000e+00> : vector<8xf32>
      %36 = vector.multi_reduction <add>, %33, %cst_21 [1] : vector<8x32xf32> to vector<8xf32>
      %37 = vector.shape_cast %36 : vector<8xf32> to vector<8x1xf32>
      %cst_22 = arith.constant 3.200000e+01 : f32
      %38 = vector.broadcast %cst_22 : f32 to vector<8x1xf32>
      %39 = arith.divf %37, %38 : vector<8x1xf32>
      %40 = vector.broadcast %39 : vector<8x1xf32> to vector<8x32xf32>
      %41 = arith.subf %33, %40 : vector<8x32xf32>
      %42 = arith.mulf %41, %41 : vector<8x32xf32>
      %cst_23 = arith.constant dense<0.000000e+00> : vector<8xf32>
      %43 = vector.multi_reduction <add>, %42, %cst_23 [1] : vector<8x32xf32> to vector<8xf32>
      %44 = vector.shape_cast %43 : vector<8xf32> to vector<8x1xf32>
      %cst_24 = arith.constant 3.200000e+01 : f32
      %45 = vector.broadcast %cst_24 : f32 to vector<8x1xf32>
      %46 = arith.divf %44, %45 : vector<8x1xf32>
      %47 = vector.broadcast %39 : vector<8x1xf32> to vector<8x32xf32>
      %48 = arith.subf %33, %47 : vector<8x32xf32>
      %cst_25 = arith.constant 9.99999974E-6 : f32
      %49 = vector.broadcast %cst_25 : f32 to vector<8x1xf32>
      %50 = arith.addf %46, %49 : vector<8x1xf32>
      %51 = math.rsqrt %50 : vector<8x1xf32>
      %52 = vector.broadcast %51 : vector<8x1xf32> to vector<8x32xf32>
      %53 = arith.mulf %48, %52 : vector<8x32xf32>
      %54 = vector.broadcast %34 : vector<1x32xf32> to vector<8x32xf32>
      %55 = arith.mulf %53, %54 : vector<8x32xf32>
      %56 = vector.broadcast %35 : vector<1x32xf32> to vector<8x32xf32>
      %57 = arith.addf %55, %56 : vector<8x32xf32>
      %58 = arith.addf %57, %31 : vector<8x32xf32>
      %c0_26 = arith.constant 0 : index
      %c0_27 = arith.constant 0 : index
      %59 = vector.load %arg11[%c0_26, %c0_27] : memref<1x32xf32, #tpu.memory_space<vmem>>, vector<1x32xf32>
      %c0_28 = arith.constant 0 : index
      %c0_29 = arith.constant 0 : index
      %60 = vector.load %arg12[%c0_28, %c0_29] : memref<1x32xf32, #tpu.memory_space<vmem>>, vector<1x32xf32>
      %cst_30 = arith.constant dense<0.000000e+00> : vector<8xf32>
      %61 = vector.multi_reduction <add>, %58, %cst_30 [1] : vector<8x32xf32> to vector<8xf32>
      %62 = vector.shape_cast %61 : vector<8xf32> to vector<8x1xf32>
      %cst_31 = arith.constant 3.200000e+01 : f32
      %63 = vector.broadcast %cst_31 : f32 to vector<8x1xf32>
      %64 = arith.divf %62, %63 : vector<8x1xf32>
      %65 = vector.broadcast %64 : vector<8x1xf32> to vector<8x32xf32>
      %66 = arith.subf %58, %65 : vector<8x32xf32>
      %67 = arith.mulf %66, %66 : vector<8x32xf32>
      %cst_32 = arith.constant dense<0.000000e+00> : vector<8xf32>
      %68 = vector.multi_reduction <add>, %67, %cst_32 [1] : vector<8x32xf32> to vector<8xf32>
      %69 = vector.shape_cast %68 : vector<8xf32> to vector<8x1xf32>
      %cst_33 = arith.constant 3.200000e+01 : f32
      %70 = vector.broadcast %cst_33 : f32 to vector<8x1xf32>
      %71 = arith.divf %69, %70 : vector<8x1xf32>
      %72 = vector.broadcast %64 : vector<8x1xf32> to vector<8x32xf32>
      %73 = arith.subf %58, %72 : vector<8x32xf32>
      %cst_34 = arith.constant 9.99999974E-6 : f32
      %74 = vector.broadcast %cst_34 : f32 to vector<8x1xf32>
      %75 = arith.addf %71, %74 : vector<8x1xf32>
      %76 = math.rsqrt %75 : vector<8x1xf32>
      %77 = vector.broadcast %76 : vector<8x1xf32> to vector<8x32xf32>
      %78 = arith.mulf %73, %77 : vector<8x32xf32>
      %79 = vector.broadcast %59 : vector<1x32xf32> to vector<8x32xf32>
      %80 = arith.mulf %78, %79 : vector<8x32xf32>
      %81 = vector.broadcast %60 : vector<1x32xf32> to vector<8x32xf32>
      %82 = arith.addf %80, %81 : vector<8x32xf32>
      %83 = arith.truncf %82 : vector<8x32xf32> to vector<8x32xbf16>
      %c0_35 = arith.constant 0 : index
      %c0_36 = arith.constant 0 : index
      %84 = vector.load %arg13[%c0_35, %c0_36] : memref<32x128xbf16, #tpu.memory_space<vmem>>, vector<32x128xbf16>
      %cst_37 = arith.constant dense<0.000000e+00> : vector<8x128xf32>
      %85 = tpu.matmul %83, %84, %cst_37 {dimension_numbers = #tpu.dot_dimension_numbers<[1], [0], [0], [1], [0, 0, 1, 1], [], []>} : vector<8x32xbf16>, vector<32x128xbf16>, vector<8x128xf32> -> vector<8x128xf32>
      %c0_38 = arith.constant 0 : index
      %c0_39 = arith.constant 0 : index
      %86 = vector.load %arg14[%c0_38, %c0_39] : memref<1x128xf32, #tpu.memory_space<vmem>>, vector<1x128xf32>
      %87 = vector.broadcast %86 : vector<1x128xf32> to vector<8x128xf32>
      %88 = arith.addf %85, %87 : vector<8x128xf32>
      %cst_40 = arith.constant 5.000000e-01 : f32
      %89 = vector.broadcast %cst_40 : f32 to vector<8x128xf32>
      %90 = arith.mulf %89, %88 : vector<8x128xf32>
      %cst_41 = arith.constant 0.707106769 : f32
      %91 = vector.broadcast %cst_41 : f32 to vector<8x128xf32>
      %92 = arith.mulf %88, %91 : vector<8x128xf32>
      %93 = math.erf %92 : vector<8x128xf32>
      %cst_42 = arith.constant 1.000000e+00 : f32
      %94 = vector.broadcast %cst_42 : f32 to vector<8x128xf32>
      %95 = arith.addf %94, %93 : vector<8x128xf32>
      %96 = arith.mulf %90, %95 : vector<8x128xf32>
      %97 = arith.truncf %96 : vector<8x128xf32> to vector<8x128xbf16>
      %c0_43 = arith.constant 0 : index
      %c0_44 = arith.constant 0 : index
      %98 = vector.load %arg15[%c0_43, %c0_44] : memref<128x32xbf16, #tpu.memory_space<vmem>>, vector<128x32xbf16>
      %cst_45 = arith.constant dense<0.000000e+00> : vector<8x32xf32>
      %99 = tpu.matmul %97, %98, %cst_45 {dimension_numbers = #tpu.dot_dimension_numbers<[1], [0], [0], [1], [0, 0, 1, 1], [], []>} : vector<8x128xbf16>, vector<128x32xbf16>, vector<8x32xf32> -> vector<8x32xf32>
      %c0_46 = arith.constant 0 : index
      %c0_47 = arith.constant 0 : index
      %100 = vector.load %arg16[%c0_46, %c0_47] : memref<1x32xf32, #tpu.memory_space<vmem>>, vector<1x32xf32>
      %101 = vector.broadcast %100 : vector<1x32xf32> to vector<8x32xf32>
      %102 = arith.addf %99, %101 : vector<8x32xf32>
      %103 = arith.addf %82, %102 : vector<8x32xf32>
      %c0_48 = arith.constant 0 : index
      %c0_49 = arith.constant 0 : index
      %104 = vector.load %arg17[%c0_48, %c0_49] : memref<1x32xf32, #tpu.memory_space<vmem>>, vector<1x32xf32>
      %c0_50 = arith.constant 0 : index
      %c0_51 = arith.constant 0 : index
      %105 = vector.load %arg18[%c0_50, %c0_51] : memref<1x32xf32, #tpu.memory_space<vmem>>, vector<1x32xf32>
      %cst_52 = arith.constant dense<0.000000e+00> : vector<8xf32>
      %106 = vector.multi_reduction <add>, %103, %cst_52 [1] : vector<8x32xf32> to vector<8xf32>
      %107 = vector.shape_cast %106 : vector<8xf32> to vector<8x1xf32>
      %cst_53 = arith.constant 3.200000e+01 : f32
      %108 = vector.broadcast %cst_53 : f32 to vector<8x1xf32>
      %109 = arith.divf %107, %108 : vector<8x1xf32>
      %110 = vector.broadcast %109 : vector<8x1xf32> to vector<8x32xf32>
      %111 = arith.subf %103, %110 : vector<8x32xf32>
      %112 = arith.mulf %111, %111 : vector<8x32xf32>
      %cst_54 = arith.constant dense<0.000000e+00> : vector<8xf32>
      %113 = vector.multi_reduction <add>, %112, %cst_54 [1] : vector<8x32xf32> to vector<8xf32>
      %114 = vector.shape_cast %113 : vector<8xf32> to vector<8x1xf32>
      %cst_55 = arith.constant 3.200000e+01 : f32
      %115 = vector.broadcast %cst_55 : f32 to vector<8x1xf32>
      %116 = arith.divf %114, %115 : vector<8x1xf32>
      %117 = vector.broadcast %109 : vector<8x1xf32> to vector<8x32xf32>
      %118 = arith.subf %103, %117 : vector<8x32xf32>
      %cst_56 = arith.constant 9.99999974E-6 : f32
      %119 = vector.broadcast %cst_56 : f32 to vector<8x1xf32>
      %120 = arith.addf %116, %119 : vector<8x1xf32>
      %121 = math.rsqrt %120 : vector<8x1xf32>
      %122 = vector.broadcast %121 : vector<8x1xf32> to vector<8x32xf32>
      %123 = arith.mulf %118, %122 : vector<8x32xf32>
      %124 = vector.broadcast %104 : vector<1x32xf32> to vector<8x32xf32>
      %125 = arith.mulf %123, %124 : vector<8x32xf32>
      %126 = vector.broadcast %105 : vector<1x32xf32> to vector<8x32xf32>
      %127 = arith.addf %125, %126 : vector<8x32xf32>
      %c0_57 = arith.constant 0 : index
      %c0_58 = arith.constant 0 : index
      %c0_59 = arith.constant 0 : index
      %128 = vector.load %arg19[%c0_57, %c0_58, %c0_59] : memref<1x8x32xf32, #tpu.memory_space<vmem>>, vector<1x8x32xf32>
      %129 = vector.shape_cast %128 : vector<1x8x32xf32> to vector<8x32xf32>
      %130 = vector.shape_cast %127 : vector<8x32xf32> to vector<1x8x32xf32>
      tpu.vector_store %arg19[%c0_57, %c0_58, %c0_59], %130 {strides = array<i32>} : memref<1x8x32xf32, #tpu.memory_space<vmem>>, vector<1x8x32xf32>,
    } else {
    }
    return
  }
  func.func @transform_0(%arg0: i32, %arg1: i32, %arg2: i32) -> (i32, i32, i32) {
    %c0_i32 = arith.constant 0 : i32
    %c0_i32_0 = arith.constant 0 : i32
    return %arg0, %arg1, %c0_i32 : i32, i32, i32
  }
  func.func @transform_1(%arg0: i32, %arg1: i32, %arg2: i32) -> (i32, i32, i32) {
    %c0_i32 = arith.constant 0 : i32
    %c0_i32_0 = arith.constant 0 : i32
    return %arg0, %arg1, %c0_i32 : i32, i32, i32
  }
  func.func @transform_2(%arg0: i32, %arg1: i32, %arg2: i32) -> (i32, i32, i32) {
    %0 = arith.minsi %arg2, %arg1 : i32
    %c0_i32 = arith.constant 0 : i32
    %c0_i32_0 = arith.constant 0 : i32
    return %arg0, %0, %c0_i32 : i32, i32, i32
  }
  func.func @transform_3(%arg0: i32, %arg1: i32, %arg2: i32) -> (i32, i32, i32) {
    %0 = arith.minsi %arg2, %arg1 : i32
    %c0_i32 = arith.constant 0 : i32
    %c0_i32_0 = arith.constant 0 : i32
    return %arg0, %0, %c0_i32 : i32, i32, i32
  }
  func.func @transform_4(%arg0: i32, %arg1: i32, %arg2: i32) -> (i32, i32) {
    %c0_i32 = arith.constant 0 : i32
    %c0_i32_0 = arith.constant 0 : i32
    %c0_i32_1 = arith.constant 0 : i32
    return %c0_i32, %c0_i32_0 : i32, i32
  }
  func.func @transform_5(%arg0: i32, %arg1: i32, %arg2: i32) -> (i32, i32) {
    %c0_i32 = arith.constant 0 : i32
    %c0_i32_0 = arith.constant 0 : i32
    %c0_i32_1 = arith.constant 0 : i32
    return %c0_i32, %c0_i32_0 : i32, i32
  }
  func.func @transform_6(%arg0: i32, %arg1: i32, %arg2: i32) -> (i32, i32) {
    %c0_i32 = arith.constant 0 : i32
    %c0_i32_0 = arith.constant 0 : i32
    %c0_i32_1 = arith.constant 0 : i32
    return %c0_i32, %c0_i32_0 : i32, i32
  }
  func.func @transform_7(%arg0: i32, %arg1: i32, %arg2: i32) -> (i32, i32) {
    %c0_i32 = arith.constant 0 : i32
    %c0_i32_0 = arith.constant 0 : i32
    %c0_i32_1 = arith.constant 0 : i32
    return %c0_i32, %c0_i32_0 : i32, i32
  }
  func.func @transform_8(%arg0: i32, %arg1: i32, %arg2: i32) -> (i32, i32) {
    %c0_i32 = arith.constant 0 : i32
    %c0_i32_0 = arith.constant 0 : i32
    %c0_i32_1 = arith.constant 0 : i32
    return %c0_i32, %c0_i32_0 : i32, i32
  }
  func.func @transform_9(%arg0: i32, %arg1: i32, %arg2: i32) -> (i32, i32) {
    %c0_i32 = arith.constant 0 : i32
    %c0_i32_0 = arith.constant 0 : i32
    %c0_i32_1 = arith.constant 0 : i32
    return %c0_i32, %c0_i32_0 : i32, i32
  }
  func.func @transform_10(%arg0: i32, %arg1: i32, %arg2: i32) -> (i32, i32) {
    %c0_i32 = arith.constant 0 : i32
    %c0_i32_0 = arith.constant 0 : i32
    %c0_i32_1 = arith.constant 0 : i32
    return %c0_i32, %c0_i32_0 : i32, i32
  }
  func.func @transform_11(%arg0: i32, %arg1: i32, %arg2: i32) -> (i32, i32) {
    %c0_i32 = arith.constant 0 : i32
    %c0_i32_0 = arith.constant 0 : i32
    %c0_i32_1 = arith.constant 0 : i32
    return %c0_i32, %c0_i32_0 : i32, i32
  }
  func.func @transform_12(%arg0: i32, %arg1: i32, %arg2: i32) -> (i32, i32) {
    %c0_i32 = arith.constant 0 : i32
    %c0_i32_0 = arith.constant 0 : i32
    %c0_i32_1 = arith.constant 0 : i32
    return %c0_i32, %c0_i32_0 : i32, i32
  }
  func.func @transform_13(%arg0: i32, %arg1: i32, %arg2: i32) -> (i32, i32) {
    %c0_i32 = arith.constant 0 : i32
    %c0_i32_0 = arith.constant 0 : i32
    %c0_i32_1 = arith.constant 0 : i32
    return %c0_i32, %c0_i32_0 : i32, i32
  }
  func.func @transform_14(%arg0: i32, %arg1: i32, %arg2: i32) -> (i32, i32) {
    %c0_i32 = arith.constant 0 : i32
    %c0_i32_0 = arith.constant 0 : i32
    %c0_i32_1 = arith.constant 0 : i32
    return %c0_i32, %c0_i32_0 : i32, i32
  }
  func.func @transform_15(%arg0: i32, %arg1: i32, %arg2: i32) -> (i32, i32) {
    %c0_i32 = arith.constant 0 : i32
    %c0_i32_0 = arith.constant 0 : i32
    %c0_i32_1 = arith.constant 0 : i32
    return %c0_i32, %c0_i32_0 : i32, i32
  }
  func.func @transform_16(%arg0: i32, %arg1: i32, %arg2: i32) -> (i32, i32, i32) {
    %c0_i32 = arith.constant 0 : i32
    %c0_i32_0 = arith.constant 0 : i32
    return %arg0, %arg1, %c0_i32 : i32, i32, i32
  }
}

</mosaic_0001>

<llo_original>
// kernel: gpt_forward.4
$region0: #{gpt_forward.4}
  #allocation0 [shape = 'u32[]', space=smem, size = 0x4, offset = 0x4, fixed_abs, tag = 'smem constant byte address 0x4 - core index']
  #allocation1 [shape = 'u32[144,128]{1,0:T(1,128)}', space=vmem, size = 0x12000, scoped, tag = 'internal scratch']
  %s0 = inlined_call_operand.vmem [shape: f32[2,8,32], index: 0, kind: input, shape index: {}]
  %s1 = inlined_call_operand.vmem [shape: f32[1,32], index: 1, kind: input, shape index: {}]
  %s2 = inlined_call_operand.vmem [shape: f32[1,32], index: 2, kind: input, shape index: {}]
  %s3 = inlined_call_operand.vmem [shape: bf16[32,96], index: 3, kind: input, shape index: {}]
  %s4 = inlined_call_operand.vmem [shape: f32[1,96], index: 4, kind: input, shape index: {}]
  %s5 = inlined_call_operand.vmem [shape: bf16[2,8,32], index: 5, kind: output, shape index: {0}]
  %s6 = inlined_call_operand.vmem [shape: bf16[2,8,32], index: 6, kind: output, shape index: {1}]
  %s7 = inlined_call_operand.vmem [shape: bf16[2,8,32], index: 7, kind: output, shape index: {2}]
  %8 = xla_tuple %s5, %s6, %s7
  %s9 = sld [smem:[#allocation0]]
  $region69: #{gpt_forward.4} parent=0
    _
  %s11 = ssub.s32 1, %s9
  %s12 = scalar_select 0, %s11, %s9
  loop: start=0, step=1, limit=4
  $region2: #{gpt_forward.4} parent=0 // loop_pre_header
    _
  $region3: #{gpt_forward.4} parent=0 // loop_header
    %s14 = sphi 0, %s18
    %p15 = scmp.ge.s32.totalorder %s14, 4
    %s21 = sphi 0, %s33
    %s22 = sphi 0, %s29
    %s23 = sphi 0, %s21
    %s24 = sphi 0, %s22
    %s25 = sphi 0, %s23
    %s26 = sphi 0, %s24
    %s38 = sphi 0, %s40
    %s41 = sphi 0, %s38
    %s42 = sphi 0, %s41
    %s58 = sphi 0, %s42
    %s62 = sphi 0, %s62
    %s64 = sphi 0, %s62
    %s65 = sphi 0, %s64
    %s79 = sphi 0, %s65
    %s83 = sphi 0, %s83
    %s85 = sphi 0, %s83
    %s86 = sphi 0, %s85
    %s100 = sphi 0, %s86
    %s104 = sphi 0, %s104
    %s106 = sphi 0, %s104
    %s107 = sphi 0, %s106
    %s121 = sphi 0, %s107
    %s125 = sphi 0, %s125
    %s127 = sphi 0, %s125
    %s128 = sphi 0, %s127
    %s142 = sphi 0, %s128
    %s150 = sphi 0, %s152
    %s153 = sphi 0, %s150
    %s154 = sphi 0, %s153
    %s170 = sphi 0, %s154
    %s178 = sphi 0, %s180
    %s181 = sphi 0, %s178
    %s182 = sphi 0, %s181
    %s198 = sphi 0, %s182
    %s206 = sphi 0, %s208
    %s209 = sphi 0, %s206
    %s210 = sphi 0, %s209
    %s226 = sphi 0, %s210
  $region4: #{gpt_forward.4} parent=0 // loop_header_branch
    %17 = sbr.rel (%p15) target = $region8
  $region5: #{gpt_forward.4} parent=0 // loop_body
    %s19 = ssub.s32 %s14, 1
    %s20 = ssub.s32 %s14, 2
    %s27 = sadd.s32 1, %s22
    %p28 = scmp.ge.s32.totalorder %s27, 1
    %s29 = scalar_select %p28, 0, %s27
    %s30 = sadd.s32 1, %s21
    %s31 = scalar_select %p28, %s30, %s21
    %p32 = scmp.ge.s32.totalorder %s31, 2
    %s33 = scalar_select %p32, 0, %s31
    %s34 = ssub.s32 %s21, %s33
    %s35 = ssub.s32 %s22, %s29
    %s36 = sor.u32 %s34, %s35
    %p37 = scmp.eq.s32.totalorder %s36, 0
    %s39 = sadd.s32 %s38, 1
    %s40 = scalar_select %p37, %s38, %s39
    %p43 = pneg %p37
    %p44 = scmp.eq.s32.totalorder %s14, 1
    %p45 = por %p43, %p44
    %p46 = scmp.ne.s32.totalorder %s38, %s41
    %p47 = scmp.eq.s32.totalorder %s14, 0
    %p48 = por %p46, %p47
    %p49 = scmp.ne.s32.totalorder %s38, %s41
    %p50 = scmp.eq.s32.totalorder %s19, 1
    %p51 = por %p49, %p50
    %p52 = scmp.ne.s32.totalorder %s41, %s42
    %p53 = scmp.eq.s32.totalorder %s19, 0
    %p54 = por %p52, %p53
    %p55 = scmp.ne.s32.totalorder %s41, %s42
    %p56 = scmp.eq.s32.totalorder %s20, 1
    %p57 = por %p55, %p56
    %p59 = scmp.ne.s32.totalorder %s42, %s58
    %p60 = scmp.eq.s32.totalorder %s20, 0
    %p61 = por %p59, %p60
    %s63 = sadd.s32 %s62, 1
    %p66 = scmp.eq.s32.totalorder %s14, 1
    %p67 = scmp.ne.s32.totalorder %s62, %s64
    %p68 = scmp.eq.s32.totalorder %s14, 0
    %p69 = por %p67, %p68
    %p70 = scmp.ne.s32.totalorder %s62, %s64
    %p71 = scmp.eq.s32.totalorder %s19, 1
    %p72 = por %p70, %p71
    %p73 = scmp.ne.s32.totalorder %s64, %s65
    %p74 = scmp.eq.s32.totalorder %s19, 0
    %p75 = por %p73, %p74
    %p76 = scmp.ne.s32.totalorder %s64, %s65
    %p77 = scmp.eq.s32.totalorder %s20, 1
    %p78 = por %p76, %p77
    %p80 = scmp.ne.s32.totalorder %s65, %s79
    %p81 = scmp.eq.s32.totalorder %s20, 0
    %p82 = por %p80, %p81
    %s84 = sadd.s32 %s83, 1
    %p87 = scmp.eq.s32.totalorder %s14, 1
    %p88 = scmp.ne.s32.totalorder %s83, %s85
    %p89 = scmp.eq.s32.totalorder %s14, 0
    %p90 = por %p88, %p89
    %p91 = scmp.ne.s32.totalorder %s83, %s85
    %p92 = scmp.eq.s32.totalorder %s19, 1
    %p93 = por %p91, %p92
    %p94 = scmp.ne.s32.totalorder %s85, %s86
    %p95 = scmp.eq.s32.totalorder %s19, 0
    %p96 = por %p94, %p95
    %p97 = scmp.ne.s32.totalorder %s85, %s86
    %p98 = scmp.eq.s32.totalorder %s20, 1
    %p99 = por %p97, %p98
    %p101 = scmp.ne.s32.totalorder %s86, %s100
    %p102 = scmp.eq.s32.totalorder %s20, 0
    %p103 = por %p101, %p102
    %s105 = sadd.s32 %s104, 1
    %p108 = scmp.eq.s32.totalorder %s14, 1
    %p109 = scmp.ne.s32.totalorder %s104, %s106
    %p110 = scmp.eq.s32.totalorder %s14, 0
    %p111 = por %p109, %p110
    %p112 = scmp.ne.s32.totalorder %s104, %s106
    %p113 = scmp.eq.s32.totalorder %s19, 1
    %p114 = por %p112, %p113
    %p115 = scmp.ne.s32.totalorder %s106, %s107
    %p116 = scmp.eq.s32.totalorder %s19, 0
    %p117 = por %p115, %p116
    %p118 = scmp.ne.s32.totalorder %s106, %s107
    %p119 = scmp.eq.s32.totalorder %s20, 1
    %p120 = por %p118, %p119
    %p122 = scmp.ne.s32.totalorder %s107, %s121
    %p123 = scmp.eq.s32.totalorder %s20, 0
    %p124 = por %p122, %p123
    %s126 = sadd.s32 %s125, 1
    %p129 = scmp.eq.s32.totalorder %s14, 1
    %p130 = scmp.ne.s32.totalorder %s125, %s127
    %p131 = scmp.eq.s32.totalorder %s14, 0
    %p132 = por %p130, %p131
    %p133 = scmp.ne.s32.totalorder %s125, %s127
    %p134 = scmp.eq.s32.totalorder %s19, 1
    %p135 = por %p133, %p134
    %p136 = scmp.ne.s32.totalorder %s127, %s128
    %p137 = scmp.eq.s32.totalorder %s19, 0
    %p138 = por %p136, %p137
    %p139 = scmp.ne.s32.totalorder %s127, %s128
    %p140 = scmp.eq.s32.totalorder %s20, 1
    %p141 = por %p139, %p140
    %p143 = scmp.ne.s32.totalorder %s128, %s142
    %p144 = scmp.eq.s32.totalorder %s20, 0
    %p145 = por %p143, %p144
    %s146 = ssub.s32 %s21, %s33
    %s147 = ssub.s32 %s22, %s29
    %s148 = sor.u32 %s146, %s147
    %p149 = scmp.eq.s32.totalorder %s148, 0
    %s151 = sadd.s32 %s150, 1
    %s152 = scalar_select %p149, %s150, %s151
    %p155 = pneg %p149
    %p156 = scmp.eq.s32.totalorder %s14, 1
    %p157 = por %p155, %p156
    %p158 = scmp.ne.s32.totalorder %s150, %s153
    %p159 = scmp.eq.s32.totalorder %s14, 0
    %p160 = por %p158, %p159
    %p161 = scmp.ne.s32.totalorder %s150, %s153
    %p162 = scmp.eq.s32.totalorder %s19, 1
    %p163 = por %p161, %p162
    %p164 = scmp.ne.s32.totalorder %s153, %s154
    %p165 = scmp.eq.s32.totalorder %s19, 0
    %p166 = por %p164, %p165
    %p167 = scmp.ne.s32.totalorder %s153, %s154
    %p168 = scmp.eq.s32.totalorder %s20, 1
    %p169 = por %p167, %p168
    %p171 = scmp.ne.s32.totalorder %s154, %s170
    %p172 = scmp.eq.s32.totalorder %s20, 0
    %p173 = por %p171, %p172
    %s174 = ssub.s32 %s21, %s33
    %s175 = ssub.s32 %s22, %s29
    %s176 = sor.u32 %s174, %s175
    %p177 = scmp.eq.s32.totalorder %s176, 0
    %s179 = sadd.s32 %s178, 1
    %s180 = scalar_select %p177, %s178, %s179
    %p183 = pneg %p177
    %p184 = scmp.eq.s32.totalorder %s14, 1
    %p185 = por %p183, %p184
    %p186 = scmp.ne.s32.totalorder %s178, %s181
    %p187 = scmp.eq.s32.totalorder %s14, 0
    %p188 = por %p186, %p187
    %p189 = scmp.ne.s32.totalorder %s178, %s181
    %p190 = scmp.eq.s32.totalorder %s19, 1
    %p191 = por %p189, %p190
    %p192 = scmp.ne.s32.totalorder %s181, %s182
    %p193 = scmp.eq.s32.totalorder %s19, 0
    %p194 = por %p192, %p193
    %p195 = scmp.ne.s32.totalorder %s181, %s182
    %p196 = scmp.eq.s32.totalorder %s20, 1
    %p197 = por %p195, %p196
    %p199 = scmp.ne.s32.totalorder %s182, %s198
    %p200 = scmp.eq.s32.totalorder %s20, 0
    %p201 = por %p199, %p200
    %s202 = ssub.s32 %s21, %s33
    %s203 = ssub.s32 %s22, %s29
    %s204 = sor.u32 %s202, %s203
    %p205 = scmp.eq.s32.totalorder %s204, 0
    %s207 = sadd.s32 %s206, 1
    %s208 = scalar_select %p205, %s206, %s207
    %p211 = pneg %p205
    %p212 = scmp.eq.s32.totalorder %s14, 1
    %p213 = por %p211, %p212
    %p214 = scmp.ne.s32.totalorder %s206, %s209
    %p215 = scmp.eq.s32.totalorder %s14, 0
    %p216 = por %p214, %p215
    %p217 = scmp.ne.s32.totalorder %s206, %s209
    %p218 = scmp.eq.s32.totalorder %s19, 1
    %p219 = por %p217, %p218
    %p220 = scmp.ne.s32.totalorder %s209, %s210
    %p221 = scmp.eq.s32.totalorder %s19, 0
    %p222 = por %p220, %p221
    %p223 = scmp.ne.s32.totalorder %s209, %s210
    %p224 = scmp.eq.s32.totalorder %s20, 1
    %p225 = por %p223, %p224
    %p227 = scmp.ne.s32.totalorder %s210, %s226
    %p228 = scmp.eq.s32.totalorder %s20, 0
    %p229 = por %p227, %p228
    %p230 = scmp.le.s32.totalorder 1, %s14
    %p231 = scmp.lt.s32.totalorder %s14, 3
    %p232 = pnand %p230, %p231
    %p233 = pneg %p232
    // Predicated region
    $region9: #{gpt_forward.4} parent=5 // pred_check
      _
    $region10: #{gpt_forward.4} parent=5 // pred_check_branch
      %235 = sbr.rel (%p232) target = $region12
    $region11: #{gpt_forward.4} parent=5 // pred_region
      %s236 = ssub.s32 %s14, 1
      // Predicated region
      $region13: #{gpt_forward.4} parent=11 // pred_check
        %p237 = pneg %p75
      $region14: #{gpt_forward.4} parent=11 // pred_check_branch
        %239 = sbr.rel (%p237) target = $region16
      $region15: #{gpt_forward.4} parent=11 // pred_region
        _
      $region16: #{gpt_forward.4} parent=11 // pred_fallthru
        _
      // Predicated region
      $region17: #{gpt_forward.4} parent=11 // pred_check
        %p240 = pneg %p96
      $region18: #{gpt_forward.4} parent=11 // pred_check_branch
        %242 = sbr.rel (%p240) target = $region20
      $region19: #{gpt_forward.4} parent=11 // pred_region
        _
      $region20: #{gpt_forward.4} parent=11 // pred_fallthru
        _
      // Predicated region
      $region21: #{gpt_forward.4} parent=11 // pred_check
        %p243 = pneg %p117
      $region22: #{gpt_forward.4} parent=11 // pred_check_branch
        %245 = sbr.rel (%p243) target = $region24
      $region23: #{gpt_forward.4} parent=11 // pred_region
        _
      $region24: #{gpt_forward.4} parent=11 // pred_fallthru
        _
      // Predicated region
      $region25: #{gpt_forward.4} parent=11 // pred_check
        %p246 = pneg %p138
      $region26: #{gpt_forward.4} parent=11 // pred_check_branch
        %248 = sbr.rel (%p246) target = $region28
      $region27: #{gpt_forward.4} parent=11 // pred_region
        _
      $region28: #{gpt_forward.4} parent=11 // pred_fallthru
        _
    $region12: #{gpt_forward.4} parent=5 // pred_fallthru
      _
    %p249 = scmp.lt.s32.totalorder %s14, 2
    // Predicated region
    $region29: #{gpt_forward.4} parent=5 // pred_check
      %p250 = pneg %p249
    $region30: #{gpt_forward.4} parent=5 // pred_check_branch
      %252 = sbr.rel (%p250) target = $region32
    $region31: #{gpt_forward.4} parent=5 // pred_region
      // Predicated region
      $region33: #{gpt_forward.4} parent=31 // pred_check
        %p253 = pneg %p48
      $region34: #{gpt_forward.4} parent=31 // pred_check_branch
        %255 = sbr.rel (%p253) target = $region36
      $region35: #{gpt_forward.4} parent=31 // pred_region
        %p256 = scmp.lt.s32.totalorder %s21, 1
        %s257 = scalar_select %p256, %s21, 1
        %p258 = scmp.lt.s32.totalorder %s22, 0
        %s259 = scalar_select %p258, %s22, 0
        %s260 = sadd.s32 %s259, %s257
        %s261 = smul.addr %s260, 8
        %s262 = scalar_lea.vmem %s0, %s261
      $region36: #{gpt_forward.4} parent=31 // pred_fallthru
        _
    $region32: #{gpt_forward.4} parent=5 // pred_fallthru
      _
    %p263 = scmp.le.s32.totalorder 1, %s14
    %p264 = scmp.lt.s32.totalorder %s14, 3
    %p265 = pnand %p263, %p264
    %p266 = pneg %p265
    // Predicated region
    $region37: #{gpt_forward.4} parent=5 // pred_check
      _
    $region38: #{gpt_forward.4} parent=5 // pred_check_branch
      %268 = sbr.rel (%p265) target = $region40
    $region39: #{gpt_forward.4} parent=5 // pred_region
      %s269 = ssub.s32 %s14, 1
      %p270 = scmp.lt.s32.totalorder %s23, 1
      %s271 = scalar_select %p270, %s23, 1
      %p272 = scmp.lt.s32.totalorder %s24, 0
      %s273 = scalar_select %p272, %s24, 0
      %s274 = sadd.s32 %s273, %s271
      %s275 = smul.addr %s274, 8
      %s276 = scalar_lea.vmem %s0, %s275
      %p277 = pneg %p54
      %p278 = pneg %p51
      %p279 = pneg %p75
      %p280 = pneg %p72
      %p281 = pneg %p96
      %p282 = pneg %p93
      %p283 = pneg %p117
      %p284 = pneg %p114
      %p285 = pneg %p138
      %p286 = pneg %p135
      %p287 = pneg %p166
      %p288 = pneg %p163
      %p289 = scmp.lt.s32.totalorder %s23, 1
      %s290 = scalar_select %p289, %s23, 1
      %p291 = scmp.lt.s32.totalorder %s24, 0
      %s292 = scalar_select %p291, %s24, 0
      %s293 = sadd.s32 %s292, %s290
      %s294 = smul.addr %s293, 4
      %s295 = scalar_lea.vmem %s5, %s294
      %p296 = pneg %p194
      %p297 = pneg %p191
      %p298 = scmp.lt.s32.totalorder %s23, 1
      %s299 = scalar_select %p298, %s23, 1
      %p300 = scmp.lt.s32.totalorder %s24, 0
      %s301 = scalar_select %p300, %s24, 0
      %s302 = sadd.s32 %s301, %s299
      %s303 = smul.addr %s302, 4
      %s304 = scalar_lea.vmem %s6, %s303
      %p305 = pneg %p222
      %p306 = pneg %p219
      %p307 = scmp.lt.s32.totalorder %s23, 1
      %s308 = scalar_select %p307, %s23, 1
      %p309 = scmp.lt.s32.totalorder %s24, 0
      %s310 = scalar_select %p309, %s24, 0
      %s311 = sadd.s32 %s310, %s308
      %s312 = smul.addr %s311, 4
      %s313 = scalar_lea.vmem %s7, %s312
      %p314 = scmp.lt.s32.totalorder %s23, 1
      %s315 = scalar_select %p314, %s23, 1
      %p316 = scmp.lt.s32.totalorder %s24, 0
      %s317 = scalar_select %p316, %s24, 0
      %s318 = sadd.s32 %s317, %s315
      %s319 = smul.addr %s318, 8
      %s320 = scalar_lea.vmem %s0, %s319
      %p321 = scmp.lt.s32.totalorder %s23, 1
      %s322 = scalar_select %p321, %s23, 1
      %p323 = scmp.lt.s32.totalorder %s24, 0
      %s324 = scalar_select %p323, %s24, 0
      %s325 = sadd.s32 %s324, %s322
      %s326 = smul.addr %s325, 4
      %s327 = scalar_lea.vmem %s5, %s326
      %p328 = scmp.lt.s32.totalorder %s23, 1
      %s329 = scalar_select %p328, %s23, 1
      %p330 = scmp.lt.s32.totalorder %s24, 0
      %s331 = scalar_select %p330, %s24, 0
      %s332 = sadd.s32 %s331, %s329
      %s333 = smul.addr %s332, 4
      %s334 = scalar_lea.vmem %s6, %s333
      %p335 = scmp.lt.s32.totalorder %s23, 1
      %s336 = scalar_select %p335, %s23, 1
      %p337 = scmp.lt.s32.totalorder %s24, 0
      %s338 = scalar_select %p337, %s24, 0
      %s339 = sadd.s32 %s338, %s336
      %s340 = smul.addr %s339, 4
      %s341 = scalar_lea.vmem %s7, %s340
      %v343 = vld [vmem:[%s320] sm:$0xff]
      %v344 = vld [vmem:[%s1] sm:$0x1]
      %v345 = vld [vmem:[%s2] sm:$0x1]
      %vm346 = vcmask 261120
      %v347 = vsel %vm346, %v343, 0.0
      %348 = vadd.xlane.f32.xlu0 %v347
      %v349 = vpop.xlane.xlu0 %348
      %v350 = vrcp.pop 32.0
      %v351 = vmul.f32 %v349, %v350
      %v352 = vsub.f32 %v343, %v351
      %v353 = vmul.f32 %v352, %v352
      %v354 = vsel %vm346, %v353, 0.0
      %355 = vadd.xlane.f32.xlu0 %v354
      %v356 = vpop.xlane.xlu0 %355
      %v357 = vmul.f32 %v356, %v350
      %v358 = vadd.f32 %v357, 1e-05
      %v359 = vrsqrt.pop %v358
      %v360 = vmul.f32 %v352, %v359
      %v362 = vlaneseq
      %v363 = vshrl.u32 %v362, 7
      %v364 = vsub.s32 0, %v363
      %v365 = vrot.slane %v344, %v364
      %v367 = vmul.f32 %v360, %v365
      %v369 = vlaneseq
      %v370 = vshrl.u32 %v369, 7
      %v371 = vsub.s32 0, %v370
      %v372 = vrot.slane %v345, %v371
      %v374 = vadd.f32 %v367, %v372
      %v375 = vpack.c.bf16 %v374, %v374
      %v376 = vld [vmem:[%s3] sm:$0xf]
      %v377 = vld [vmem:[%s3 + $0x4] sm:$0xf]
      %v378 = vld [vmem:[%s3 + $0x8] sm:$0xf]
      %v379 = vld [vmem:[%s3 + $0xc] sm:$0xf]
      %v380 = vld [vmem:[%s4] sm:$0x1]
      %v382 = vlaneseq
      %v383 = vshrl.u32 %v382, 7
      %v384 = vsub.s32 0, %v383
      %v385 = vrot.slane %v380, %v384
      %v391 = vunpack.c.l.b16 %v376
      %v392 = vunpack.c.l.b16 %v377
      %v393 = vunpack.c.l.b16 %v378
      %v394 = vunpack.c.l.b16 %v379
      %v395 = vpack.c.b16 %v392, %v391
      %v396 = vpack.c.b16 %v394, %v393
      %v400 = vsel %vm346, %v375, 0
      %402 = vmatprep.subr.bf16.mxu0 0
      %403 = vmatpush1.bf16.msra.mxu0 0
      %404 = vmatprep.subr.bf16.mxu0 0
      %405 = vmatpush1.bf16.msra.mxu0 0
      %406 = vmatprep.subr.bf16.mxu0 0
      %407 = vmatpush1.bf16.msra.mxu0 0
      %408 = vmatprep.subr.bf16.mxu0 0
      %409 = vmatpush1.bf16.msra.mxu0 0
      %410 = vmatprep.subr.bf16.mxu0 0
      %411 = vmatpush1.bf16.msra.mxu0 0
      %412 = vmatprep.subr.bf16.mxu0 0
      %413 = vmatpush1.bf16.msra.mxu0 0
      %414 = vmatprep.subr.bf16.mxu0 0
      %415 = vmatpush1.bf16.msra.mxu0 %v396
      %416 = vmatprep.subr.bf16.mxu0 0
      %417 = vmatpush1.bf16.msra.mxu0 %v395
      %418 = vmatprep.subr.bf16.mxu0 0
      %419 = vmatpush2.bf16.msra.mxu0 0
      %420 = vmatprep.subr.bf16.mxu0 0
      %421 = vmatpush2.bf16.msra.mxu0 0
      %422 = vmatprep.subr.bf16.mxu0 0
      %423 = vmatpush2.bf16.msra.mxu0 0
      %424 = vmatprep.subr.bf16.mxu0 0
      %425 = vmatpush2.bf16.msra.mxu0 0
      %426 = vmatprep.subr.bf16.mxu0 0
      %427 = vmatpush2.bf16.msra.mxu0 0
      %428 = vmatprep.subr.bf16.mxu0 0
      %429 = vmatpush2.bf16.msra.mxu0 0
      %430 = vmatprep.subr.bf16.mxu0 0
      %431 = vmatpush2.bf16.msra.mxu0 0
      %432 = vmatprep.subr.bf16.mxu0 0
      %433 = vmatpush2.bf16.msra.mxu0 0
      %434 = vmatprep.mubr.bf16.mxu0 0
      %435 = vmatmul.mubr.bf16.gmra.mxu0 %v400
      %v436 = vpop.f32.mrf.mxu0
      %v437 = vadd.f32 %v385, %v436
      %v438 = vpop.f32.mrf.mxu0
      %v439 = vpop.f32.mrf.mxu0
      %v440 = vpop.f32.mrf.mxu0
      %441 = vdwg.mxu0
      %v442 = vpack.c.bf16 %v437, %v437
      %vm443 = vcmask 257024
      %444 = vst.msk [vmem:[%s327] sm:$0xf] %vm443, %v442
      %v446 = vunpack.c.l.b16 %v442
      %v447 = vpack.c.b16 %v446, %v446
      %448 = vrot.lane.b32.xlu0 %v447, 96
      %v449 = vpop.permute.xlu0 %448
      %451 = vst.msk [vmem:[%s334] sm:$0xf] %vm443, %v449
      %452 = vrot.lane.b32.xlu0 %v447, 64
      %v453 = vpop.permute.xlu0 %452
      %455 = vst.msk [vmem:[%s341] sm:$0xf] %vm443, %v453
      %p456 = scmp.lt.s32.totalorder %s23, 1
      %s457 = scalar_select %p456, %s23, 1
      %p458 = scmp.lt.s32.totalorder %s24, 0
      %s459 = scalar_select %p458, %s24, 0
      %s460 = sadd.s32 %s459, %s457
      %s461 = smul.addr %s460, 4
      %s462 = scalar_lea.vmem %s5, %s461
      %p463 = scmp.lt.s32.totalorder %s23, 1
      %s464 = scalar_select %p463, %s23, 1
      %p465 = scmp.lt.s32.totalorder %s24, 0
      %s466 = scalar_select %p465, %s24, 0
      %s467 = sadd.s32 %s466, %s464
      %s468 = smul.addr %s467, 4
      %s469 = scalar_lea.vmem %s6, %s468
      %p470 = scmp.lt.s32.totalorder %s23, 1
      %s471 = scalar_select %p470, %s23, 1
      %p472 = scmp.lt.s32.totalorder %s24, 0
      %s473 = scalar_select %p472, %s24, 0
      %s474 = sadd.s32 %s473, %s471
      %s475 = smul.addr %s474, 4
      %s476 = scalar_lea.vmem %s7, %s475
      // Predicated region
      $region41: #{gpt_forward.4} parent=39 // pred_check
        %p477 = pneg %p163
      $region42: #{gpt_forward.4} parent=39 // pred_check_branch
        %479 = sbr.rel (%p477) target = $region44
      $region43: #{gpt_forward.4} parent=39 // pred_region
        _
      $region44: #{gpt_forward.4} parent=39 // pred_fallthru
        _
      // Predicated region
      $region45: #{gpt_forward.4} parent=39 // pred_check
        %p480 = pneg %p191
      $region46: #{gpt_forward.4} parent=39 // pred_check_branch
        %482 = sbr.rel (%p480) target = $region48
      $region47: #{gpt_forward.4} parent=39 // pred_region
        _
      $region48: #{gpt_forward.4} parent=39 // pred_fallthru
        _
      // Predicated region
      $region49: #{gpt_forward.4} parent=39 // pred_check
        %p483 = pneg %p219
      $region50: #{gpt_forward.4} parent=39 // pred_check_branch
        %485 = sbr.rel (%p483) target = $region52
      $region51: #{gpt_forward.4} parent=39 // pred_region
        _
      $region52: #{gpt_forward.4} parent=39 // pred_fallthru
        _
    $region40: #{gpt_forward.4} parent=5 // pred_fallthru
      _
    %p486 = scmp.le.s32.totalorder 2, %s14
    // Predicated region
    $region53: #{gpt_forward.4} parent=5 // pred_check
      %p487 = pneg %p486
    $region54: #{gpt_forward.4} parent=5 // pred_check_branch
      %489 = sbr.rel (%p487) target = $region56
    $region55: #{gpt_forward.4} parent=5 // pred_region
      %s490 = ssub.s32 %s14, 2
      // Predicated region
      $region57: #{gpt_forward.4} parent=55 // pred_check
        %p491 = pneg %p169
      $region58: #{gpt_forward.4} parent=55 // pred_check_branch
        %493 = sbr.rel (%p491) target = $region60
      $region59: #{gpt_forward.4} parent=55 // pred_region
        %p494 = scmp.lt.s32.totalorder %s25, 1
        %s495 = scalar_select %p494, %s25, 1
        %p496 = scmp.lt.s32.totalorder %s26, 0
        %s497 = scalar_select %p496, %s26, 0
        %s498 = sadd.s32 %s497, %s495
        %s499 = smul.addr %s498, 4
        %s500 = scalar_lea.vmem %s5, %s499
      $region60: #{gpt_forward.4} parent=55 // pred_fallthru
        _
      // Predicated region
      $region61: #{gpt_forward.4} parent=55 // pred_check
        %p501 = pneg %p197
      $region62: #{gpt_forward.4} parent=55 // pred_check_branch
        %503 = sbr.rel (%p501) target = $region64
      $region63: #{gpt_forward.4} parent=55 // pred_region
        %p504 = scmp.lt.s32.totalorder %s25, 1
        %s505 = scalar_select %p504, %s25, 1
        %p506 = scmp.lt.s32.totalorder %s26, 0
        %s507 = scalar_select %p506, %s26, 0
        %s508 = sadd.s32 %s507, %s505
        %s509 = smul.addr %s508, 4
        %s510 = scalar_lea.vmem %s6, %s509
      $region64: #{gpt_forward.4} parent=55 // pred_fallthru
        _
      // Predicated region
      $region65: #{gpt_forward.4} parent=55 // pred_check
        %p511 = pneg %p225
      $region66: #{gpt_forward.4} parent=55 // pred_check_branch
        %513 = sbr.rel (%p511) target = $region68
      $region67: #{gpt_forward.4} parent=55 // pred_region
        %p514 = scmp.lt.s32.totalorder %s25, 1
        %s515 = scalar_select %p514, %s25, 1
        %p516 = scmp.lt.s32.totalorder %s26, 0
        %s517 = scalar_select %p516, %s26, 0
        %s518 = sadd.s32 %s517, %s515
        %s519 = smul.addr %s518, 4
        %s520 = scalar_lea.vmem %s7, %s519
      $region68: #{gpt_forward.4} parent=55 // pred_fallthru
        _
    $region56: #{gpt_forward.4} parent=5 // pred_fallthru
      _
  $region6: #{gpt_forward.4} parent=0 // loop_footer
    %s18 = sadd.s32 1, %s14
  $region7: #{gpt_forward.4} parent=0 // loop_footer_branch
    %13 = sbr.rel target = $region3
  $region8: #{gpt_forward.4} parent=0 // loop_exit
    _

// kernel: gpt_forward.5
$region0: #{gpt_forward.5}
  #allocation0 [shape = 'u32[]', space=smem, size = 0x4, offset = 0x4, fixed_abs, tag = 'smem constant byte address 0x4 - core index']
  #allocation1 [shape = 'u32[144,128]{1,0:T(1,128)}', space=vmem, size = 0x12000, scoped, tag = 'internal scratch']
  #allocation2 [shape = 'bf16[4,8,8]{2,1,0:T(8,128)(2,1)}', space=vmem, size = 0x2000, scoped, tag = 'scratch operand']
  #allocation3 [shape = 'f32[4,8,1]{2,1,0:T(8,128)}', space=vmem, size = 0x4000, scoped, tag = 'scratch operand']
  #allocation4 [shape = 'f32[4,8,1]{2,1,0:T(8,128)}', space=vmem, size = 0x4000, scoped, tag = 'scratch operand']
  #allocation5 [shape = 'f32[4,8,8]{2,1,0:T(8,128)}', space=vmem, size = 0x4000, scoped, tag = 'scratch operand']
  %s0 = inlined_call_operand.vmem [shape: f32[2,8,32], index: 0, kind: input, shape index: {}]
  %s1 = inlined_call_operand.vmem [shape: bf16[2,8,32], index: 1, kind: input, shape index: {}]
  %s2 = inlined_call_operand.vmem [shape: bf16[2,8,32], index: 2, kind: input, shape index: {}]
  %s3 = inlined_call_operand.vmem [shape: bf16[2,8,32], index: 3, kind: input, shape index: {}]
  %s4 = inlined_call_operand.vmem [shape: f32[1,32], index: 4, kind: input, shape index: {}]
  %s5 = inlined_call_operand.vmem [shape: f32[1,32], index: 5, kind: input, shape index: {}]
  %s6 = inlined_call_operand.vmem [shape: bf16[32,32], index: 6, kind: input, shape index: {}]
  %s7 = inlined_call_operand.vmem [shape: f32[1,32], index: 7, kind: input, shape index: {}]
  %s8 = inlined_call_operand.vmem [shape: f32[1,32], index: 8, kind: input, shape index: {}]
  %s9 = inlined_call_operand.vmem [shape: f32[1,32], index: 9, kind: input, shape index: {}]
  %s10 = inlined_call_operand.vmem [shape: bf16[32,128], index: 10, kind: input, shape index: {}]
  %s11 = inlined_call_operand.vmem [shape: f32[1,128], index: 11, kind: input, shape index: {}]
  %s12 = inlined_call_operand.vmem [shape: bf16[128,32], index: 12, kind: input, shape index: {}]
  %s13 = inlined_call_operand.vmem [shape: f32[1,32], index: 13, kind: input, shape index: {}]
  %s14 = inlined_call_operand.vmem [shape: f32[2,8,32], index: 14, kind: output, shape index: {}]
  %s15 = sld [smem:[#allocation0]]
  $region101: #{gpt_forward.5} parent=0
    _
  %s17 = ssub.s32 1, %s15
  %s18 = scalar_select 0, %s17, %s15
  loop: start=0, step=1, limit=4
  $region2: #{gpt_forward.5} parent=0 // loop_pre_header
    _
  $region3: #{gpt_forward.5} parent=0 // loop_header
    %s20 = sphi 0, %s24
    %p21 = scmp.ge.s32.totalorder %s20, 4
    %s27 = sphi 0, %s46
    %s28 = sphi 0, %s42
    %s29 = sphi 0, %s38
    %s30 = sphi 0, %s27
    %s31 = sphi 0, %s28
    %s32 = sphi 0, %s29
    %s33 = sphi 0, %s30
    %s34 = sphi 0, %s31
    %s35 = sphi 0, %s32
    %s51 = sphi 0, %s53
    %s54 = sphi 0, %s51
    %s55 = sphi 0, %s54
    %s71 = sphi 0, %s55
    %s79 = sphi 0, %s81
    %s82 = sphi 0, %s79
    %s83 = sphi 0, %s82
    %s99 = sphi 0, %s83
    %s111 = sphi 0, %s113
    %s114 = sphi 0, %s111
    %s115 = sphi 0, %s114
    %s131 = sphi 0, %s115
    %s143 = sphi 0, %s145
    %s146 = sphi 0, %s143
    %s147 = sphi 0, %s146
    %s163 = sphi 0, %s147
    %s167 = sphi 0, %s167
    %s169 = sphi 0, %s167
    %s170 = sphi 0, %s169
    %s184 = sphi 0, %s170
    %s188 = sphi 0, %s188
    %s190 = sphi 0, %s188
    %s191 = sphi 0, %s190
    %s205 = sphi 0, %s191
    %s209 = sphi 0, %s209
    %s211 = sphi 0, %s209
    %s212 = sphi 0, %s211
    %s226 = sphi 0, %s212
    %s230 = sphi 0, %s230
    %s232 = sphi 0, %s230
    %s233 = sphi 0, %s232
    %s247 = sphi 0, %s233
    %s251 = sphi 0, %s251
    %s253 = sphi 0, %s251
    %s254 = sphi 0, %s253
    %s268 = sphi 0, %s254
    %s272 = sphi 0, %s272
    %s274 = sphi 0, %s272
    %s275 = sphi 0, %s274
    %s289 = sphi 0, %s275
    %s293 = sphi 0, %s293
    %s295 = sphi 0, %s293
    %s296 = sphi 0, %s295
    %s310 = sphi 0, %s296
    %s314 = sphi 0, %s314
    %s316 = sphi 0, %s314
    %s317 = sphi 0, %s316
    %s331 = sphi 0, %s317
    %s335 = sphi 0, %s335
    %s337 = sphi 0, %s335
    %s338 = sphi 0, %s337
    %s352 = sphi 0, %s338
    %s356 = sphi 0, %s356
    %s358 = sphi 0, %s356
    %s359 = sphi 0, %s358
    %s373 = sphi 0, %s359
    %s381 = sphi 0, %s383
    %s384 = sphi 0, %s381
    %s385 = sphi 0, %s384
    %s401 = sphi 0, %s385
  $region4: #{gpt_forward.5} parent=0 // loop_header_branch
    %23 = sbr.rel (%p21) target = $region8
  $region5: #{gpt_forward.5} parent=0 // loop_body
    %s25 = ssub.s32 %s20, 1
    %s26 = ssub.s32 %s20, 2
    %s36 = sadd.s32 1, %s29
    %p37 = scmp.ge.s32.totalorder %s36, 1
    %s38 = scalar_select %p37, 0, %s36
    %s39 = sadd.s32 1, %s28
    %s40 = scalar_select %p37, %s39, %s28
    %p41 = scmp.ge.s32.totalorder %s40, 1
    %s42 = scalar_select %p41, 0, %s40
    %s43 = sadd.s32 1, %s27
    %s44 = scalar_select %p41, %s43, %s27
    %p45 = scmp.ge.s32.totalorder %s44, 2
    %s46 = scalar_select %p45, 0, %s44
    %s47 = ssub.s32 %s27, %s46
    %s48 = ssub.s32 %s28, %s42
    %s49 = sor.u32 %s47, %s48
    %p50 = scmp.eq.s32.totalorder %s49, 0
    %s52 = sadd.s32 %s51, 1
    %s53 = scalar_select %p50, %s51, %s52
    %p56 = pneg %p50
    %p57 = scmp.eq.s32.totalorder %s20, 1
    %p58 = por %p56, %p57
    %p59 = scmp.ne.s32.totalorder %s51, %s54
    %p60 = scmp.eq.s32.totalorder %s20, 0
    %p61 = por %p59, %p60
    %p62 = scmp.ne.s32.totalorder %s51, %s54
    %p63 = scmp.eq.s32.totalorder %s25, 1
    %p64 = por %p62, %p63
    %p65 = scmp.ne.s32.totalorder %s54, %s55
    %p66 = scmp.eq.s32.totalorder %s25, 0
    %p67 = por %p65, %p66
    %p68 = scmp.ne.s32.totalorder %s54, %s55
    %p69 = scmp.eq.s32.totalorder %s26, 1
    %p70 = por %p68, %p69
    %p72 = scmp.ne.s32.totalorder %s55, %s71
    %p73 = scmp.eq.s32.totalorder %s26, 0
    %p74 = por %p72, %p73
    %s75 = ssub.s32 %s27, %s46
    %s76 = ssub.s32 %s28, %s42
    %s77 = sor.u32 %s75, %s76
    %p78 = scmp.eq.s32.totalorder %s77, 0
    %s80 = sadd.s32 %s79, 1
    %s81 = scalar_select %p78, %s79, %s80
    %p84 = pneg %p78
    %p85 = scmp.eq.s32.totalorder %s20, 1
    %p86 = por %p84, %p85
    %p87 = scmp.ne.s32.totalorder %s79, %s82
    %p88 = scmp.eq.s32.totalorder %s20, 0
    %p89 = por %p87, %p88
    %p90 = scmp.ne.s32.totalorder %s79, %s82
    %p91 = scmp.eq.s32.totalorder %s25, 1
    %p92 = por %p90, %p91
    %p93 = scmp.ne.s32.totalorder %s82, %s83
    %p94 = scmp.eq.s32.totalorder %s25, 0
    %p95 = por %p93, %p94
    %p96 = scmp.ne.s32.totalorder %s82, %s83
    %p97 = scmp.eq.s32.totalorder %s26, 1
    %p98 = por %p96, %p97
    %p100 = scmp.ne.s32.totalorder %s83, %s99
    %p101 = scmp.eq.s32.totalorder %s26, 0
    %p102 = por %p100, %p101
    %p103 = scmp.lt.s32.totalorder %s29, %s28
    %s104 = scalar_select %p103, %s29, %s28
    %p105 = scmp.lt.s32.totalorder %s38, %s42
    %s106 = scalar_select %p105, %s38, %s42
    %s107 = ssub.s32 %s27, %s46
    %s108 = ssub.s32 %s104, %s106
    %s109 = sor.u32 %s107, %s108
    %p110 = scmp.eq.s32.totalorder %s109, 0
    %s112 = sadd.s32 %s111, 1
    %s113 = scalar_select %p110, %s111, %s112
    %p116 = pneg %p110
    %p117 = scmp.eq.s32.totalorder %s20, 1
    %p118 = por %p116, %p117
    %p119 = scmp.ne.s32.totalorder %s111, %s114
    %p120 = scmp.eq.s32.totalorder %s20, 0
    %p121 = por %p119, %p120
    %p122 = scmp.ne.s32.totalorder %s111, %s114
    %p123 = scmp.eq.s32.totalorder %s25, 1
    %p124 = por %p122, %p123
    %p125 = scmp.ne.s32.totalorder %s114, %s115
    %p126 = scmp.eq.s32.totalorder %s25, 0
    %p127 = por %p125, %p126
    %p128 = scmp.ne.s32.totalorder %s114, %s115
    %p129 = scmp.eq.s32.totalorder %s26, 1
    %p130 = por %p128, %p129
    %p132 = scmp.ne.s32.totalorder %s115, %s131
    %p133 = scmp.eq.s32.totalorder %s26, 0
    %p134 = por %p132, %p133
    %p135 = scmp.lt.s32.totalorder %s29, %s28
    %s136 = scalar_select %p135, %s29, %s28
    %p137 = scmp.lt.s32.totalorder %s38, %s42
    %s138 = scalar_select %p137, %s38, %s42
    %s139 = ssub.s32 %s27, %s46
    %s140 = ssub.s32 %s136, %s138
    %s141 = sor.u32 %s139, %s140
    %p142 = scmp.eq.s32.totalorder %s141, 0
    %s144 = sadd.s32 %s143, 1
    %s145 = scalar_select %p142, %s143, %s144
    %p148 = pneg %p142
    %p149 = scmp.eq.s32.totalorder %s20, 1
    %p150 = por %p148, %p149
    %p151 = scmp.ne.s32.totalorder %s143, %s146
    %p152 = scmp.eq.s32.totalorder %s20, 0
    %p153 = por %p151, %p152
    %p154 = scmp.ne.s32.totalorder %s143, %s146
    %p155 = scmp.eq.s32.totalorder %s25, 1
    %p156 = por %p154, %p155
    %p157 = scmp.ne.s32.totalorder %s146, %s147
    %p158 = scmp.eq.s32.totalorder %s25, 0
    %p159 = por %p157, %p158
    %p160 = scmp.ne.s32.totalorder %s146, %s147
    %p161 = scmp.eq.s32.totalorder %s26, 1
    %p162 = por %p160, %p161
    %p164 = scmp.ne.s32.totalorder %s147, %s163
    %p165 = scmp.eq.s32.totalorder %s26, 0
    %p166 = por %p164, %p165
    %s168 = sadd.s32 %s167, 1
    %p171 = scmp.eq.s32.totalorder %s20, 1
    %p172 = scmp.ne.s32.totalorder %s167, %s169
    %p173 = scmp.eq.s32.totalorder %s20, 0
    %p174 = por %p172, %p173
    %p175 = scmp.ne.s32.totalorder %s167, %s169
    %p176 = scmp.eq.s32.totalorder %s25, 1
    %p177 = por %p175, %p176
    %p178 = scmp.ne.s32.totalorder %s169, %s170
    %p179 = scmp.eq.s32.totalorder %s25, 0
    %p180 = por %p178, %p179
    %p181 = scmp.ne.s32.totalorder %s169, %s170
    %p182 = scmp.eq.s32.totalorder %s26, 1
    %p183 = por %p181, %p182
    %p185 = scmp.ne.s32.totalorder %s170, %s184
    %p186 = scmp.eq.s32.totalorder %s26, 0
    %p187 = por %p185, %p186
    %s189 = sadd.s32 %s188, 1
    %p192 = scmp.eq.s32.totalorder %s20, 1
    %p193 = scmp.ne.s32.totalorder %s188, %s190
    %p194 = scmp.eq.s32.totalorder %s20, 0
    %p195 = por %p193, %p194
    %p196 = scmp.ne.s32.totalorder %s188, %s190
    %p197 = scmp.eq.s32.totalorder %s25, 1
    %p198 = por %p196, %p197
    %p199 = scmp.ne.s32.totalorder %s190, %s191
    %p200 = scmp.eq.s32.totalorder %s25, 0
    %p201 = por %p199, %p200
    %p202 = scmp.ne.s32.totalorder %s190, %s191
    %p203 = scmp.eq.s32.totalorder %s26, 1
    %p204 = por %p202, %p203
    %p206 = scmp.ne.s32.totalorder %s191, %s205
    %p207 = scmp.eq.s32.totalorder %s26, 0
    %p208 = por %p206, %p207
    %s210 = sadd.s32 %s209, 1
    %p213 = scmp.eq.s32.totalorder %s20, 1
    %p214 = scmp.ne.s32.totalorder %s209, %s211
    %p215 = scmp.eq.s32.totalorder %s20, 0
    %p216 = por %p214, %p215
    %p217 = scmp.ne.s32.totalorder %s209, %s211
    %p218 = scmp.eq.s32.totalorder %s25, 1
    %p219 = por %p217, %p218
    %p220 = scmp.ne.s32.totalorder %s211, %s212
    %p221 = scmp.eq.s32.totalorder %s25, 0
    %p222 = por %p220, %p221
    %p223 = scmp.ne.s32.totalorder %s211, %s212
    %p224 = scmp.eq.s32.totalorder %s26, 1
    %p225 = por %p223, %p224
    %p227 = scmp.ne.s32.totalorder %s212, %s226
    %p228 = scmp.eq.s32.totalorder %s26, 0
    %p229 = por %p227, %p228
    %s231 = sadd.s32 %s230, 1
    %p234 = scmp.eq.s32.totalorder %s20, 1
    %p235 = scmp.ne.s32.totalorder %s230, %s232
    %p236 = scmp.eq.s32.totalorder %s20, 0
    %p237 = por %p235, %p236
    %p238 = scmp.ne.s32.totalorder %s230, %s232
    %p239 = scmp.eq.s32.totalorder %s25, 1
    %p240 = por %p238, %p239
    %p241 = scmp.ne.s32.totalorder %s232, %s233
    %p242 = scmp.eq.s32.totalorder %s25, 0
    %p243 = por %p241, %p242
    %p244 = scmp.ne.s32.totalorder %s232, %s233
    %p245 = scmp.eq.s32.totalorder %s26, 1
    %p246 = por %p244, %p245
    %p248 = scmp.ne.s32.totalorder %s233, %s247
    %p249 = scmp.eq.s32.totalorder %s26, 0
    %p250 = por %p248, %p249
    %s252 = sadd.s32 %s251, 1
    %p255 = scmp.eq.s32.totalorder %s20, 1
    %p256 = scmp.ne.s32.totalorder %s251, %s253
    %p257 = scmp.eq.s32.totalorder %s20, 0
    %p258 = por %p256, %p257
    %p259 = scmp.ne.s32.totalorder %s251, %s253
    %p260 = scmp.eq.s32.totalorder %s25, 1
    %p261 = por %p259, %p260
    %p262 = scmp.ne.s32.totalorder %s253, %s254
    %p263 = scmp.eq.s32.totalorder %s25, 0
    %p264 = por %p262, %p263
    %p265 = scmp.ne.s32.totalorder %s253, %s254
    %p266 = scmp.eq.s32.totalorder %s26, 1
    %p267 = por %p265, %p266
    %p269 = scmp.ne.s32.totalorder %s254, %s268
    %p270 = scmp.eq.s32.totalorder %s26, 0
    %p271 = por %p269, %p270
    %s273 = sadd.s32 %s272, 1
    %p276 = scmp.eq.s32.totalorder %s20, 1
    %p277 = scmp.ne.s32.totalorder %s272, %s274
    %p278 = scmp.eq.s32.totalorder %s20, 0
    %p279 = por %p277, %p278
    %p280 = scmp.ne.s32.totalorder %s272, %s274
    %p281 = scmp.eq.s32.totalorder %s25, 1
    %p282 = por %p280, %p281
    %p283 = scmp.ne.s32.totalorder %s274, %s275
    %p284 = scmp.eq.s32.totalorder %s25, 0
    %p285 = por %p283, %p284
    %p286 = scmp.ne.s32.totalorder %s274, %s275
    %p287 = scmp.eq.s32.totalorder %s26, 1
    %p288 = por %p286, %p287
    %p290 = scmp.ne.s32.totalorder %s275, %s289
    %p291 = scmp.eq.s32.totalorder %s26, 0
    %p292 = por %p290, %p291
    %s294 = sadd.s32 %s293, 1
    %p297 = scmp.eq.s32.totalorder %s20, 1
    %p298 = scmp.ne.s32.totalorder %s293, %s295
    %p299 = scmp.eq.s32.totalorder %s20, 0
    %p300 = por %p298, %p299
    %p301 = scmp.ne.s32.totalorder %s293, %s295
    %p302 = scmp.eq.s32.totalorder %s25, 1
    %p303 = por %p301, %p302
    %p304 = scmp.ne.s32.totalorder %s295, %s296
    %p305 = scmp.eq.s32.totalorder %s25, 0
    %p306 = por %p304, %p305
    %p307 = scmp.ne.s32.totalorder %s295, %s296
    %p308 = scmp.eq.s32.totalorder %s26, 1
    %p309 = por %p307, %p308
    %p311 = scmp.ne.s32.totalorder %s296, %s310
    %p312 = scmp.eq.s32.totalorder %s26, 0
    %p313 = por %p311, %p312
    %s315 = sadd.s32 %s314, 1
    %p318 = scmp.eq.s32.totalorder %s20, 1
    %p319 = scmp.ne.s32.totalorder %s314, %s316
    %p320 = scmp.eq.s32.totalorder %s20, 0
    %p321 = por %p319, %p320
    %p322 = scmp.ne.s32.totalorder %s314, %s316
    %p323 = scmp.eq.s32.totalorder %s25, 1
    %p324 = por %p322, %p323
    %p325 = scmp.ne.s32.totalorder %s316, %s317
    %p326 = scmp.eq.s32.totalorder %s25, 0
    %p327 = por %p325, %p326
    %p328 = scmp.ne.s32.totalorder %s316, %s317
    %p329 = scmp.eq.s32.totalorder %s26, 1
    %p330 = por %p328, %p329
    %p332 = scmp.ne.s32.totalorder %s317, %s331
    %p333 = scmp.eq.s32.totalorder %s26, 0
    %p334 = por %p332, %p333
    %s336 = sadd.s32 %s335, 1
    %p339 = scmp.eq.s32.totalorder %s20, 1
    %p340 = scmp.ne.s32.totalorder %s335, %s337
    %p341 = scmp.eq.s32.totalorder %s20, 0
    %p342 = por %p340, %p341
    %p343 = scmp.ne.s32.totalorder %s335, %s337
    %p344 = scmp.eq.s32.totalorder %s25, 1
    %p345 = por %p343, %p344
    %p346 = scmp.ne.s32.totalorder %s337, %s338
    %p347 = scmp.eq.s32.totalorder %s25, 0
    %p348 = por %p346, %p347
    %p349 = scmp.ne.s32.totalorder %s337, %s338
    %p350 = scmp.eq.s32.totalorder %s26, 1
    %p351 = por %p349, %p350
    %p353 = scmp.ne.s32.totalorder %s338, %s352
    %p354 = scmp.eq.s32.totalorder %s26, 0
    %p355 = por %p353, %p354
    %s357 = sadd.s32 %s356, 1
    %p360 = scmp.eq.s32.totalorder %s20, 1
    %p361 = scmp.ne.s32.totalorder %s356, %s358
    %p362 = scmp.eq.s32.totalorder %s20, 0
    %p363 = por %p361, %p362
    %p364 = scmp.ne.s32.totalorder %s356, %s358
    %p365 = scmp.eq.s32.totalorder %s25, 1
    %p366 = por %p364, %p365
    %p367 = scmp.ne.s32.totalorder %s358, %s359
    %p368 = scmp.eq.s32.totalorder %s25, 0
    %p369 = por %p367, %p368
    %p370 = scmp.ne.s32.totalorder %s358, %s359
    %p371 = scmp.eq.s32.totalorder %s26, 1
    %p372 = por %p370, %p371
    %p374 = scmp.ne.s32.totalorder %s359, %s373
    %p375 = scmp.eq.s32.totalorder %s26, 0
    %p376 = por %p374, %p375
    %s377 = ssub.s32 %s27, %s46
    %s378 = ssub.s32 %s28, %s42
    %s379 = sor.u32 %s377, %s378
    %p380 = scmp.eq.s32.totalorder %s379, 0
    %s382 = sadd.s32 %s381, 1
    %s383 = scalar_select %p380, %s381, %s382
    %p386 = pneg %p380
    %p387 = scmp.eq.s32.totalorder %s20, 1
    %p388 = por %p386, %p387
    %p389 = scmp.ne.s32.totalorder %s381, %s384
    %p390 = scmp.eq.s32.totalorder %s20, 0
    %p391 = por %p389, %p390
    %p392 = scmp.ne.s32.totalorder %s381, %s384
    %p393 = scmp.eq.s32.totalorder %s25, 1
    %p394 = por %p392, %p393
    %p395 = scmp.ne.s32.totalorder %s384, %s385
    %p396 = scmp.eq.s32.totalorder %s25, 0
    %p397 = por %p395, %p396
    %p398 = scmp.ne.s32.totalorder %s384, %s385
    %p399 = scmp.eq.s32.totalorder %s26, 1
    %p400 = por %p398, %p399
    %p402 = scmp.ne.s32.totalorder %s385, %s401
    %p403 = scmp.eq.s32.totalorder %s26, 0
    %p404 = por %p402, %p403
    %p405 = scmp.le.s32.totalorder 1, %s20
    %p406 = scmp.lt.s32.totalorder %s20, 3
    %p407 = pnand %p405, %p406
    %p408 = pneg %p407
    // Predicated region
    $region9: #{gpt_forward.5} parent=5 // pred_check
      _
    $region10: #{gpt_forward.5} parent=5 // pred_check_branch
      %410 = sbr.rel (%p407) target = $region12
    $region11: #{gpt_forward.5} parent=5 // pred_region
      %s411 = ssub.s32 %s20, 1
      // Predicated region
      $region13: #{gpt_forward.5} parent=11 // pred_check
        %p412 = pneg %p180
      $region14: #{gpt_forward.5} parent=11 // pred_check_branch
        %414 = sbr.rel (%p412) target = $region16
      $region15: #{gpt_forward.5} parent=11 // pred_region
        _
      $region16: #{gpt_forward.5} parent=11 // pred_fallthru
        _
      // Predicated region
      $region17: #{gpt_forward.5} parent=11 // pred_check
        %p415 = pneg %p201
      $region18: #{gpt_forward.5} parent=11 // pred_check_branch
        %417 = sbr.rel (%p415) target = $region20
      $region19: #{gpt_forward.5} parent=11 // pred_region
        _
      $region20: #{gpt_forward.5} parent=11 // pred_fallthru
        _
      // Predicated region
      $region21: #{gpt_forward.5} parent=11 // pred_check
        %p418 = pneg %p222
      $region22: #{gpt_forward.5} parent=11 // pred_check_branch
        %420 = sbr.rel (%p418) target = $region24
      $region23: #{gpt_forward.5} parent=11 // pred_region
        _
      $region24: #{gpt_forward.5} parent=11 // pred_fallthru
        _
      // Predicated region
      $region25: #{gpt_forward.5} parent=11 // pred_check
        %p421 = pneg %p243
      $region26: #{gpt_forward.5} parent=11 // pred_check_branch
        %423 = sbr.rel (%p421) target = $region28
      $region27: #{gpt_forward.5} parent=11 // pred_region
        _
      $region28: #{gpt_forward.5} parent=11 // pred_fallthru
        _
      // Predicated region
      $region29: #{gpt_forward.5} parent=11 // pred_check
        %p424 = pneg %p264
      $region30: #{gpt_forward.5} parent=11 // pred_check_branch
        %426 = sbr.rel (%p424) target = $region32
      $region31: #{gpt_forward.5} parent=11 // pred_region
        _
      $region32: #{gpt_forward.5} parent=11 // pred_fallthru
        _
      // Predicated region
      $region33: #{gpt_forward.5} parent=11 // pred_check
        %p427 = pneg %p285
      $region34: #{gpt_forward.5} parent=11 // pred_check_branch
        %429 = sbr.rel (%p427) target = $region36
      $region35: #{gpt_forward.5} parent=11 // pred_region
        _
      $region36: #{gpt_forward.5} parent=11 // pred_fallthru
        _
      // Predicated region
      $region37: #{gpt_forward.5} parent=11 // pred_check
        %p430 = pneg %p306
      $region38: #{gpt_forward.5} parent=11 // pred_check_branch
        %432 = sbr.rel (%p430) target = $region40
      $region39: #{gpt_forward.5} parent=11 // pred_region
        _
      $region40: #{gpt_forward.5} parent=11 // pred_fallthru
        _
      // Predicated region
      $region41: #{gpt_forward.5} parent=11 // pred_check
        %p433 = pneg %p327
      $region42: #{gpt_forward.5} parent=11 // pred_check_branch
        %435 = sbr.rel (%p433) target = $region44
      $region43: #{gpt_forward.5} parent=11 // pred_region
        _
      $region44: #{gpt_forward.5} parent=11 // pred_fallthru
        _
      // Predicated region
      $region45: #{gpt_forward.5} parent=11 // pred_check
        %p436 = pneg %p348
      $region46: #{gpt_forward.5} parent=11 // pred_check_branch
        %438 = sbr.rel (%p436) target = $region48
      $region47: #{gpt_forward.5} parent=11 // pred_region
        _
      $region48: #{gpt_forward.5} parent=11 // pred_fallthru
        _
      // Predicated region
      $region49: #{gpt_forward.5} parent=11 // pred_check
        %p439 = pneg %p369
      $region50: #{gpt_forward.5} parent=11 // pred_check_branch
        %441 = sbr.rel (%p439) target = $region52
      $region51: #{gpt_forward.5} parent=11 // pred_region
        _
      $region52: #{gpt_forward.5} parent=11 // pred_fallthru
        _
    $region12: #{gpt_forward.5} parent=5 // pred_fallthru
      _
    %p442 = scmp.lt.s32.totalorder %s20, 2
    // Predicated region
    $region53: #{gpt_forward.5} parent=5 // pred_check
      %p443 = pneg %p442
    $region54: #{gpt_forward.5} parent=5 // pred_check_branch
      %445 = sbr.rel (%p443) target = $region56
    $region55: #{gpt_forward.5} parent=5 // pred_region
      // Predicated region
      $region57: #{gpt_forward.5} parent=55 // pred_check
        %p446 = pneg %p61
      $region58: #{gpt_forward.5} parent=55 // pred_check_branch
        %448 = sbr.rel (%p446) target = $region60
      $region59: #{gpt_forward.5} parent=55 // pred_region
        %p449 = scmp.lt.s32.totalorder %s27, 1
        %s450 = scalar_select %p449, %s27, 1
        %p451 = scmp.lt.s32.totalorder %s28, 0
        %s452 = scalar_select %p451, %s28, 0
        %s453 = sadd.s32 %s452, %s450
        %s454 = smul.addr %s453, 8
        %s455 = scalar_lea.vmem %s0, %s454
      $region60: #{gpt_forward.5} parent=55 // pred_fallthru
        _
      // Predicated region
      $region61: #{gpt_forward.5} parent=55 // pred_check
        %p456 = pneg %p89
      $region62: #{gpt_forward.5} parent=55 // pred_check_branch
        %458 = sbr.rel (%p456) target = $region64
      $region63: #{gpt_forward.5} parent=55 // pred_region
        %p459 = scmp.lt.s32.totalorder %s27, 1
        %s460 = scalar_select %p459, %s27, 1
        %p461 = scmp.lt.s32.totalorder %s28, 0
        %s462 = scalar_select %p461, %s28, 0
        %s463 = sadd.s32 %s462, %s460
        %s464 = smul.addr %s463, 4
        %s465 = scalar_lea.vmem %s1, %s464
      $region64: #{gpt_forward.5} parent=55 // pred_fallthru
        _
      // Predicated region
      $region65: #{gpt_forward.5} parent=55 // pred_check
        %p466 = pneg %p121
      $region66: #{gpt_forward.5} parent=55 // pred_check_branch
        %468 = sbr.rel (%p466) target = $region68
      $region67: #{gpt_forward.5} parent=55 // pred_region
        %p469 = scmp.lt.s32.totalorder %s29, %s28
        %s470 = scalar_select %p469, %s29, %s28
        %p471 = scmp.lt.s32.totalorder %s27, 1
        %s472 = scalar_select %p471, %s27, 1
        %p473 = scmp.lt.s32.totalorder %s470, 0
        %s474 = scalar_select %p473, %s470, 0
        %s475 = sadd.s32 %s474, %s472
        %s476 = smul.addr %s475, 4
        %s477 = scalar_lea.vmem %s2, %s476
        %p478 = scmp.lt.s32.totalorder %s29, %s28
        %s479 = scalar_select %p478, %s29, %s28
      $region68: #{gpt_forward.5} parent=55 // pred_fallthru
        _
      // Predicated region
      $region69: #{gpt_forward.5} parent=55 // pred_check
        %p480 = pneg %p153
      $region70: #{gpt_forward.5} parent=55 // pred_check_branch
        %482 = sbr.rel (%p480) target = $region72
      $region71: #{gpt_forward.5} parent=55 // pred_region
        %p483 = scmp.lt.s32.totalorder %s29, %s28
        %s484 = scalar_select %p483, %s29, %s28
        %p485 = scmp.lt.s32.totalorder %s27, 1
        %s486 = scalar_select %p485, %s27, 1
        %p487 = scmp.lt.s32.totalorder %s484, 0
        %s488 = scalar_select %p487, %s484, 0
        %s489 = sadd.s32 %s488, %s486
        %s490 = smul.addr %s489, 4
        %s491 = scalar_lea.vmem %s3, %s490
        %p492 = scmp.lt.s32.totalorder %s29, %s28
        %s493 = scalar_select %p492, %s29, %s28
      $region72: #{gpt_forward.5} parent=55 // pred_fallthru
        _
    $region56: #{gpt_forward.5} parent=5 // pred_fallthru
      _
    %p494 = scmp.le.s32.totalorder 1, %s20
    %p495 = scmp.lt.s32.totalorder %s20, 3
    %p496 = pnand %p494, %p495
    %p497 = pneg %p496
    // Predicated region
    $region73: #{gpt_forward.5} parent=5 // pred_check
      _
    $region74: #{gpt_forward.5} parent=5 // pred_check_branch
      %499 = sbr.rel (%p496) target = $region76
    $region75: #{gpt_forward.5} parent=5 // pred_region
      %s500 = ssub.s32 %s20, 1
      %p501 = scmp.lt.s32.totalorder %s30, 1
      %s502 = scalar_select %p501, %s30, 1
      %p503 = scmp.lt.s32.totalorder %s31, 0
      %s504 = scalar_select %p503, %s31, 0
      %s505 = sadd.s32 %s504, %s502
      %s506 = smul.addr %s505, 8
      %s507 = scalar_lea.vmem %s0, %s506
      %p508 = pneg %p67
      %p509 = pneg %p64
      %p510 = scmp.lt.s32.totalorder %s30, 1
      %s511 = scalar_select %p510, %s30, 1
      %p512 = scmp.lt.s32.totalorder %s31, 0
      %s513 = scalar_select %p512, %s31, 0
      %s514 = sadd.s32 %s513, %s511
      %s515 = smul.addr %s514, 4
      %s516 = scalar_lea.vmem %s1, %s515
      %p517 = pneg %p95
      %p518 = pneg %p92
      %p519 = scmp.lt.s32.totalorder %s32, %s31
      %s520 = scalar_select %p519, %s32, %s31
      %p521 = scmp.lt.s32.totalorder %s30, 1
      %s522 = scalar_select %p521, %s30, 1
      %p523 = scmp.lt.s32.totalorder %s520, 0
      %s524 = scalar_select %p523, %s520, 0
      %s525 = sadd.s32 %s524, %s522
      %s526 = smul.addr %s525, 4
      %s527 = scalar_lea.vmem %s2, %s526
      %p528 = pneg %p127
      %p529 = pneg %p124
      %p530 = scmp.lt.s32.totalorder %s32, %s31
      %s531 = scalar_select %p530, %s32, %s31
      %p532 = scmp.lt.s32.totalorder %s30, 1
      %s533 = scalar_select %p532, %s30, 1
      %p534 = scmp.lt.s32.totalorder %s531, 0
      %s535 = scalar_select %p534, %s531, 0
      %s536 = sadd.s32 %s535, %s533
      %s537 = smul.addr %s536, 4
      %s538 = scalar_lea.vmem %s3, %s537
      %p539 = pneg %p159
      %p540 = pneg %p156
      %p541 = pneg %p180
      %p542 = pneg %p177
      %p543 = pneg %p201
      %p544 = pneg %p198
      %p545 = pneg %p222
      %p546 = pneg %p219
      %p547 = pneg %p243
      %p548 = pneg %p240
      %p549 = pneg %p264
      %p550 = pneg %p261
      %p551 = pneg %p285
      %p552 = pneg %p282
      %p553 = pneg %p306
      %p554 = pneg %p303
      %p555 = pneg %p327
      %p556 = pneg %p324
      %p557 = pneg %p348
      %p558 = pneg %p345
      %p559 = pneg %p369
      %p560 = pneg %p366
      %p561 = pneg %p397
      %p562 = pneg %p394
      %p563 = scmp.lt.s32.totalorder %s30, 1
      %s564 = scalar_select %p563, %s30, 1
      %p565 = scmp.lt.s32.totalorder %s31, 0
      %s566 = scalar_select %p565, %s31, 0
      %s567 = sadd.s32 %s566, %s564
      %s568 = smul.addr %s567, 8
      %s569 = scalar_lea.vmem %s14, %s568
      %p570 = scmp.lt.s32.totalorder %s30, 1
      %s571 = scalar_select %p570, %s30, 1
      %p572 = scmp.lt.s32.totalorder %s31, 0
      %s573 = scalar_select %p572, %s31, 0
      %s574 = sadd.s32 %s573, %s571
      %s575 = smul.addr %s574, 8
      %s576 = scalar_lea.vmem %s0, %s575
      %p577 = scmp.lt.s32.totalorder %s30, 1
      %s578 = scalar_select %p577, %s30, 1
      %p579 = scmp.lt.s32.totalorder %s31, 0
      %s580 = scalar_select %p579, %s31, 0
      %s581 = sadd.s32 %s580, %s578
      %s582 = smul.addr %s581, 4
      %s583 = scalar_lea.vmem %s1, %s582
      %p584 = scmp.lt.s32.totalorder %s32, %s31
      %s585 = scalar_select %p584, %s32, %s31
      %p586 = scmp.lt.s32.totalorder %s30, 1
      %s587 = scalar_select %p586, %s30, 1
      %p588 = scmp.lt.s32.totalorder %s585, 0
      %s589 = scalar_select %p588, %s585, 0
      %s590 = sadd.s32 %s589, %s587
      %s591 = smul.addr %s590, 4
      %s592 = scalar_lea.vmem %s2, %s591
      %p593 = scmp.lt.s32.totalorder %s32, %s31
      %s594 = scalar_select %p593, %s32, %s31
      %p595 = scmp.lt.s32.totalorder %s32, %s31
      %s596 = scalar_select %p595, %s32, %s31
      %p597 = scmp.lt.s32.totalorder %s30, 1
      %s598 = scalar_select %p597, %s30, 1
      %p599 = scmp.lt.s32.totalorder %s596, 0
      %s600 = scalar_select %p599, %s596, 0
      %s601 = sadd.s32 %s600, %s598
      %s602 = smul.addr %s601, 4
      %s603 = scalar_lea.vmem %s3, %s602
      %p604 = scmp.lt.s32.totalorder %s32, %s31
      %s605 = scalar_select %p604, %s32, %s31
      %p606 = scmp.lt.s32.totalorder %s30, 1
      %s607 = scalar_select %p606, %s30, 1
      %p608 = scmp.lt.s32.totalorder %s31, 0
      %s609 = scalar_select %p608, %s31, 0
      %s610 = sadd.s32 %s609, %s607
      %s611 = smul.addr %s610, 8
      %s612 = scalar_lea.vmem %s14, %s611
      %p614 = scmp.eq.s32.totalorder %s32, 0
      // Predicated region
      $region77: #{gpt_forward.5} parent=75 // pred_check
        %p615 = pneg %p614
      $region78: #{gpt_forward.5} parent=75 // pred_check_branch
        %617 = sbr.rel (%p615) target = $region80
      $region79: #{gpt_forward.5} parent=75 // pred_region
        %v618 = vld [vmem:[%s583] sm:$0xf]
        %620 = vrot.lane.b32.xlu0 %v618, 120
        %v621 = vpop.permute.xlu0 %620
        %623 = vrot.lane.b32.xlu0 %v618, 112
        %v624 = vpop.permute.xlu0 %623
        %626 = vrot.lane.b32.xlu0 %v618, 104
        %v627 = vpop.permute.xlu0 %626
        %vm629 = vcmask 60416
        %630 = vst.msk [vmem:[#allocation2] sm:$0xf] %vm629, %v618
        %631 = vst.msk [vmem:[#allocation2 + $0x4] sm:$0xf] %vm629, %v621
        %632 = vst.msk [vmem:[#allocation2 + $0x8] sm:$0xf] %vm629, %v624
        %633 = vst.msk [vmem:[#allocation2 + $0xc] sm:$0xf] %vm629, %v627
        %vm634 = vcmask 7168
        %635 = vst.msk [vmem:[#allocation3] sm:$0xff] %vm634, -1e+30
        %636 = vst.msk [vmem:[#allocation3 + $0x8] sm:$0xff] %vm634, -1e+30
        %637 = vst.msk [vmem:[#allocation3 + $0x10] sm:$0xff] %vm634, -1e+30
        %638 = vst.msk [vmem:[#allocation3 + $0x18] sm:$0xff] %vm634, -1e+30
        %639 = vst.msk [vmem:[#allocation4] sm:$0xff] %vm634, 0.0
        %640 = vst.msk [vmem:[#allocation4 + $0x8] sm:$0xff] %vm634, 0.0
        %641 = vst.msk [vmem:[#allocation4 + $0x10] sm:$0xff] %vm634, 0.0
        %642 = vst.msk [vmem:[#allocation4 + $0x18] sm:$0xff] %vm634, 0.0
        %vm643 = vcmask 64512
        %644 = vst.msk [vmem:[#allocation5] sm:$0xff] %vm643, 0.0
        %645 = vst.msk [vmem:[#allocation5 + $0x8] sm:$0xff] %vm643, 0.0
        %646 = vst.msk [vmem:[#allocation5 + $0x10] sm:$0xff] %vm643, 0.0
        %647 = vst.msk [vmem:[#allocation5 + $0x18] sm:$0xff] %vm643, 0.0
      $region80: #{gpt_forward.5} parent=75 // pred_fallthru
        _
      %s648 = smul.u32 %s32, 8
      %s649 = smul.u32 %s31, 8
      %s650 = sadd.s32 %s649, 7
      %p651 = scmp.le.s32.totalorder %s648, %s650
      // Predicated region
      $region81: #{gpt_forward.5} parent=75 // pred_check
        %p652 = pneg %p651
      $region82: #{gpt_forward.5} parent=75 // pred_check_branch
        %654 = sbr.rel (%p652) target = $region84
      $region83: #{gpt_forward.5} parent=75 // pred_region
        %v655 = vld [vmem:[%s592] sm:$0xf]
        %657 = vrot.lane.b32.xlu0 %v655, 120
        %v658 = vpop.permute.xlu0 %657
        %659 = vrot.lane.b32.xlu0 %v655, 112
        %v660 = vpop.permute.xlu0 %659
        %661 = vrot.lane.b32.xlu0 %v655, 104
        %v662 = vpop.permute.xlu0 %661
        %v663 = vld [vmem:[%s603] sm:$0xf]
        %665 = vrot.lane.b32.xlu0 %v663, 120
        %v666 = vpop.permute.xlu0 %665
        %667 = vrot.lane.b32.xlu0 %v663, 112
        %v668 = vpop.permute.xlu0 %667
        %669 = vrot.lane.b32.xlu0 %v663, 104
        %v670 = vpop.permute.xlu0 %669
        %v671 = vld [vmem:[#allocation2] sm:$0xf]
        %v672 = vld [vmem:[#allocation2 + $0x4] sm:$0xf]
        %v673 = vld [vmem:[#allocation2 + $0x8] sm:$0xf]
        %v674 = vld [vmem:[#allocation2 + $0xc] sm:$0xf]
        %vm675 = vcmask 64512
        %v677 = vsel %vm675, %v671, 0
        %v680 = vsel %vm675, %v655, 0
        %682 = vmatprep.subr.bf16.mxu0 0
        %683 = vmatpush1.bf16.xpose.msra.mxu0 0
        %684 = vmatprep.subr.bf16.mxu0 0
        %685 = vmatpush1.bf16.xpose.msra.mxu0 0
        %686 = vmatprep.subr.bf16.mxu0 0
        %687 = vmatpush1.bf16.xpose.msra.mxu0 0
        %688 = vmatprep.subr.bf16.mxu0 0
        %689 = vmatpush1.bf16.xpose.msra.mxu0 0
        %690 = vmatprep.subr.bf16.mxu0 0
        %691 = vmatpush1.bf16.xpose.msra.mxu0 0
        %692 = vmatprep.subr.bf16.mxu0 0
        %693 = vmatpush1.bf16.xpose.msra.mxu0 0
        %694 = vmatprep.subr.bf16.mxu0 0
        %695 = vmatpush1.bf16.xpose.msra.mxu0 0
        %696 = vmatprep.subr.bf16.mxu0 0
        %697 = vmatpush1.bf16.xpose.msra.mxu0 %v680
        %698 = vmatprep.subr.bf16.mxu0 0
        %699 = vmatpush2.bf16.xpose.msra.mxu0 0
        %700 = vmatprep.subr.bf16.mxu0 0
        %701 = vmatpush2.bf16.xpose.msra.mxu0 0
        %702 = vmatprep.subr.bf16.mxu0 0
        %703 = vmatpush2.bf16.xpose.msra.mxu0 0
        %704 = vmatprep.subr.bf16.mxu0 0
        %705 = vmatpush2.bf16.xpose.msra.mxu0 0
        %706 = vmatprep.subr.bf16.mxu0 0
        %707 = vmatpush2.bf16.xpose.msra.mxu0 0
        %708 = vmatprep.subr.bf16.mxu0 0
        %709 = vmatpush2.bf16.xpose.msra.mxu0 0
        %710 = vmatprep.subr.bf16.mxu0 0
        %711 = vmatpush2.bf16.xpose.msra.mxu0 0
        %712 = vmatprep.subr.bf16.mxu0 0
        %713 = vmatpush2.bf16.xpose.msra.mxu0 0
        %714 = vmatprep.mubr.bf16.mxu0 0
        %715 = vmatmul.mubr.bf16.gmra.mxu0 %v677
        %v716 = vpop.f32.mrf.mxu0
        %v717 = vadd.f32 0.0, %v716
        %v718 = vpop.f32.mrf.mxu0
        %v719 = vpop.f32.mrf.mxu0
        %v720 = vpop.f32.mrf.mxu0
        %721 = vdwg.mxu0
        %v723 = vsel %vm675, %v672, 0
        %v726 = vsel %vm675, %v658, 0
        %728 = vmatprep.subr.bf16.mxu0 0
        %729 = vmatpush1.bf16.xpose.msra.mxu0 0
        %730 = vmatprep.subr.bf16.mxu0 0
        %731 = vmatpush1.bf16.xpose.msra.mxu0 0
        %732 = vmatprep.subr.bf16.mxu0 0
        %733 = vmatpush1.bf16.xpose.msra.mxu0 0
        %734 = vmatprep.subr.bf16.mxu0 0
        %735 = vmatpush1.bf16.xpose.msra.mxu0 0
        %736 = vmatprep.subr.bf16.mxu0 0
        %737 = vmatpush1.bf16.xpose.msra.mxu0 0
        %738 = vmatprep.subr.bf16.mxu0 0
        %739 = vmatpush1.bf16.xpose.msra.mxu0 0
        %740 = vmatprep.subr.bf16.mxu0 0
        %741 = vmatpush1.bf16.xpose.msra.mxu0 0
        %742 = vmatprep.subr.bf16.mxu0 0
        %743 = vmatpush1.bf16.xpose.msra.mxu0 %v726
        %744 = vmatprep.subr.bf16.mxu0 0
        %745 = vmatpush2.bf16.xpose.msra.mxu0 0
        %746 = vmatprep.subr.bf16.mxu0 0
        %747 = vmatpush2.bf16.xpose.msra.mxu0 0
        %748 = vmatprep.subr.bf16.mxu0 0
        %749 = vmatpush2.bf16.xpose.msra.mxu0 0
        %750 = vmatprep.subr.bf16.mxu0 0
        %751 = vmatpush2.bf16.xpose.msra.mxu0 0
        %752 = vmatprep.subr.bf16.mxu0 0
        %753 = vmatpush2.bf16.xpose.msra.mxu0 0
        %754 = vmatprep.subr.bf16.mxu0 0
        %755 = vmatpush2.bf16.xpose.msra.mxu0 0
        %756 = vmatprep.subr.bf16.mxu0 0
        %757 = vmatpush2.bf16.xpose.msra.mxu0 0
        %758 = vmatprep.subr.bf16.mxu0 0
        %759 = vmatpush2.bf16.xpose.msra.mxu0 0
        %760 = vmatprep.mubr.bf16.mxu0 0
        %761 = vmatmul.mubr.bf16.gmra.mxu0 %v723
        %v762 = vpop.f32.mrf.mxu0
        %v763 = vadd.f32 0.0, %v762
        %v764 = vpop.f32.mrf.mxu0
        %v765 = vpop.f32.mrf.mxu0
        %v766 = vpop.f32.mrf.mxu0
        %767 = vdwg.mxu0
        %v769 = vsel %vm675, %v673, 0
        %v772 = vsel %vm675, %v660, 0
        %774 = vmatprep.subr.bf16.mxu0 0
        %775 = vmatpush1.bf16.xpose.msra.mxu0 0
        %776 = vmatprep.subr.bf16.mxu0 0
        %777 = vmatpush1.bf16.xpose.msra.mxu0 0
        %778 = vmatprep.subr.bf16.mxu0 0
        %779 = vmatpush1.bf16.xpose.msra.mxu0 0
        %780 = vmatprep.subr.bf16.mxu0 0
        %781 = vmatpush1.bf16.xpose.msra.mxu0 0
        %782 = vmatprep.subr.bf16.mxu0 0
        %783 = vmatpush1.bf16.xpose.msra.mxu0 0
        %784 = vmatprep.subr.bf16.mxu0 0
        %785 = vmatpush1.bf16.xpose.msra.mxu0 0
        %786 = vmatprep.subr.bf16.mxu0 0
        %787 = vmatpush1.bf16.xpose.msra.mxu0 0
        %788 = vmatprep.subr.bf16.mxu0 0
        %789 = vmatpush1.bf16.xpose.msra.mxu0 %v772
        %790 = vmatprep.subr.bf16.mxu0 0
        %791 = vmatpush2.bf16.xpose.msra.mxu0 0
        %792 = vmatprep.subr.bf16.mxu0 0
        %793 = vmatpush2.bf16.xpose.msra.mxu0 0
        %794 = vmatprep.subr.bf16.mxu0 0
        %795 = vmatpush2.bf16.xpose.msra.mxu0 0
        %796 = vmatprep.subr.bf16.mxu0 0
        %797 = vmatpush2.bf16.xpose.msra.mxu0 0
        %798 = vmatprep.subr.bf16.mxu0 0
        %799 = vmatpush2.bf16.xpose.msra.mxu0 0
        %800 = vmatprep.subr.bf16.mxu0 0
        %801 = vmatpush2.bf16.xpose.msra.mxu0 0
        %802 = vmatprep.subr.bf16.mxu0 0
        %803 = vmatpush2.bf16.xpose.msra.mxu0 0
        %804 = vmatprep.subr.bf16.mxu0 0
        %805 = vmatpush2.bf16.xpose.msra.mxu0 0
        %806 = vmatprep.mubr.bf16.mxu0 0
        %807 = vmatmul.mubr.bf16.gmra.mxu0 %v769
        %v808 = vpop.f32.mrf.mxu0
        %v809 = vadd.f32 0.0, %v808
        %v810 = vpop.f32.mrf.mxu0
        %v811 = vpop.f32.mrf.mxu0
        %v812 = vpop.f32.mrf.mxu0
        %813 = vdwg.mxu0
        %v815 = vsel %vm675, %v674, 0
        %v818 = vsel %vm675, %v662, 0
        %820 = vmatprep.subr.bf16.mxu0 0
        %821 = vmatpush1.bf16.xpose.msra.mxu0 0
        %822 = vmatprep.subr.bf16.mxu0 0
        %823 = vmatpush1.bf16.xpose.msra.mxu0 0
        %824 = vmatprep.subr.bf16.mxu0 0
        %825 = vmatpush1.bf16.xpose.msra.mxu0 0
        %826 = vmatprep.subr.bf16.mxu0 0
        %827 = vmatpush1.bf16.xpose.msra.mxu0 0
        %828 = vmatprep.subr.bf16.mxu0 0
        %829 = vmatpush1.bf16.xpose.msra.mxu0 0
        %830 = vmatprep.subr.bf16.mxu0 0
        %831 = vmatpush1.bf16.xpose.msra.mxu0 0
        %832 = vmatprep.subr.bf16.mxu0 0
        %833 = vmatpush1.bf16.xpose.msra.mxu0 0
        %834 = vmatprep.subr.bf16.mxu0 0
        %835 = vmatpush1.bf16.xpose.msra.mxu0 %v818
        %836 = vmatprep.subr.bf16.mxu0 0
        %837 = vmatpush2.bf16.xpose.msra.mxu0 0
        %838 = vmatprep.subr.bf16.mxu0 0
        %839 = vmatpush2.bf16.xpose.msra.mxu0 0
        %840 = vmatprep.subr.bf16.mxu0 0
        %841 = vmatpush2.bf16.xpose.msra.mxu0 0
        %842 = vmatprep.subr.bf16.mxu0 0
        %843 = vmatpush2.bf16.xpose.msra.mxu0 0
        %844 = vmatprep.subr.bf16.mxu0 0
        %845 = vmatpush2.bf16.xpose.msra.mxu0 0
        %846 = vmatprep.subr.bf16.mxu0 0
        %847 = vmatpush2.bf16.xpose.msra.mxu0 0
        %848 = vmatprep.subr.bf16.mxu0 0
        %849 = vmatpush2.bf16.xpose.msra.mxu0 0
        %850 = vmatprep.subr.bf16.mxu0 0
        %851 = vmatpush2.bf16.xpose.msra.mxu0 0
        %852 = vmatprep.mubr.bf16.mxu0 0
        %853 = vmatmul.mubr.bf16.gmra.mxu0 %v815
        %v854 = vpop.f32.mrf.mxu0
        %v855 = vadd.f32 0.0, %v854
        %v856 = vpop.f32.mrf.mxu0
        %v857 = vpop.f32.mrf.mxu0
        %v858 = vpop.f32.mrf.mxu0
        %859 = vdwg.mxu0
        %v860 = vmul.f32 %v717, 0.35355338
        %v861 = vmul.f32 %v763, 0.35355338
        %v862 = vmul.f32 %v809, 0.35355338
        %v863 = vmul.f32 %v855, 0.35355338
        %v864 = vlaneseq
        %v865 = vshrl.u32 %v864, 7
        %v866 = vstv %s649
        %v867 = vadd.s32 %v866, %v865
        %v868 = vlaneseq
        %v869 = vand.u32 %v868, 127
        %v870 = vstv %s648
        %v871 = vadd.s32 %v870, %v869
        %vm872 = vcmp.le.s32.totalorder %v871, %v867
        %v873 = vsel %vm872, 1, 0
        %vm874 = vcmp.eq.s32.totalorder %v873, 1
        %v875 = vsel %vm874, %v860, -1e+30
        %v876 = vsel %vm874, %v861, -1e+30
        %v877 = vsel %vm874, %v862, -1e+30
        %v878 = vsel %vm874, %v863, -1e+30
        %v879 = vld [vmem:[#allocation3] sm:$0xff]
        %v880 = vld [vmem:[#allocation3 + $0x8] sm:$0xff]
        %v881 = vld [vmem:[#allocation3 + $0x10] sm:$0xff]
        %v882 = vld [vmem:[#allocation3 + $0x18] sm:$0xff]
        %v883 = vsel %vm675, %v875, -inf
        %884 = vmax.xlane.f32.xlu0 %v883
        %v885 = vpop.xlane.xlu0 %884
        %v886 = vsel %vm675, %v876, -inf
        %887 = vmax.xlane.f32.xlu0 %v886
        %v888 = vpop.xlane.xlu0 %887
        %v889 = vsel %vm675, %v877, -inf
        %890 = vmax.xlane.f32.xlu0 %v889
        %v891 = vpop.xlane.xlu0 %890
        %v892 = vsel %vm675, %v878, -inf
        %893 = vmax.xlane.f32.xlu0 %v892
        %v894 = vpop.xlane.xlu0 %893
        %v895 = vmax.f32 %v879, %v885
        %v896 = vmax.f32 %v880, %v888
        %v897 = vmax.f32 %v881, %v891
        %v898 = vmax.f32 %v882, %v894
        %v899 = vsub.f32 %v879, %v895
        %v900 = vsub.f32 %v880, %v896
        %v901 = vsub.f32 %v881, %v897
        %v902 = vsub.f32 %v882, %v898
        %v903 = vmul.f32 %v899, 1.442695
        %v904 = vpow.pop %v903
        %v905 = vmul.f32 %v900, 1.442695
        %v906 = vpow.pop %v905
        %v907 = vmul.f32 %v901, 1.442695
        %v908 = vpow.pop %v907
        %v909 = vmul.f32 %v902, 1.442695
        %v910 = vpow.pop %v909
        %912 = vset.pattern.permute.xlu0 0
        %913 = vperm.xlu0 %912, %v895
        %v914 = vpop.permute.xlu0 %913
        %917 = vset.pattern.permute.xlu0 0
        %918 = vperm.xlu0 %917, %v896
        %v919 = vpop.permute.xlu0 %918
        %922 = vset.pattern.permute.xlu0 0
        %923 = vperm.xlu0 %922, %v897
        %v924 = vpop.permute.xlu0 %923
        %927 = vset.pattern.permute.xlu0 0
        %928 = vperm.xlu0 %927, %v898
        %v929 = vpop.permute.xlu0 %928
        %v931 = vsub.f32 %v875, %v914
        %v932 = vsub.f32 %v876, %v919
        %v933 = vsub.f32 %v877, %v924
        %v934 = vsub.f32 %v878, %v929
        %v935 = vmul.f32 %v931, 1.442695
        %v936 = vpow.pop %v935
        %v937 = vmul.f32 %v932, 1.442695
        %v938 = vpow.pop %v937
        %v939 = vmul.f32 %v933, 1.442695
        %v940 = vpow.pop %v939
        %v941 = vmul.f32 %v934, 1.442695
        %v942 = vpow.pop %v941
        %v943 = vld [vmem:[#allocation4] sm:$0xff]
        %v944 = vld [vmem:[#allocation4 + $0x8] sm:$0xff]
        %v945 = vld [vmem:[#allocation4 + $0x10] sm:$0xff]
        %v946 = vld [vmem:[#allocation4 + $0x18] sm:$0xff]
        %v947 = vmul.f32 %v904, %v943
        %v948 = vmul.f32 %v906, %v944
        %v949 = vmul.f32 %v908, %v945
        %v950 = vmul.f32 %v910, %v946
        %v951 = vsel %vm675, %v936, 0.0
        %952 = vadd.xlane.f32.xlu0 %v951
        %v953 = vpop.xlane.xlu0 %952
        %v954 = vsel %vm675, %v938, 0.0
        %955 = vadd.xlane.f32.xlu0 %v954
        %v956 = vpop.xlane.xlu0 %955
        %v957 = vsel %vm675, %v940, 0.0
        %958 = vadd.xlane.f32.xlu0 %v957
        %v959 = vpop.xlane.xlu0 %958
        %v960 = vsel %vm675, %v942, 0.0
        %961 = vadd.xlane.f32.xlu0 %v960
        %v962 = vpop.xlane.xlu0 %961
        %v963 = vadd.f32 %v947, %v953
        %v964 = vadd.f32 %v948, %v956
        %v965 = vadd.f32 %v949, %v959
        %v966 = vadd.f32 %v950, %v962
        %vm967 = vcmask 7168
        %968 = vst.msk [vmem:[#allocation4] sm:$0xff] %vm967, %v963
        %969 = vst.msk [vmem:[#allocation4 + $0x8] sm:$0xff] %vm967, %v964
        %970 = vst.msk [vmem:[#allocation4 + $0x10] sm:$0xff] %vm967, %v965
        %971 = vst.msk [vmem:[#allocation4 + $0x18] sm:$0xff] %vm967, %v966
        %v972 = vld [vmem:[#allocation5] sm:$0xff]
        %v973 = vld [vmem:[#allocation5 + $0x8] sm:$0xff]
        %v974 = vld [vmem:[#allocation5 + $0x10] sm:$0xff]
        %v975 = vld [vmem:[#allocation5 + $0x18] sm:$0xff]
        %977 = vset.pattern.permute.xlu0 0
        %978 = vperm.xlu0 %977, %v904
        %v979 = vpop.permute.xlu0 %978
        %982 = vset.pattern.permute.xlu0 0
        %983 = vperm.xlu0 %982, %v906
        %v984 = vpop.permute.xlu0 %983
        %987 = vset.pattern.permute.xlu0 0
        %988 = vperm.xlu0 %987, %v908
        %v989 = vpop.permute.xlu0 %988
        %992 = vset.pattern.permute.xlu0 0
        %993 = vperm.xlu0 %992, %v910
        %v994 = vpop.permute.xlu0 %993
        %v996 = vmul.f32 %v979, %v972
        %v997 = vmul.f32 %v984, %v973
        %v998 = vmul.f32 %v989, %v974
        %v999 = vmul.f32 %v994, %v975
        %v1000 = vpack.c.bf16 %v936, %v936
        %v1001 = vpack.c.bf16 %v938, %v938
        %v1002 = vpack.c.bf16 %v940, %v940
        %v1003 = vpack.c.bf16 %v942, %v942
        %v1005 = vsel %vm675, %v1000, 0
        %vm1007 = vcmask 1043456
        %v1009 = vsel %vm1007, %v663, 0
        %1011 = vmatprep.subr.bf16.mxu0 0
        %1012 = vmatpush1.bf16.msra.mxu0 0
        %1013 = vmatprep.subr.bf16.mxu0 0
        %1014 = vmatpush1.bf16.msra.mxu0 0
        %1015 = vmatprep.subr.bf16.mxu0 0
        %1016 = vmatpush1.bf16.msra.mxu0 0
        %1017 = vmatprep.subr.bf16.mxu0 0
        %1018 = vmatpush1.bf16.msra.mxu0 0
        %1019 = vmatprep.subr.bf16.mxu0 0
        %1020 = vmatpush1.bf16.msra.mxu0 0
        %1021 = vmatprep.subr.bf16.mxu0 0
        %1022 = vmatpush1.bf16.msra.mxu0 0
        %1023 = vmatprep.subr.bf16.mxu0 0
        %1024 = vmatpush1.bf16.msra.mxu0 0
        %1025 = vmatprep.subr.bf16.mxu0 0
        %1026 = vmatpush1.bf16.msra.mxu0 %v1009
        %1027 = vmatprep.subr.bf16.mxu0 0
        %1028 = vmatpush2.bf16.msra.mxu0 0
        %1029 = vmatprep.subr.bf16.mxu0 0
        %1030 = vmatpush2.bf16.msra.mxu0 0
        %1031 = vmatprep.subr.bf16.mxu0 0
        %1032 = vmatpush2.bf16.msra.mxu0 0
        %1033 = vmatprep.subr.bf16.mxu0 0
        %1034 = vmatpush2.bf16.msra.mxu0 0
        %1035 = vmatprep.subr.bf16.mxu0 0
        %1036 = vmatpush2.bf16.msra.mxu0 0
        %1037 = vmatprep.subr.bf16.mxu0 0
        %1038 = vmatpush2.bf16.msra.mxu0 0
        %1039 = vmatprep.subr.bf16.mxu0 0
        %1040 = vmatpush2.bf16.msra.mxu0 0
        %1041 = vmatprep.subr.bf16.mxu0 0
        %1042 = vmatpush2.bf16.msra.mxu0 0
        %1043 = vmatprep.mubr.bf16.mxu0 0
        %1044 = vmatmul.mubr.bf16.gmra.mxu0 %v1005
        %v1045 = vpop.f32.mrf.mxu0
        %v1046 = vadd.f32 0.0, %v1045
        %v1047 = vpop.f32.mrf.mxu0
        %v1048 = vpop.f32.mrf.mxu0
        %v1049 = vpop.f32.mrf.mxu0
        %1050 = vdwg.mxu0
        %v1052 = vsel %vm675, %v1001, 0
        %v1055 = vsel %vm1007, %v666, 0
        %1057 = vmatprep.subr.bf16.mxu0 0
        %1058 = vmatpush1.bf16.msra.mxu0 0
        %1059 = vmatprep.subr.bf16.mxu0 0
        %1060 = vmatpush1.bf16.msra.mxu0 0
        %1061 = vmatprep.subr.bf16.mxu0 0
        %1062 = vmatpush1.bf16.msra.mxu0 0
        %1063 = vmatprep.subr.bf16.mxu0 0
        %1064 = vmatpush1.bf16.msra.mxu0 0
        %1065 = vmatprep.subr.bf16.mxu0 0
        %1066 = vmatpush1.bf16.msra.mxu0 0
        %1067 = vmatprep.subr.bf16.mxu0 0
        %1068 = vmatpush1.bf16.msra.mxu0 0
        %1069 = vmatprep.subr.bf16.mxu0 0
        %1070 = vmatpush1.bf16.msra.mxu0 0
        %1071 = vmatprep.subr.bf16.mxu0 0
        %1072 = vmatpush1.bf16.msra.mxu0 %v1055
        %1073 = vmatprep.subr.bf16.mxu0 0
        %1074 = vmatpush2.bf16.msra.mxu0 0
        %1075 = vmatprep.subr.bf16.mxu0 0
        %1076 = vmatpush2.bf16.msra.mxu0 0
        %1077 = vmatprep.subr.bf16.mxu0 0
        %1078 = vmatpush2.bf16.msra.mxu0 0
        %1079 = vmatprep.subr.bf16.mxu0 0
        %1080 = vmatpush2.bf16.msra.mxu0 0
        %1081 = vmatprep.subr.bf16.mxu0 0
        %1082 = vmatpush2.bf16.msra.mxu0 0
        %1083 = vmatprep.subr.bf16.mxu0 0
        %1084 = vmatpush2.bf16.msra.mxu0 0
        %1085 = vmatprep.subr.bf16.mxu0 0
        %1086 = vmatpush2.bf16.msra.mxu0 0
        %1087 = vmatprep.subr.bf16.mxu0 0
        %1088 = vmatpush2.bf16.msra.mxu0 0
        %1089 = vmatprep.mubr.bf16.mxu0 0
        %1090 = vmatmul.mubr.bf16.gmra.mxu0 %v1052
        %v1091 = vpop.f32.mrf.mxu0
        %v1092 = vadd.f32 0.0, %v1091
        %v1093 = vpop.f32.mrf.mxu0
        %v1094 = vpop.f32.mrf.mxu0
        %v1095 = vpop.f32.mrf.mxu0
        %1096 = vdwg.mxu0
        %v1098 = vsel %vm675, %v1002, 0
        %v1101 = vsel %vm1007, %v668, 0
        %1103 = vmatprep.subr.bf16.mxu0 0
        %1104 = vmatpush1.bf16.msra.mxu0 0
        %1105 = vmatprep.subr.bf16.mxu0 0
        %1106 = vmatpush1.bf16.msra.mxu0 0
        %1107 = vmatprep.subr.bf16.mxu0 0
        %1108 = vmatpush1.bf16.msra.mxu0 0
        %1109 = vmatprep.subr.bf16.mxu0 0
        %1110 = vmatpush1.bf16.msra.mxu0 0
        %1111 = vmatprep.subr.bf16.mxu0 0
        %1112 = vmatpush1.bf16.msra.mxu0 0
        %1113 = vmatprep.subr.bf16.mxu0 0
        %1114 = vmatpush1.bf16.msra.mxu0 0
        %1115 = vmatprep.subr.bf16.mxu0 0
        %1116 = vmatpush1.bf16.msra.mxu0 0
        %1117 = vmatprep.subr.bf16.mxu0 0
        %1118 = vmatpush1.bf16.msra.mxu0 %v1101
        %1119 = vmatprep.subr.bf16.mxu0 0
        %1120 = vmatpush2.bf16.msra.mxu0 0
        %1121 = vmatprep.subr.bf16.mxu0 0
        %1122 = vmatpush2.bf16.msra.mxu0 0
        %1123 = vmatprep.subr.bf16.mxu0 0
        %1124 = vmatpush2.bf16.msra.mxu0 0
        %1125 = vmatprep.subr.bf16.mxu0 0
        %1126 = vmatpush2.bf16.msra.mxu0 0
        %1127 = vmatprep.subr.bf16.mxu0 0
        %1128 = vmatpush2.bf16.msra.mxu0 0
        %1129 = vmatprep.subr.bf16.mxu0 0
        %1130 = vmatpush2.bf16.msra.mxu0 0
        %1131 = vmatprep.subr.bf16.mxu0 0
        %1132 = vmatpush2.bf16.msra.mxu0 0
        %1133 = vmatprep.subr.bf16.mxu0 0
        %1134 = vmatpush2.bf16.msra.mxu0 0
        %1135 = vmatprep.mubr.bf16.mxu0 0
        %1136 = vmatmul.mubr.bf16.gmra.mxu0 %v1098
        %v1137 = vpop.f32.mrf.mxu0
        %v1138 = vadd.f32 0.0, %v1137
        %v1139 = vpop.f32.mrf.mxu0
        %v1140 = vpop.f32.mrf.mxu0
        %v1141 = vpop.f32.mrf.mxu0
        %1142 = vdwg.mxu0
        %v1144 = vsel %vm675, %v1003, 0
        %v1147 = vsel %vm1007, %v670, 0
        %1149 = vmatprep.subr.bf16.mxu0 0
        %1150 = vmatpush1.bf16.msra.mxu0 0
        %1151 = vmatprep.subr.bf16.mxu0 0
        %1152 = vmatpush1.bf16.msra.mxu0 0
        %1153 = vmatprep.subr.bf16.mxu0 0
        %1154 = vmatpush1.bf16.msra.mxu0 0
        %1155 = vmatprep.subr.bf16.mxu0 0
        %1156 = vmatpush1.bf16.msra.mxu0 0
        %1157 = vmatprep.subr.bf16.mxu0 0
        %1158 = vmatpush1.bf16.msra.mxu0 0
        %1159 = vmatprep.subr.bf16.mxu0 0
        %1160 = vmatpush1.bf16.msra.mxu0 0
        %1161 = vmatprep.subr.bf16.mxu0 0
        %1162 = vmatpush1.bf16.msra.mxu0 0
        %1163 = vmatprep.subr.bf16.mxu0 0
        %1164 = vmatpush1.bf16.msra.mxu0 %v1147
        %1165 = vmatprep.subr.bf16.mxu0 0
        %1166 = vmatpush2.bf16.msra.mxu0 0
        %1167 = vmatprep.subr.bf16.mxu0 0
        %1168 = vmatpush2.bf16.msra.mxu0 0
        %1169 = vmatprep.subr.bf16.mxu0 0
        %1170 = vmatpush2.bf16.msra.mxu0 0
        %1171 = vmatprep.subr.bf16.mxu0 0
        %1172 = vmatpush2.bf16.msra.mxu0 0
        %1173 = vmatprep.subr.bf16.mxu0 0
        %1174 = vmatpush2.bf16.msra.mxu0 0
        %1175 = vmatprep.subr.bf16.mxu0 0
        %1176 = vmatpush2.bf16.msra.mxu0 0
        %1177 = vmatprep.subr.bf16.mxu0 0
        %1178 = vmatpush2.bf16.msra.mxu0 0
        %1179 = vmatprep.subr.bf16.mxu0 0
        %1180 = vmatpush2.bf16.msra.mxu0 0
        %1181 = vmatprep.mubr.bf16.mxu0 0
        %1182 = vmatmul.mubr.bf16.gmra.mxu0 %v1144
        %v1183 = vpop.f32.mrf.mxu0
        %v1184 = vadd.f32 0.0, %v1183
        %v1185 = vpop.f32.mrf.mxu0
        %v1186 = vpop.f32.mrf.mxu0
        %v1187 = vpop.f32.mrf.mxu0
        %1188 = vdwg.mxu0
        %v1189 = vadd.f32 %v996, %v1046
        %v1190 = vadd.f32 %v997, %v1092
        %v1191 = vadd.f32 %v998, %v1138
        %v1192 = vadd.f32 %v999, %v1184
        %1193 = vst.msk [vmem:[#allocation5] sm:$0xff] %vm675, %v1189
        %1194 = vst.msk [vmem:[#allocation5 + $0x8] sm:$0xff] %vm675, %v1190
        %1195 = vst.msk [vmem:[#allocation5 + $0x10] sm:$0xff] %vm675, %v1191
        %1196 = vst.msk [vmem:[#allocation5 + $0x18] sm:$0xff] %vm675, %v1192
        %1197 = vst.msk [vmem:[#allocation3] sm:$0xff] %vm967, %v895
        %1198 = vst.msk [vmem:[#allocation3 + $0x8] sm:$0xff] %vm967, %v896
        %1199 = vst.msk [vmem:[#allocation3 + $0x10] sm:$0xff] %vm967, %v897
        %1200 = vst.msk [vmem:[#allocation3 + $0x18] sm:$0xff] %vm967, %v898
      $region84: #{gpt_forward.5} parent=75 // pred_fallthru
        _
      // Predicated region
      $region85: #{gpt_forward.5} parent=75 // pred_check
        %p1201 = pneg %p614
      $region86: #{gpt_forward.5} parent=75 // pred_check_branch
        %1203 = sbr.rel (%p1201) target = $region88
      $region87: #{gpt_forward.5} parent=75 // pred_region
        %v1204 = vld [vmem:[#allocation5] sm:$0xff]
        %v1205 = vld [vmem:[#allocation5 + $0x8] sm:$0xff]
        %v1206 = vld [vmem:[#allocation5 + $0x10] sm:$0xff]
        %v1207 = vld [vmem:[#allocation5 + $0x18] sm:$0xff]
        %v1208 = vld [vmem:[#allocation4] sm:$0xff]
        %v1209 = vld [vmem:[#allocation4 + $0x8] sm:$0xff]
        %v1210 = vld [vmem:[#allocation4 + $0x10] sm:$0xff]
        %v1211 = vld [vmem:[#allocation4 + $0x18] sm:$0xff]
        %v1212 = vrcp.pop %v1208
        %v1213 = vrcp.pop %v1209
        %v1214 = vrcp.pop %v1210
        %v1215 = vrcp.pop %v1211
        %1217 = vset.pattern.permute.xlu0 0
        %1218 = vperm.xlu0 %1217, %v1212
        %v1219 = vpop.permute.xlu0 %1218
        %1222 = vset.pattern.permute.xlu0 0
        %1223 = vperm.xlu0 %1222, %v1213
        %v1224 = vpop.permute.xlu0 %1223
        %1227 = vset.pattern.permute.xlu0 0
        %1228 = vperm.xlu0 %1227, %v1214
        %v1229 = vpop.permute.xlu0 %1228
        %1232 = vset.pattern.permute.xlu0 0
        %1233 = vperm.xlu0 %1232, %v1215
        %v1234 = vpop.permute.xlu0 %1233
        %v1236 = vmul.f32 %v1204, %v1219
        %v1237 = vmul.f32 %v1205, %v1224
        %v1238 = vmul.f32 %v1206, %v1229
        %v1239 = vmul.f32 %v1207, %v1234
        %1241 = vrot.lane.b32.xlu0 %v1237, 8
        %v1242 = vpop.permute.xlu0 %1241
        %1245 = vrot.lane.b32.xlu0 %v1238, 16
        %v1246 = vpop.permute.xlu0 %1245
        %1249 = vrot.lane.b32.xlu0 %v1239, 24
        %v1250 = vpop.permute.xlu0 %1249
        %vm1252 = vcmask 64512
        %v1253 = vsel %vm1252, %v1236, %v1242
        %vm1254 = vcmask 130048
        %v1255 = vsel %vm1254, %v1253, %v1246
        %vm1256 = vcmask 195584
        %v1257 = vsel %vm1256, %v1255, %v1250
        %v1258 = vpack.c.bf16 %v1257, %v1257
        %v1259 = vld [vmem:[%s6] sm:$0xf]
        %v1260 = vld [vmem:[%s6 + $0x4] sm:$0xf]
        %v1261 = vld [vmem:[%s6 + $0x8] sm:$0xf]
        %v1262 = vld [vmem:[%s6 + $0xc] sm:$0xf]
        %v1263 = vld [vmem:[%s7] sm:$0x1]
        %v1265 = vlaneseq
        %v1266 = vshrl.u32 %v1265, 7
        %v1267 = vsub.s32 0, %v1266
        %v1268 = vrot.slane %v1263, %v1267
        %v1274 = vunpack.c.l.b16 %v1259
        %v1275 = vunpack.c.l.b16 %v1260
        %v1276 = vunpack.c.l.b16 %v1261
        %v1277 = vunpack.c.l.b16 %v1262
        %v1278 = vpack.c.b16 %v1275, %v1274
        %v1279 = vpack.c.b16 %v1277, %v1276
        %vm1282 = vcmask 261120
        %v1284 = vsel %vm1282, %v1258, 0
        %1286 = vmatprep.subr.bf16.mxu0 0
        %1287 = vmatpush1.bf16.msra.mxu0 0
        %1288 = vmatprep.subr.bf16.mxu0 0
        %1289 = vmatpush1.bf16.msra.mxu0 0
        %1290 = vmatprep.subr.bf16.mxu0 0
        %1291 = vmatpush1.bf16.msra.mxu0 0
        %1292 = vmatprep.subr.bf16.mxu0 0
        %1293 = vmatpush1.bf16.msra.mxu0 0
        %1294 = vmatprep.subr.bf16.mxu0 0
        %1295 = vmatpush1.bf16.msra.mxu0 0
        %1296 = vmatprep.subr.bf16.mxu0 0
        %1297 = vmatpush1.bf16.msra.mxu0 0
        %1298 = vmatprep.subr.bf16.mxu0 0
        %1299 = vmatpush1.bf16.msra.mxu0 %v1279
        %1300 = vmatprep.subr.bf16.mxu0 0
        %1301 = vmatpush1.bf16.msra.mxu0 %v1278
        %1302 = vmatprep.subr.bf16.mxu0 0
        %1303 = vmatpush2.bf16.msra.mxu0 0
        %1304 = vmatprep.subr.bf16.mxu0 0
        %1305 = vmatpush2.bf16.msra.mxu0 0
        %1306 = vmatprep.subr.bf16.mxu0 0
        %1307 = vmatpush2.bf16.msra.mxu0 0
        %1308 = vmatprep.subr.bf16.mxu0 0
        %1309 = vmatpush2.bf16.msra.mxu0 0
        %1310 = vmatprep.subr.bf16.mxu0 0
        %1311 = vmatpush2.bf16.msra.mxu0 0
        %1312 = vmatprep.subr.bf16.mxu0 0
        %1313 = vmatpush2.bf16.msra.mxu0 0
        %1314 = vmatprep.subr.bf16.mxu0 0
        %1315 = vmatpush2.bf16.msra.mxu0 0
        %1316 = vmatprep.subr.bf16.mxu0 0
        %1317 = vmatpush2.bf16.msra.mxu0 0
        %1318 = vmatprep.mubr.bf16.mxu0 0
        %1319 = vmatmul.mubr.bf16.gmra.mxu0 %v1284
        %v1320 = vpop.f32.mrf.mxu0
        %v1321 = vadd.f32 %v1268, %v1320
        %v1322 = vpop.f32.mrf.mxu0
        %v1323 = vpop.f32.mrf.mxu0
        %v1324 = vpop.f32.mrf.mxu0
        %1325 = vdwg.mxu0
        %v1326 = vld [vmem:[%s576] sm:$0xff]
        %v1327 = vld [vmem:[%s4] sm:$0x1]
        %v1328 = vld [vmem:[%s5] sm:$0x1]
        %v1329 = vsel %vm1282, %v1326, 0.0
        %1330 = vadd.xlane.f32.xlu0 %v1329
        %v1331 = vpop.xlane.xlu0 %1330
        %v1332 = vrcp.pop 32.0
        %v1333 = vmul.f32 %v1331, %v1332
        %v1334 = vsub.f32 %v1326, %v1333
        %v1335 = vmul.f32 %v1334, %v1334
        %v1336 = vsel %vm1282, %v1335, 0.0
        %1337 = vadd.xlane.f32.xlu0 %v1336
        %v1338 = vpop.xlane.xlu0 %1337
        %v1339 = vmul.f32 %v1338, %v1332
        %v1340 = vadd.f32 %v1339, 1e-05
        %v1341 = vrsqrt.pop %v1340
        %v1342 = vmul.f32 %v1334, %v1341
        %v1344 = vlaneseq
        %v1345 = vshrl.u32 %v1344, 7
        %v1346 = vsub.s32 0, %v1345
        %v1347 = vrot.slane %v1327, %v1346
        %v1349 = vmul.f32 %v1342, %v1347
        %v1351 = vlaneseq
        %v1352 = vshrl.u32 %v1351, 7
        %v1353 = vsub.s32 0, %v1352
        %v1354 = vrot.slane %v1328, %v1353
        %v1356 = vadd.f32 %v1349, %v1354
        %v1357 = vadd.f32 %v1356, %v1321
        %v1358 = vld [vmem:[%s8] sm:$0x1]
        %v1359 = vld [vmem:[%s9] sm:$0x1]
        %v1360 = vsel %vm1282, %v1357, 0.0
        %1361 = vadd.xlane.f32.xlu0 %v1360
        %v1362 = vpop.xlane.xlu0 %1361
        %v1363 = vmul.f32 %v1362, %v1332
        %v1364 = vsub.f32 %v1357, %v1363
        %v1365 = vmul.f32 %v1364, %v1364
        %v1366 = vsel %vm1282, %v1365, 0.0
        %1367 = vadd.xlane.f32.xlu0 %v1366
        %v1368 = vpop.xlane.xlu0 %1367
        %v1369 = vmul.f32 %v1368, %v1332
        %v1370 = vadd.f32 %v1369, 1e-05
        %v1371 = vrsqrt.pop %v1370
        %v1372 = vmul.f32 %v1364, %v1371
        %v1374 = vlaneseq
        %v1375 = vshrl.u32 %v1374, 7
        %v1376 = vsub.s32 0, %v1375
        %v1377 = vrot.slane %v1358, %v1376
        %v1379 = vmul.f32 %v1372, %v1377
        %v1381 = vlaneseq
        %v1382 = vshrl.u32 %v1381, 7
        %v1383 = vsub.s32 0, %v1382
        %v1384 = vrot.slane %v1359, %v1383
        %v1386 = vadd.f32 %v1379, %v1384
        %v1387 = vpack.c.bf16 %v1386, %v1386
        %v1388 = vld [vmem:[%s10] sm:$0xf]
        %v1389 = vld [vmem:[%s10 + $0x4] sm:$0xf]
        %v1390 = vld [vmem:[%s10 + $0x8] sm:$0xf]
        %v1391 = vld [vmem:[%s10 + $0xc] sm:$0xf]
        %v1392 = vld [vmem:[%s11] sm:$0x1]
        %v1394 = vlaneseq
        %v1395 = vshrl.u32 %v1394, 7
        %v1396 = vsub.s32 0, %v1395
        %v1397 = vrot.slane %v1392, %v1396
        %v1403 = vunpack.c.l.b16 %v1388
        %v1404 = vunpack.c.l.b16 %v1389
        %v1405 = vunpack.c.l.b16 %v1390
        %v1406 = vunpack.c.l.b16 %v1391
        %v1407 = vpack.c.b16 %v1404, %v1403
        %v1408 = vpack.c.b16 %v1406, %v1405
        %v1412 = vsel %vm1282, %v1387, 0
        %1414 = vmatprep.subr.bf16.mxu0 0
        %1415 = vmatpush1.bf16.msra.mxu0 0
        %1416 = vmatprep.subr.bf16.mxu0 0
        %1417 = vmatpush1.bf16.msra.mxu0 0
        %1418 = vmatprep.subr.bf16.mxu0 0
        %1419 = vmatpush1.bf16.msra.mxu0 0
        %1420 = vmatprep.subr.bf16.mxu0 0
        %1421 = vmatpush1.bf16.msra.mxu0 0
        %1422 = vmatprep.subr.bf16.mxu0 0
        %1423 = vmatpush1.bf16.msra.mxu0 0
        %1424 = vmatprep.subr.bf16.mxu0 0
        %1425 = vmatpush1.bf16.msra.mxu0 0
        %1426 = vmatprep.subr.bf16.mxu0 0
        %1427 = vmatpush1.bf16.msra.mxu0 %v1408
        %1428 = vmatprep.subr.bf16.mxu0 0
        %1429 = vmatpush1.bf16.msra.mxu0 %v1407
        %1430 = vmatprep.subr.bf16.mxu0 0
        %1431 = vmatpush2.bf16.msra.mxu0 0
        %1432 = vmatprep.subr.bf16.mxu0 0
        %1433 = vmatpush2.bf16.msra.mxu0 0
        %1434 = vmatprep.subr.bf16.mxu0 0
        %1435 = vmatpush2.bf16.msra.mxu0 0
        %1436 = vmatprep.subr.bf16.mxu0 0
        %1437 = vmatpush2.bf16.msra.mxu0 0
        %1438 = vmatprep.subr.bf16.mxu0 0
        %1439 = vmatpush2.bf16.msra.mxu0 0
        %1440 = vmatprep.subr.bf16.mxu0 0
        %1441 = vmatpush2.bf16.msra.mxu0 0
        %1442 = vmatprep.subr.bf16.mxu0 0
        %1443 = vmatpush2.bf16.msra.mxu0 0
        %1444 = vmatprep.subr.bf16.mxu0 0
        %1445 = vmatpush2.bf16.msra.mxu0 0
        %1446 = vmatprep.mubr.bf16.mxu0 0
        %1447 = vmatmul.mubr.bf16.gmra.mxu0 %v1412
        %v1448 = vpop.f32.mrf.mxu0
        %v1449 = vadd.f32 %v1397, %v1448
        %v1450 = vpop.f32.mrf.mxu0
        %v1451 = vpop.f32.mrf.mxu0
        %v1452 = vpop.f32.mrf.mxu0
        %1453 = vdwg.mxu0
        %v1454 = vmul.f32 %v1449, 0.5
        %v1455 = vmul.f32 %v1449, 0.70710677
        %v1456 = verf.f32.pop %v1455
        %v1457 = vadd.f32 %v1456, 1.0
        %v1458 = vmul.f32 %v1454, %v1457
        %v1459 = vpack.c.bf16 %v1458, %v1458
        %v1460 = vld [vmem:[%s12] sm:$0xf]
        %v1461 = vld [vmem:[%s12 + $0x4] sm:$0xf]
        %v1462 = vld [vmem:[%s12 + $0x8] sm:$0xf]
        %v1463 = vld [vmem:[%s12 + $0xc] sm:$0xf]
        %v1464 = vld [vmem:[%s12 + $0x10] sm:$0xf]
        %v1465 = vld [vmem:[%s12 + $0x14] sm:$0xf]
        %v1466 = vld [vmem:[%s12 + $0x18] sm:$0xf]
        %v1467 = vld [vmem:[%s12 + $0x1c] sm:$0xf]
        %v1468 = vld [vmem:[%s12 + $0x20] sm:$0xf]
        %v1469 = vld [vmem:[%s12 + $0x24] sm:$0xf]
        %v1470 = vld [vmem:[%s12 + $0x28] sm:$0xf]
        %v1471 = vld [vmem:[%s12 + $0x2c] sm:$0xf]
        %v1472 = vld [vmem:[%s12 + $0x30] sm:$0xf]
        %v1473 = vld [vmem:[%s12 + $0x34] sm:$0xf]
        %v1474 = vld [vmem:[%s12 + $0x38] sm:$0xf]
        %v1475 = vld [vmem:[%s12 + $0x3c] sm:$0xf]
        %v1476 = vld [vmem:[%s13] sm:$0x1]
        %v1478 = vlaneseq
        %v1479 = vshrl.u32 %v1478, 7
        %v1480 = vsub.s32 0, %v1479
        %v1481 = vrot.slane %v1476, %v1480
        %v1499 = vunpack.c.l.b16 %v1460
        %v1500 = vunpack.c.l.b16 %v1461
        %v1501 = vunpack.c.l.b16 %v1462
        %v1502 = vunpack.c.l.b16 %v1463
        %v1503 = vunpack.c.l.b16 %v1464
        %v1504 = vunpack.c.l.b16 %v1465
        %v1505 = vunpack.c.l.b16 %v1466
        %v1506 = vunpack.c.l.b16 %v1467
        %v1507 = vunpack.c.l.b16 %v1468
        %v1508 = vunpack.c.l.b16 %v1469
        %v1509 = vunpack.c.l.b16 %v1470
        %v1510 = vunpack.c.l.b16 %v1471
        %v1511 = vunpack.c.l.b16 %v1472
        %v1512 = vunpack.c.l.b16 %v1473
        %v1513 = vunpack.c.l.b16 %v1474
        %v1514 = vunpack.c.l.b16 %v1475
        %v1515 = vpack.c.b16 %v1500, %v1499
        %v1516 = vpack.c.b16 %v1502, %v1501
        %v1517 = vpack.c.b16 %v1504, %v1503
        %v1518 = vpack.c.b16 %v1506, %v1505
        %v1519 = vpack.c.b16 %v1508, %v1507
        %v1520 = vpack.c.b16 %v1510, %v1509
        %v1521 = vpack.c.b16 %v1512, %v1511
        %v1522 = vpack.c.b16 %v1514, %v1513
        %1531 = vmatprep.subr.bf16.mxu0 0
        %1532 = vmatpush1.bf16.msra.mxu0 %v1522
        %1533 = vmatprep.subr.bf16.mxu0 0
        %1534 = vmatpush1.bf16.msra.mxu0 %v1521
        %1535 = vmatprep.subr.bf16.mxu0 0
        %1536 = vmatpush1.bf16.msra.mxu0 %v1520
        %1537 = vmatprep.subr.bf16.mxu0 0
        %1538 = vmatpush1.bf16.msra.mxu0 %v1519
        %1539 = vmatprep.subr.bf16.mxu0 0
        %1540 = vmatpush1.bf16.msra.mxu0 %v1518
        %1541 = vmatprep.subr.bf16.mxu0 0
        %1542 = vmatpush1.bf16.msra.mxu0 %v1517
        %1543 = vmatprep.subr.bf16.mxu0 0
        %1544 = vmatpush1.bf16.msra.mxu0 %v1516
        %1545 = vmatprep.subr.bf16.mxu0 0
        %1546 = vmatpush1.bf16.msra.mxu0 %v1515
        %1547 = vmatprep.subr.bf16.mxu0 0
        %1548 = vmatpush2.bf16.msra.mxu0 0
        %1549 = vmatprep.subr.bf16.mxu0 0
        %1550 = vmatpush2.bf16.msra.mxu0 0
        %1551 = vmatprep.subr.bf16.mxu0 0
        %1552 = vmatpush2.bf16.msra.mxu0 0
        %1553 = vmatprep.subr.bf16.mxu0 0
        %1554 = vmatpush2.bf16.msra.mxu0 0
        %1555 = vmatprep.subr.bf16.mxu0 0
        %1556 = vmatpush2.bf16.msra.mxu0 0
        %1557 = vmatprep.subr.bf16.mxu0 0
        %1558 = vmatpush2.bf16.msra.mxu0 0
        %1559 = vmatprep.subr.bf16.mxu0 0
        %1560 = vmatpush2.bf16.msra.mxu0 0
        %1561 = vmatprep.subr.bf16.mxu0 0
        %1562 = vmatpush2.bf16.msra.mxu0 0
        %1563 = vmatprep.mubr.bf16.mxu0 0
        %1564 = vmatmul.mubr.bf16.gmra.mxu0 %v1459
        %v1565 = vpop.f32.mrf.mxu0
        %v1566 = vadd.f32 %v1481, %v1565
        %v1567 = vpop.f32.mrf.mxu0
        %v1568 = vpop.f32.mrf.mxu0
        %v1569 = vpop.f32.mrf.mxu0
        %1570 = vdwg.mxu0
        %v1571 = vadd.f32 %v1386, %v1566
        %1572 = vst.msk [vmem:[%s612] sm:$0xff] %vm1282, %v1571
      $region88: #{gpt_forward.5} parent=75 // pred_fallthru
        _
      %p1573 = scmp.lt.s32.totalorder %s30, 1
      %s1574 = scalar_select %p1573, %s30, 1
      %p1575 = scmp.lt.s32.totalorder %s31, 0
      %s1576 = scalar_select %p1575, %s31, 0
      %s1577 = sadd.s32 %s1576, %s1574
      %s1578 = smul.addr %s1577, 8
      %s1579 = scalar_lea.vmem %s14, %s1578
      // Predicated region
      $region89: #{gpt_forward.5} parent=75 // pred_check
        %p1580 = pneg %p394
      $region90: #{gpt_forward.5} parent=75 // pred_check_branch
        %1582 = sbr.rel (%p1580) target = $region92
      $region91: #{gpt_forward.5} parent=75 // pred_region
        _
      $region92: #{gpt_forward.5} parent=75 // pred_fallthru
        _
    $region76: #{gpt_forward.5} parent=5 // pred_fallthru
      _
    %p1583 = scmp.le.s32.totalorder 2, %s20
    // Predicated region
    $region93: #{gpt_forward.5} parent=5 // pred_check
      %p1584 = pneg %p1583
    $region94: #{gpt_forward.5} parent=5 // pred_check_branch
      %1586 = sbr.rel (%p1584) target = $region96
    $region95: #{gpt_forward.5} parent=5 // pred_region
      %s1587 = ssub.s32 %s20, 2
      // Predicated region
      $region97: #{gpt_forward.5} parent=95 // pred_check
        %p1588 = pneg %p400
      $region98: #{gpt_forward.5} parent=95 // pred_check_branch
        %1590 = sbr.rel (%p1588) target = $region100
      $region99: #{gpt_forward.5} parent=95 // pred_region
        %p1591 = scmp.lt.s32.totalorder %s33, 1
        %s1592 = scalar_select %p1591, %s33, 1
        %p1593 = scmp.lt.s32.totalorder %s34, 0
        %s1594 = scalar_select %p1593, %s34, 0
        %s1595 = sadd.s32 %s1594, %s1592
        %s1596 = smul.addr %s1595, 8
        %s1597 = scalar_lea.vmem %s14, %s1596
      $region100: #{gpt_forward.5} parent=95 // pred_fallthru
        _
    $region96: #{gpt_forward.5} parent=5 // pred_fallthru
      _
  $region6: #{gpt_forward.5} parent=0 // loop_footer
    %s24 = sadd.s32 1, %s20
  $region7: #{gpt_forward.5} parent=0 // loop_footer_branch
    %19 = sbr.rel target = $region3
  $region8: #{gpt_forward.5} parent=0 // loop_exit
    _

// kernel: gpt_forward.7
$region0: #{gpt_forward.7}
  #allocation0 [shape = 'u32[]', space=smem, size = 0x4, offset = 0x4, fixed_abs, tag = 'smem constant byte address 0x4 - core index']
  #allocation1 [shape = 'u32[144,128]{1,0:T(1,128)}', space=vmem, size = 0x12000, scoped, tag = 'internal scratch']
  #allocation2 [shape = 'bf16[4,8,8]{2,1,0:T(8,128)(2,1)}', space=vmem, size = 0x2000, scoped, tag = 'scratch operand']
  #allocation3 [shape = 'f32[4,8,1]{2,1,0:T(8,128)}', space=vmem, size = 0x4000, scoped, tag = 'scratch operand']
  #allocation4 [shape = 'f32[4,8,1]{2,1,0:T(8,128)}', space=vmem, size = 0x4000, scoped, tag = 'scratch operand']
  #allocation5 [shape = 'f32[4,8,8]{2,1,0:T(8,128)}', space=vmem, size = 0x4000, scoped, tag = 'scratch operand']
  %s0 = inlined_call_operand.vmem [shape: f32[2,8,32], index: 0, kind: input, shape index: {}]
  %s1 = inlined_call_operand.vmem [shape: bf16[2,8,32], index: 1, kind: input, shape index: {}]
  %s2 = inlined_call_operand.vmem [shape: bf16[2,8,32], index: 2, kind: input, shape index: {}]
  %s3 = inlined_call_operand.vmem [shape: bf16[2,8,32], index: 3, kind: input, shape index: {}]
  %s4 = inlined_call_operand.vmem [shape: f32[1,32], index: 4, kind: input, shape index: {}]
  %s5 = inlined_call_operand.vmem [shape: f32[1,32], index: 5, kind: input, shape index: {}]
  %s6 = inlined_call_operand.vmem [shape: bf16[32,32], index: 6, kind: input, shape index: {}]
  %s7 = inlined_call_operand.vmem [shape: f32[1,32], index: 7, kind: input, shape index: {}]
  %s8 = inlined_call_operand.vmem [shape: f32[1,32], index: 8, kind: input, shape index: {}]
  %s9 = inlined_call_operand.vmem [shape: f32[1,32], index: 9, kind: input, shape index: {}]
  %s10 = inlined_call_operand.vmem [shape: bf16[32,128], index: 10, kind: input, shape index: {}]
  %s11 = inlined_call_operand.vmem [shape: f32[1,128], index: 11, kind: input, shape index: {}]
  %s12 = inlined_call_operand.vmem [shape: bf16[128,32], index: 12, kind: input, shape index: {}]
  %s13 = inlined_call_operand.vmem [shape: f32[1,32], index: 13, kind: input, shape index: {}]
  %s14 = inlined_call_operand.vmem [shape: f32[1,32], index: 14, kind: input, shape index: {}]
  %s15 = inlined_call_operand.vmem [shape: f32[1,32], index: 15, kind: input, shape index: {}]
  %s16 = inlined_call_operand.hbm [shape: f32[2,8,32], index: 16, kind: output, shape index: {}]
  %s17 = sld [smem:[#allocation0]]
  $region109: #{gpt_forward.7} parent=0
    _
  %s19 = ssub.s32 1, %s17
  %s20 = scalar_select 0, %s19, %s17
  $region1: #{gpt_forward.7} parent=0
    #allocation6 [shape = 'u8[8192]{0}', space=vmem, size = 0x2000, scoped, tag = 'output window, operand 0']
    #allocation7 [shape = 's32[2]{0}', space=sflag, size = 0x8, scoped, tag = 'scoped memory for gpt_forward.7']
    %21 = vsyncpa [#allocation7], 0
    %s22 = scalar_lea.sflag [#allocation7], 1
    %23 = vsyncpa %s22, 0
    loop: start=0, step=1, limit=4
    $region2: #{gpt_forward.7} parent=1 // loop_pre_header
      _
    $region3: #{gpt_forward.7} parent=1 // loop_header
      %s25 = sphi 0, %s29
      %p26 = scmp.ge.s32.totalorder %s25, 4
      %s32 = sphi 0, %s51
      %s33 = sphi 0, %s47
      %s34 = sphi 0, %s43
      %s35 = sphi 0, %s32
      %s36 = sphi 0, %s33
      %s37 = sphi 0, %s34
      %s38 = sphi 0, %s35
      %s39 = sphi 0, %s36
      %s40 = sphi 0, %s37
      %s56 = sphi 0, %s58
      %s59 = sphi 0, %s56
      %s60 = sphi 0, %s59
      %s76 = sphi 0, %s60
      %s84 = sphi 0, %s86
      %s87 = sphi 0, %s84
      %s88 = sphi 0, %s87
      %s104 = sphi 0, %s88
      %s116 = sphi 0, %s118
      %s119 = sphi 0, %s116
      %s120 = sphi 0, %s119
      %s136 = sphi 0, %s120
      %s148 = sphi 0, %s150
      %s151 = sphi 0, %s148
      %s152 = sphi 0, %s151
      %s168 = sphi 0, %s152
      %s172 = sphi 0, %s172
      %s174 = sphi 0, %s172
      %s175 = sphi 0, %s174
      %s189 = sphi 0, %s175
      %s193 = sphi 0, %s193
      %s195 = sphi 0, %s193
      %s196 = sphi 0, %s195
      %s210 = sphi 0, %s196
      %s214 = sphi 0, %s214
      %s216 = sphi 0, %s214
      %s217 = sphi 0, %s216
      %s231 = sphi 0, %s217
      %s235 = sphi 0, %s235
      %s237 = sphi 0, %s235
      %s238 = sphi 0, %s237
      %s252 = sphi 0, %s238
      %s256 = sphi 0, %s256
      %s258 = sphi 0, %s256
      %s259 = sphi 0, %s258
      %s273 = sphi 0, %s259
      %s277 = sphi 0, %s277
      %s279 = sphi 0, %s277
      %s280 = sphi 0, %s279
      %s294 = sphi 0, %s280
      %s298 = sphi 0, %s298
      %s300 = sphi 0, %s298
      %s301 = sphi 0, %s300
      %s315 = sphi 0, %s301
      %s319 = sphi 0, %s319
      %s321 = sphi 0, %s319
      %s322 = sphi 0, %s321
      %s336 = sphi 0, %s322
      %s340 = sphi 0, %s340
      %s342 = sphi 0, %s340
      %s343 = sphi 0, %s342
      %s357 = sphi 0, %s343
      %s361 = sphi 0, %s361
      %s363 = sphi 0, %s361
      %s364 = sphi 0, %s363
      %s378 = sphi 0, %s364
      %s382 = sphi 0, %s382
      %s384 = sphi 0, %s382
      %s385 = sphi 0, %s384
      %s399 = sphi 0, %s385
      %s403 = sphi 0, %s403
      %s405 = sphi 0, %s403
      %s406 = sphi 0, %s405
      %s420 = sphi 0, %s406
      %s428 = sphi 0, %s430
      %s431 = sphi 0, %s428
      %s432 = sphi 0, %s431
      %s448 = sphi 0, %s432
    $region4: #{gpt_forward.7} parent=1 // loop_header_branch
      %28 = sbr.rel (%p26) target = $region8
    $region5: #{gpt_forward.7} parent=1 // loop_body
      %s30 = ssub.s32 %s25, 1
      %s31 = ssub.s32 %s25, 2
      %s41 = sadd.s32 1, %s34
      %p42 = scmp.ge.s32.totalorder %s41, 1
      %s43 = scalar_select %p42, 0, %s41
      %s44 = sadd.s32 1, %s33
      %s45 = scalar_select %p42, %s44, %s33
      %p46 = scmp.ge.s32.totalorder %s45, 1
      %s47 = scalar_select %p46, 0, %s45
      %s48 = sadd.s32 1, %s32
      %s49 = scalar_select %p46, %s48, %s32
      %p50 = scmp.ge.s32.totalorder %s49, 2
      %s51 = scalar_select %p50, 0, %s49
      %s52 = ssub.s32 %s32, %s51
      %s53 = ssub.s32 %s33, %s47
      %s54 = sor.u32 %s52, %s53
      %p55 = scmp.eq.s32.totalorder %s54, 0
      %s57 = sadd.s32 %s56, 1
      %s58 = scalar_select %p55, %s56, %s57
      %p61 = pneg %p55
      %p62 = scmp.eq.s32.totalorder %s25, 1
      %p63 = por %p61, %p62
      %p64 = scmp.ne.s32.totalorder %s56, %s59
      %p65 = scmp.eq.s32.totalorder %s25, 0
      %p66 = por %p64, %p65
      %p67 = scmp.ne.s32.totalorder %s56, %s59
      %p68 = scmp.eq.s32.totalorder %s30, 1
      %p69 = por %p67, %p68
      %p70 = scmp.ne.s32.totalorder %s59, %s60
      %p71 = scmp.eq.s32.totalorder %s30, 0
      %p72 = por %p70, %p71
      %p73 = scmp.ne.s32.totalorder %s59, %s60
      %p74 = scmp.eq.s32.totalorder %s31, 1
      %p75 = por %p73, %p74
      %p77 = scmp.ne.s32.totalorder %s60, %s76
      %p78 = scmp.eq.s32.totalorder %s31, 0
      %p79 = por %p77, %p78
      %s80 = ssub.s32 %s32, %s51
      %s81 = ssub.s32 %s33, %s47
      %s82 = sor.u32 %s80, %s81
      %p83 = scmp.eq.s32.totalorder %s82, 0
      %s85 = sadd.s32 %s84, 1
      %s86 = scalar_select %p83, %s84, %s85
      %p89 = pneg %p83
      %p90 = scmp.eq.s32.totalorder %s25, 1
      %p91 = por %p89, %p90
      %p92 = scmp.ne.s32.totalorder %s84, %s87
      %p93 = scmp.eq.s32.totalorder %s25, 0
      %p94 = por %p92, %p93
      %p95 = scmp.ne.s32.totalorder %s84, %s87
      %p96 = scmp.eq.s32.totalorder %s30, 1
      %p97 = por %p95, %p96
      %p98 = scmp.ne.s32.totalorder %s87, %s88
      %p99 = scmp.eq.s32.totalorder %s30, 0
      %p100 = por %p98, %p99
      %p101 = scmp.ne.s32.totalorder %s87, %s88
      %p102 = scmp.eq.s32.totalorder %s31, 1
      %p103 = por %p101, %p102
      %p105 = scmp.ne.s32.totalorder %s88, %s104
      %p106 = scmp.eq.s32.totalorder %s31, 0
      %p107 = por %p105, %p106
      %p108 = scmp.lt.s32.totalorder %s34, %s33
      %s109 = scalar_select %p108, %s34, %s33
      %p110 = scmp.lt.s32.totalorder %s43, %s47
      %s111 = scalar_select %p110, %s43, %s47
      %s112 = ssub.s32 %s32, %s51
      %s113 = ssub.s32 %s109, %s111
      %s114 = sor.u32 %s112, %s113
      %p115 = scmp.eq.s32.totalorder %s114, 0
      %s117 = sadd.s32 %s116, 1
      %s118 = scalar_select %p115, %s116, %s117
      %p121 = pneg %p115
      %p122 = scmp.eq.s32.totalorder %s25, 1
      %p123 = por %p121, %p122
      %p124 = scmp.ne.s32.totalorder %s116, %s119
      %p125 = scmp.eq.s32.totalorder %s25, 0
      %p126 = por %p124, %p125
      %p127 = scmp.ne.s32.totalorder %s116, %s119
      %p128 = scmp.eq.s32.totalorder %s30, 1
      %p129 = por %p127, %p128
      %p130 = scmp.ne.s32.totalorder %s119, %s120
      %p131 = scmp.eq.s32.totalorder %s30, 0
      %p132 = por %p130, %p131
      %p133 = scmp.ne.s32.totalorder %s119, %s120
      %p134 = scmp.eq.s32.totalorder %s31, 1
      %p135 = por %p133, %p134
      %p137 = scmp.ne.s32.totalorder %s120, %s136
      %p138 = scmp.eq.s32.totalorder %s31, 0
      %p139 = por %p137, %p138
      %p140 = scmp.lt.s32.totalorder %s34, %s33
      %s141 = scalar_select %p140, %s34, %s33
      %p142 = scmp.lt.s32.totalorder %s43, %s47
      %s143 = scalar_select %p142, %s43, %s47
      %s144 = ssub.s32 %s32, %s51
      %s145 = ssub.s32 %s141, %s143
      %s146 = sor.u32 %s144, %s145
      %p147 = scmp.eq.s32.totalorder %s146, 0
      %s149 = sadd.s32 %s148, 1
      %s150 = scalar_select %p147, %s148, %s149
      %p153 = pneg %p147
      %p154 = scmp.eq.s32.totalorder %s25, 1
      %p155 = por %p153, %p154
      %p156 = scmp.ne.s32.totalorder %s148, %s151
      %p157 = scmp.eq.s32.totalorder %s25, 0
      %p158 = por %p156, %p157
      %p159 = scmp.ne.s32.totalorder %s148, %s151
      %p160 = scmp.eq.s32.totalorder %s30, 1
      %p161 = por %p159, %p160
      %p162 = scmp.ne.s32.totalorder %s151, %s152
      %p163 = scmp.eq.s32.totalorder %s30, 0
      %p164 = por %p162, %p163
      %p165 = scmp.ne.s32.totalorder %s151, %s152
      %p166 = scmp.eq.s32.totalorder %s31, 1
      %p167 = por %p165, %p166
      %p169 = scmp.ne.s32.totalorder %s152, %s168
      %p170 = scmp.eq.s32.totalorder %s31, 0
      %p171 = por %p169, %p170
      %s173 = sadd.s32 %s172, 1
      %p176 = scmp.eq.s32.totalorder %s25, 1
      %p177 = scmp.ne.s32.totalorder %s172, %s174
      %p178 = scmp.eq.s32.totalorder %s25, 0
      %p179 = por %p177, %p178
      %p180 = scmp.ne.s32.totalorder %s172, %s174
      %p181 = scmp.eq.s32.totalorder %s30, 1
      %p182 = por %p180, %p181
      %p183 = scmp.ne.s32.totalorder %s174, %s175
      %p184 = scmp.eq.s32.totalorder %s30, 0
      %p185 = por %p183, %p184
      %p186 = scmp.ne.s32.totalorder %s174, %s175
      %p187 = scmp.eq.s32.totalorder %s31, 1
      %p188 = por %p186, %p187
      %p190 = scmp.ne.s32.totalorder %s175, %s189
      %p191 = scmp.eq.s32.totalorder %s31, 0
      %p192 = por %p190, %p191
      %s194 = sadd.s32 %s193, 1
      %p197 = scmp.eq.s32.totalorder %s25, 1
      %p198 = scmp.ne.s32.totalorder %s193, %s195
      %p199 = scmp.eq.s32.totalorder %s25, 0
      %p200 = por %p198, %p199
      %p201 = scmp.ne.s32.totalorder %s193, %s195
      %p202 = scmp.eq.s32.totalorder %s30, 1
      %p203 = por %p201, %p202
      %p204 = scmp.ne.s32.totalorder %s195, %s196
      %p205 = scmp.eq.s32.totalorder %s30, 0
      %p206 = por %p204, %p205
      %p207 = scmp.ne.s32.totalorder %s195, %s196
      %p208 = scmp.eq.s32.totalorder %s31, 1
      %p209 = por %p207, %p208
      %p211 = scmp.ne.s32.totalorder %s196, %s210
      %p212 = scmp.eq.s32.totalorder %s31, 0
      %p213 = por %p211, %p212
      %s215 = sadd.s32 %s214, 1
      %p218 = scmp.eq.s32.totalorder %s25, 1
      %p219 = scmp.ne.s32.totalorder %s214, %s216
      %p220 = scmp.eq.s32.totalorder %s25, 0
      %p221 = por %p219, %p220
      %p222 = scmp.ne.s32.totalorder %s214, %s216
      %p223 = scmp.eq.s32.totalorder %s30, 1
      %p224 = por %p222, %p223
      %p225 = scmp.ne.s32.totalorder %s216, %s217
      %p226 = scmp.eq.s32.totalorder %s30, 0
      %p227 = por %p225, %p226
      %p228 = scmp.ne.s32.totalorder %s216, %s217
      %p229 = scmp.eq.s32.totalorder %s31, 1
      %p230 = por %p228, %p229
      %p232 = scmp.ne.s32.totalorder %s217, %s231
      %p233 = scmp.eq.s32.totalorder %s31, 0
      %p234 = por %p232, %p233
      %s236 = sadd.s32 %s235, 1
      %p239 = scmp.eq.s32.totalorder %s25, 1
      %p240 = scmp.ne.s32.totalorder %s235, %s237
      %p241 = scmp.eq.s32.totalorder %s25, 0
      %p242 = por %p240, %p241
      %p243 = scmp.ne.s32.totalorder %s235, %s237
      %p244 = scmp.eq.s32.totalorder %s30, 1
      %p245 = por %p243, %p244
      %p246 = scmp.ne.s32.totalorder %s237, %s238
      %p247 = scmp.eq.s32.totalorder %s30, 0
      %p248 = por %p246, %p247
      %p249 = scmp.ne.s32.totalorder %s237, %s238
      %p250 = scmp.eq.s32.totalorder %s31, 1
      %p251 = por %p249, %p250
      %p253 = scmp.ne.s32.totalorder %s238, %s252
      %p254 = scmp.eq.s32.totalorder %s31, 0
      %p255 = por %p253, %p254
      %s257 = sadd.s32 %s256, 1
      %p260 = scmp.eq.s32.totalorder %s25, 1
      %p261 = scmp.ne.s32.totalorder %s256, %s258
      %p262 = scmp.eq.s32.totalorder %s25, 0
      %p263 = por %p261, %p262
      %p264 = scmp.ne.s32.totalorder %s256, %s258
      %p265 = scmp.eq.s32.totalorder %s30, 1
      %p266 = por %p264, %p265
      %p267 = scmp.ne.s32.totalorder %s258, %s259
      %p268 = scmp.eq.s32.totalorder %s30, 0
      %p269 = por %p267, %p268
      %p270 = scmp.ne.s32.totalorder %s258, %s259
      %p271 = scmp.eq.s32.totalorder %s31, 1
      %p272 = por %p270, %p271
      %p274 = scmp.ne.s32.totalorder %s259, %s273
      %p275 = scmp.eq.s32.totalorder %s31, 0
      %p276 = por %p274, %p275
      %s278 = sadd.s32 %s277, 1
      %p281 = scmp.eq.s32.totalorder %s25, 1
      %p282 = scmp.ne.s32.totalorder %s277, %s279
      %p283 = scmp.eq.s32.totalorder %s25, 0
      %p284 = por %p282, %p283
      %p285 = scmp.ne.s32.totalorder %s277, %s279
      %p286 = scmp.eq.s32.totalorder %s30, 1
      %p287 = por %p285, %p286
      %p288 = scmp.ne.s32.totalorder %s279, %s280
      %p289 = scmp.eq.s32.totalorder %s30, 0
      %p290 = por %p288, %p289
      %p291 = scmp.ne.s32.totalorder %s279, %s280
      %p292 = scmp.eq.s32.totalorder %s31, 1
      %p293 = por %p291, %p292
      %p295 = scmp.ne.s32.totalorder %s280, %s294
      %p296 = scmp.eq.s32.totalorder %s31, 0
      %p297 = por %p295, %p296
      %s299 = sadd.s32 %s298, 1
      %p302 = scmp.eq.s32.totalorder %s25, 1
      %p303 = scmp.ne.s32.totalorder %s298, %s300
      %p304 = scmp.eq.s32.totalorder %s25, 0
      %p305 = por %p303, %p304
      %p306 = scmp.ne.s32.totalorder %s298, %s300
      %p307 = scmp.eq.s32.totalorder %s30, 1
      %p308 = por %p306, %p307
      %p309 = scmp.ne.s32.totalorder %s300, %s301
      %p310 = scmp.eq.s32.totalorder %s30, 0
      %p311 = por %p309, %p310
      %p312 = scmp.ne.s32.totalorder %s300, %s301
      %p313 = scmp.eq.s32.totalorder %s31, 1
      %p314 = por %p312, %p313
      %p316 = scmp.ne.s32.totalorder %s301, %s315
      %p317 = scmp.eq.s32.totalorder %s31, 0
      %p318 = por %p316, %p317
      %s320 = sadd.s32 %s319, 1
      %p323 = scmp.eq.s32.totalorder %s25, 1
      %p324 = scmp.ne.s32.totalorder %s319, %s321
      %p325 = scmp.eq.s32.totalorder %s25, 0
      %p326 = por %p324, %p325
      %p327 = scmp.ne.s32.totalorder %s319, %s321
      %p328 = scmp.eq.s32.totalorder %s30, 1
      %p329 = por %p327, %p328
      %p330 = scmp.ne.s32.totalorder %s321, %s322
      %p331 = scmp.eq.s32.totalorder %s30, 0
      %p332 = por %p330, %p331
      %p333 = scmp.ne.s32.totalorder %s321, %s322
      %p334 = scmp.eq.s32.totalorder %s31, 1
      %p335 = por %p333, %p334
      %p337 = scmp.ne.s32.totalorder %s322, %s336
      %p338 = scmp.eq.s32.totalorder %s31, 0
      %p339 = por %p337, %p338
      %s341 = sadd.s32 %s340, 1
      %p344 = scmp.eq.s32.totalorder %s25, 1
      %p345 = scmp.ne.s32.totalorder %s340, %s342
      %p346 = scmp.eq.s32.totalorder %s25, 0
      %p347 = por %p345, %p346
      %p348 = scmp.ne.s32.totalorder %s340, %s342
      %p349 = scmp.eq.s32.totalorder %s30, 1
      %p350 = por %p348, %p349
      %p351 = scmp.ne.s32.totalorder %s342, %s343
      %p352 = scmp.eq.s32.totalorder %s30, 0
      %p353 = por %p351, %p352
      %p354 = scmp.ne.s32.totalorder %s342, %s343
      %p355 = scmp.eq.s32.totalorder %s31, 1
      %p356 = por %p354, %p355
      %p358 = scmp.ne.s32.totalorder %s343, %s357
      %p359 = scmp.eq.s32.totalorder %s31, 0
      %p360 = por %p358, %p359
      %s362 = sadd.s32 %s361, 1
      %p365 = scmp.eq.s32.totalorder %s25, 1
      %p366 = scmp.ne.s32.totalorder %s361, %s363
      %p367 = scmp.eq.s32.totalorder %s25, 0
      %p368 = por %p366, %p367
      %p369 = scmp.ne.s32.totalorder %s361, %s363
      %p370 = scmp.eq.s32.totalorder %s30, 1
      %p371 = por %p369, %p370
      %p372 = scmp.ne.s32.totalorder %s363, %s364
      %p373 = scmp.eq.s32.totalorder %s30, 0
      %p374 = por %p372, %p373
      %p375 = scmp.ne.s32.totalorder %s363, %s364
      %p376 = scmp.eq.s32.totalorder %s31, 1
      %p377 = por %p375, %p376
      %p379 = scmp.ne.s32.totalorder %s364, %s378
      %p380 = scmp.eq.s32.totalorder %s31, 0
      %p381 = por %p379, %p380
      %s383 = sadd.s32 %s382, 1
      %p386 = scmp.eq.s32.totalorder %s25, 1
      %p387 = scmp.ne.s32.totalorder %s382, %s384
      %p388 = scmp.eq.s32.totalorder %s25, 0
      %p389 = por %p387, %p388
      %p390 = scmp.ne.s32.totalorder %s382, %s384
      %p391 = scmp.eq.s32.totalorder %s30, 1
      %p392 = por %p390, %p391
      %p393 = scmp.ne.s32.totalorder %s384, %s385
      %p394 = scmp.eq.s32.totalorder %s30, 0
      %p395 = por %p393, %p394
      %p396 = scmp.ne.s32.totalorder %s384, %s385
      %p397 = scmp.eq.s32.totalorder %s31, 1
      %p398 = por %p396, %p397
      %p400 = scmp.ne.s32.totalorder %s385, %s399
      %p401 = scmp.eq.s32.totalorder %s31, 0
      %p402 = por %p400, %p401
      %s404 = sadd.s32 %s403, 1
      %p407 = scmp.eq.s32.totalorder %s25, 1
      %p408 = scmp.ne.s32.totalorder %s403, %s405
      %p409 = scmp.eq.s32.totalorder %s25, 0
      %p410 = por %p408, %p409
      %p411 = scmp.ne.s32.totalorder %s403, %s405
      %p412 = scmp.eq.s32.totalorder %s30, 1
      %p413 = por %p411, %p412
      %p414 = scmp.ne.s32.totalorder %s405, %s406
      %p415 = scmp.eq.s32.totalorder %s30, 0
      %p416 = por %p414, %p415
      %p417 = scmp.ne.s32.totalorder %s405, %s406
      %p418 = scmp.eq.s32.totalorder %s31, 1
      %p419 = por %p417, %p418
      %p421 = scmp.ne.s32.totalorder %s406, %s420
      %p422 = scmp.eq.s32.totalorder %s31, 0
      %p423 = por %p421, %p422
      %s424 = ssub.s32 %s32, %s51
      %s425 = ssub.s32 %s33, %s47
      %s426 = sor.u32 %s424, %s425
      %p427 = scmp.eq.s32.totalorder %s426, 0
      %s429 = sadd.s32 %s428, 1
      %s430 = scalar_select %p427, %s428, %s429
      %p433 = pneg %p427
      %p434 = scmp.eq.s32.totalorder %s25, 1
      %p435 = por %p433, %p434
      %p436 = scmp.ne.s32.totalorder %s428, %s431
      %p437 = scmp.eq.s32.totalorder %s25, 0
      %p438 = por %p436, %p437
      %p439 = scmp.ne.s32.totalorder %s428, %s431
      %p440 = scmp.eq.s32.totalorder %s30, 1
      %p441 = por %p439, %p440
      %p442 = scmp.ne.s32.totalorder %s431, %s432
      %p443 = scmp.eq.s32.totalorder %s30, 0
      %p444 = por %p442, %p443
      %p445 = scmp.ne.s32.totalorder %s431, %s432
      %p446 = scmp.eq.s32.totalorder %s31, 1
      %p447 = por %p445, %p446
      %p449 = scmp.ne.s32.totalorder %s432, %s448
      %p450 = scmp.eq.s32.totalorder %s31, 0
      %p451 = por %p449, %p450
      %p452 = scmp.le.s32.totalorder 1, %s25
      %p453 = scmp.lt.s32.totalorder %s25, 3
      %p454 = pnand %p452, %p453
      %p455 = pneg %p454
      // Predicated region
      $region9: #{gpt_forward.7} parent=5 // pred_check
        _
      $region10: #{gpt_forward.7} parent=5 // pred_check_branch
        %457 = sbr.rel (%p454) target = $region12
      $region11: #{gpt_forward.7} parent=5 // pred_region
        %s458 = ssub.s32 %s25, 1
        // Predicated region
        $region13: #{gpt_forward.7} parent=11 // pred_check
          %p459 = pneg %p185
        $region14: #{gpt_forward.7} parent=11 // pred_check_branch
          %461 = sbr.rel (%p459) target = $region16
        $region15: #{gpt_forward.7} parent=11 // pred_region
          _
        $region16: #{gpt_forward.7} parent=11 // pred_fallthru
          _
        // Predicated region
        $region17: #{gpt_forward.7} parent=11 // pred_check
          %p462 = pneg %p206
        $region18: #{gpt_forward.7} parent=11 // pred_check_branch
          %464 = sbr.rel (%p462) target = $region20
        $region19: #{gpt_forward.7} parent=11 // pred_region
          _
        $region20: #{gpt_forward.7} parent=11 // pred_fallthru
          _
        // Predicated region
        $region21: #{gpt_forward.7} parent=11 // pred_check
          %p465 = pneg %p227
        $region22: #{gpt_forward.7} parent=11 // pred_check_branch
          %467 = sbr.rel (%p465) target = $region24
        $region23: #{gpt_forward.7} parent=11 // pred_region
          _
        $region24: #{gpt_forward.7} parent=11 // pred_fallthru
          _
        // Predicated region
        $region25: #{gpt_forward.7} parent=11 // pred_check
          %p468 = pneg %p248
        $region26: #{gpt_forward.7} parent=11 // pred_check_branch
          %470 = sbr.rel (%p468) target = $region28
        $region27: #{gpt_forward.7} parent=11 // pred_region
          _
        $region28: #{gpt_forward.7} parent=11 // pred_fallthru
          _
        // Predicated region
        $region29: #{gpt_forward.7} parent=11 // pred_check
          %p471 = pneg %p269
        $region30: #{gpt_forward.7} parent=11 // pred_check_branch
          %473 = sbr.rel (%p471) target = $region32
        $region31: #{gpt_forward.7} parent=11 // pred_region
          _
        $region32: #{gpt_forward.7} parent=11 // pred_fallthru
          _
        // Predicated region
        $region33: #{gpt_forward.7} parent=11 // pred_check
          %p474 = pneg %p290
        $region34: #{gpt_forward.7} parent=11 // pred_check_branch
          %476 = sbr.rel (%p474) target = $region36
        $region35: #{gpt_forward.7} parent=11 // pred_region
          _
        $region36: #{gpt_forward.7} parent=11 // pred_fallthru
          _
        // Predicated region
        $region37: #{gpt_forward.7} parent=11 // pred_check
          %p477 = pneg %p311
        $region38: #{gpt_forward.7} parent=11 // pred_check_branch
          %479 = sbr.rel (%p477) target = $region40
        $region39: #{gpt_forward.7} parent=11 // pred_region
          _
        $region40: #{gpt_forward.7} parent=11 // pred_fallthru
          _
        // Predicated region
        $region41: #{gpt_forward.7} parent=11 // pred_check
          %p480 = pneg %p332
        $region42: #{gpt_forward.7} parent=11 // pred_check_branch
          %482 = sbr.rel (%p480) target = $region44
        $region43: #{gpt_forward.7} parent=11 // pred_region
          _
        $region44: #{gpt_forward.7} parent=11 // pred_fallthru
          _
        // Predicated region
        $region45: #{gpt_forward.7} parent=11 // pred_check
          %p483 = pneg %p353
        $region46: #{gpt_forward.7} parent=11 // pred_check_branch
          %485 = sbr.rel (%p483) target = $region48
        $region47: #{gpt_forward.7} parent=11 // pred_region
          _
        $region48: #{gpt_forward.7} parent=11 // pred_fallthru
          _
        // Predicated region
        $region49: #{gpt_forward.7} parent=11 // pred_check
          %p486 = pneg %p374
        $region50: #{gpt_forward.7} parent=11 // pred_check_branch
          %488 = sbr.rel (%p486) target = $region52
        $region51: #{gpt_forward.7} parent=11 // pred_region
          _
        $region52: #{gpt_forward.7} parent=11 // pred_fallthru
          _
        // Predicated region
        $region53: #{gpt_forward.7} parent=11 // pred_check
          %p489 = pneg %p395
        $region54: #{gpt_forward.7} parent=11 // pred_check_branch
          %491 = sbr.rel (%p489) target = $region56
        $region55: #{gpt_forward.7} parent=11 // pred_region
          _
        $region56: #{gpt_forward.7} parent=11 // pred_fallthru
          _
        // Predicated region
        $region57: #{gpt_forward.7} parent=11 // pred_check
          %p492 = pneg %p416
        $region58: #{gpt_forward.7} parent=11 // pred_check_branch
          %494 = sbr.rel (%p492) target = $region60
        $region59: #{gpt_forward.7} parent=11 // pred_region
          _
        $region60: #{gpt_forward.7} parent=11 // pred_fallthru
          _
      $region12: #{gpt_forward.7} parent=5 // pred_fallthru
        _
      %p495 = scmp.lt.s32.totalorder %s25, 2
      // Predicated region
      $region61: #{gpt_forward.7} parent=5 // pred_check
        %p496 = pneg %p495
      $region62: #{gpt_forward.7} parent=5 // pred_check_branch
        %498 = sbr.rel (%p496) target = $region64
      $region63: #{gpt_forward.7} parent=5 // pred_region
        // Predicated region
        $region65: #{gpt_forward.7} parent=63 // pred_check
          %p499 = pneg %p66
        $region66: #{gpt_forward.7} parent=63 // pred_check_branch
          %501 = sbr.rel (%p499) target = $region68
        $region67: #{gpt_forward.7} parent=63 // pred_region
          %p502 = scmp.lt.s32.totalorder %s32, 1
          %s503 = scalar_select %p502, %s32, 1
          %p504 = scmp.lt.s32.totalorder %s33, 0
          %s505 = scalar_select %p504, %s33, 0
          %s506 = sadd.s32 %s505, %s503
          %s507 = smul.addr %s506, 8
          %s508 = scalar_lea.vmem %s0, %s507
        $region68: #{gpt_forward.7} parent=63 // pred_fallthru
          _
        // Predicated region
        $region69: #{gpt_forward.7} parent=63 // pred_check
          %p509 = pneg %p94
        $region70: #{gpt_forward.7} parent=63 // pred_check_branch
          %511 = sbr.rel (%p509) target = $region72
        $region71: #{gpt_forward.7} parent=63 // pred_region
          %p512 = scmp.lt.s32.totalorder %s32, 1
          %s513 = scalar_select %p512, %s32, 1
          %p514 = scmp.lt.s32.totalorder %s33, 0
          %s515 = scalar_select %p514, %s33, 0
          %s516 = sadd.s32 %s515, %s513
          %s517 = smul.addr %s516, 4
          %s518 = scalar_lea.vmem %s1, %s517
        $region72: #{gpt_forward.7} parent=63 // pred_fallthru
          _
        // Predicated region
        $region73: #{gpt_forward.7} parent=63 // pred_check
          %p519 = pneg %p126
        $region74: #{gpt_forward.7} parent=63 // pred_check_branch
          %521 = sbr.rel (%p519) target = $region76
        $region75: #{gpt_forward.7} parent=63 // pred_region
          %p522 = scmp.lt.s32.totalorder %s34, %s33
          %s523 = scalar_select %p522, %s34, %s33
          %p524 = scmp.lt.s32.totalorder %s32, 1
          %s525 = scalar_select %p524, %s32, 1
          %p526 = scmp.lt.s32.totalorder %s523, 0
          %s527 = scalar_select %p526, %s523, 0
          %s528 = sadd.s32 %s527, %s525
          %s529 = smul.addr %s528, 4
          %s530 = scalar_lea.vmem %s2, %s529
          %p531 = scmp.lt.s32.totalorder %s34, %s33
          %s532 = scalar_select %p531, %s34, %s33
        $region76: #{gpt_forward.7} parent=63 // pred_fallthru
          _
        // Predicated region
        $region77: #{gpt_forward.7} parent=63 // pred_check
          %p533 = pneg %p158
        $region78: #{gpt_forward.7} parent=63 // pred_check_branch
          %535 = sbr.rel (%p533) target = $region80
        $region79: #{gpt_forward.7} parent=63 // pred_region
          %p536 = scmp.lt.s32.totalorder %s34, %s33
          %s537 = scalar_select %p536, %s34, %s33
          %p538 = scmp.lt.s32.totalorder %s32, 1
          %s539 = scalar_select %p538, %s32, 1
          %p540 = scmp.lt.s32.totalorder %s537, 0
          %s541 = scalar_select %p540, %s537, 0
          %s542 = sadd.s32 %s541, %s539
          %s543 = smul.addr %s542, 4
          %s544 = scalar_lea.vmem %s3, %s543
          %p545 = scmp.lt.s32.totalorder %s34, %s33
          %s546 = scalar_select %p545, %s34, %s33
        $region80: #{gpt_forward.7} parent=63 // pred_fallthru
          _
      $region64: #{gpt_forward.7} parent=5 // pred_fallthru
        _
      %p547 = scmp.le.s32.totalorder 1, %s25
      %p548 = scmp.lt.s32.totalorder %s25, 3
      %p549 = pnand %p547, %p548
      %p550 = pneg %p549
      // Predicated region
      $region81: #{gpt_forward.7} parent=5 // pred_check
        _
      $region82: #{gpt_forward.7} parent=5 // pred_check_branch
        %552 = sbr.rel (%p549) target = $region84
      $region83: #{gpt_forward.7} parent=5 // pred_region
        %s553 = ssub.s32 %s25, 1
        %p554 = scmp.lt.s32.totalorder %s35, 1
        %s555 = scalar_select %p554, %s35, 1
        %p556 = scmp.lt.s32.totalorder %s36, 0
        %s557 = scalar_select %p556, %s36, 0
        %s558 = sadd.s32 %s557, %s555
        %s559 = smul.addr %s558, 8
        %s560 = scalar_lea.vmem %s0, %s559
        %p561 = pneg %p72
        %p562 = pneg %p69
        %p563 = scmp.lt.s32.totalorder %s35, 1
        %s564 = scalar_select %p563, %s35, 1
        %p565 = scmp.lt.s32.totalorder %s36, 0
        %s566 = scalar_select %p565, %s36, 0
        %s567 = sadd.s32 %s566, %s564
        %s568 = smul.addr %s567, 4
        %s569 = scalar_lea.vmem %s1, %s568
        %p570 = pneg %p100
        %p571 = pneg %p97
        %p572 = scmp.lt.s32.totalorder %s37, %s36
        %s573 = scalar_select %p572, %s37, %s36
        %p574 = scmp.lt.s32.totalorder %s35, 1
        %s575 = scalar_select %p574, %s35, 1
        %p576 = scmp.lt.s32.totalorder %s573, 0
        %s577 = scalar_select %p576, %s573, 0
        %s578 = sadd.s32 %s577, %s575
        %s579 = smul.addr %s578, 4
        %s580 = scalar_lea.vmem %s2, %s579
        %p581 = pneg %p132
        %p582 = pneg %p129
        %p583 = scmp.lt.s32.totalorder %s37, %s36
        %s584 = scalar_select %p583, %s37, %s36
        %p585 = scmp.lt.s32.totalorder %s35, 1
        %s586 = scalar_select %p585, %s35, 1
        %p587 = scmp.lt.s32.totalorder %s584, 0
        %s588 = scalar_select %p587, %s584, 0
        %s589 = sadd.s32 %s588, %s586
        %s590 = smul.addr %s589, 4
        %s591 = scalar_lea.vmem %s3, %s590
        %p592 = pneg %p164
        %p593 = pneg %p161
        %p594 = pneg %p185
        %p595 = pneg %p182
        %p596 = pneg %p206
        %p597 = pneg %p203
        %p598 = pneg %p227
        %p599 = pneg %p224
        %p600 = pneg %p248
        %p601 = pneg %p245
        %p602 = pneg %p269
        %p603 = pneg %p266
        %p604 = pneg %p290
        %p605 = pneg %p287
        %p606 = pneg %p311
        %p607 = pneg %p308
        %p608 = pneg %p332
        %p609 = pneg %p329
        %p610 = pneg %p353
        %p611 = pneg %p350
        %p612 = pneg %p374
        %p613 = pneg %p371
        %p614 = pneg %p395
        %p615 = pneg %p392
        %p616 = pneg %p416
        %p617 = pneg %p413
        %p618 = pneg %p444
        %p619 = pneg %p441
        %s620 = sand.u32 %s431, 1
        %s621 = scalar_lea.sflag [#allocation7], %s620
        %s622 = sand.u32 %s431, 1
        %s623 = smul.addr %s622, 8
        %s624 = scalar_lea.vmem [#allocation6], %s623
        %p625 = scmp.lt.s32.totalorder %s35, 1
        %s626 = scalar_select %p625, %s35, 1
        %p627 = scmp.lt.s32.totalorder %s36, 0
        %s628 = scalar_select %p627, %s36, 0
        %s629 = sadd.s32 %s628, %s626
        %s630 = smul.addr %s629, 8
        %s631 = scalar_lea.vmem %s0, %s630
        %p632 = scmp.lt.s32.totalorder %s35, 1
        %s633 = scalar_select %p632, %s35, 1
        %p634 = scmp.lt.s32.totalorder %s36, 0
        %s635 = scalar_select %p634, %s36, 0
        %s636 = sadd.s32 %s635, %s633
        %s637 = smul.addr %s636, 4
        %s638 = scalar_lea.vmem %s1, %s637
        %p639 = scmp.lt.s32.totalorder %s37, %s36
        %s640 = scalar_select %p639, %s37, %s36
        %p641 = scmp.lt.s32.totalorder %s35, 1
        %s642 = scalar_select %p641, %s35, 1
        %p643 = scmp.lt.s32.totalorder %s640, 0
        %s644 = scalar_select %p643, %s640, 0
        %s645 = sadd.s32 %s644, %s642
        %s646 = smul.addr %s645, 4
        %s647 = scalar_lea.vmem %s2, %s646
        %p648 = scmp.lt.s32.totalorder %s37, %s36
        %s649 = scalar_select %p648, %s37, %s36
        %p650 = scmp.lt.s32.totalorder %s37, %s36
        %s651 = scalar_select %p650, %s37, %s36
        %p652 = scmp.lt.s32.totalorder %s35, 1
        %s653 = scalar_select %p652, %s35, 1
        %p654 = scmp.lt.s32.totalorder %s651, 0
        %s655 = scalar_select %p654, %s651, 0
        %s656 = sadd.s32 %s655, %s653
        %s657 = smul.addr %s656, 4
        %s658 = scalar_lea.vmem %s3, %s657
        %p659 = scmp.lt.s32.totalorder %s37, %s36
        %s660 = scalar_select %p659, %s37, %s36
        %p662 = scmp.eq.s32.totalorder %s37, 0
        // Predicated region
        $region85: #{gpt_forward.7} parent=83 // pred_check
          %p663 = pneg %p662
        $region86: #{gpt_forward.7} parent=83 // pred_check_branch
          %665 = sbr.rel (%p663) target = $region88
        $region87: #{gpt_forward.7} parent=83 // pred_region
          %v666 = vld [vmem:[%s638] sm:$0xf]
          %668 = vrot.lane.b32.xlu0 %v666, 120
          %v669 = vpop.permute.xlu0 %668
          %671 = vrot.lane.b32.xlu0 %v666, 112
          %v672 = vpop.permute.xlu0 %671
          %674 = vrot.lane.b32.xlu0 %v666, 104
          %v675 = vpop.permute.xlu0 %674
          %vm677 = vcmask 60416
          %678 = vst.msk [vmem:[#allocation2] sm:$0xf] %vm677, %v666
          %679 = vst.msk [vmem:[#allocation2 + $0x4] sm:$0xf] %vm677, %v669
          %680 = vst.msk [vmem:[#allocation2 + $0x8] sm:$0xf] %vm677, %v672
          %681 = vst.msk [vmem:[#allocation2 + $0xc] sm:$0xf] %vm677, %v675
          %vm682 = vcmask 7168
          %683 = vst.msk [vmem:[#allocation3] sm:$0xff] %vm682, -1e+30
          %684 = vst.msk [vmem:[#allocation3 + $0x8] sm:$0xff] %vm682, -1e+30
          %685 = vst.msk [vmem:[#allocation3 + $0x10] sm:$0xff] %vm682, -1e+30
          %686 = vst.msk [vmem:[#allocation3 + $0x18] sm:$0xff] %vm682, -1e+30
          %687 = vst.msk [vmem:[#allocation4] sm:$0xff] %vm682, 0.0
          %688 = vst.msk [vmem:[#allocation4 + $0x8] sm:$0xff] %vm682, 0.0
          %689 = vst.msk [vmem:[#allocation4 + $0x10] sm:$0xff] %vm682, 0.0
          %690 = vst.msk [vmem:[#allocation4 + $0x18] sm:$0xff] %vm682, 0.0
          %vm691 = vcmask 64512
          %692 = vst.msk [vmem:[#allocation5] sm:$0xff] %vm691, 0.0
          %693 = vst.msk [vmem:[#allocation5 + $0x8] sm:$0xff] %vm691, 0.0
          %694 = vst.msk [vmem:[#allocation5 + $0x10] sm:$0xff] %vm691, 0.0
          %695 = vst.msk [vmem:[#allocation5 + $0x18] sm:$0xff] %vm691, 0.0
        $region88: #{gpt_forward.7} parent=83 // pred_fallthru
          _
        %s696 = smul.u32 %s37, 8
        %s697 = smul.u32 %s36, 8
        %s698 = sadd.s32 %s697, 7
        %p699 = scmp.le.s32.totalorder %s696, %s698
        // Predicated region
        $region89: #{gpt_forward.7} parent=83 // pred_check
          %p700 = pneg %p699
        $region90: #{gpt_forward.7} parent=83 // pred_check_branch
          %702 = sbr.rel (%p700) target = $region92
        $region91: #{gpt_forward.7} parent=83 // pred_region
          %v703 = vld [vmem:[%s647] sm:$0xf]
          %705 = vrot.lane.b32.xlu0 %v703, 120
          %v706 = vpop.permute.xlu0 %705
          %707 = vrot.lane.b32.xlu0 %v703, 112
          %v708 = vpop.permute.xlu0 %707
          %709 = vrot.lane.b32.xlu0 %v703, 104
          %v710 = vpop.permute.xlu0 %709
          %v711 = vld [vmem:[%s658] sm:$0xf]
          %713 = vrot.lane.b32.xlu0 %v711, 120
          %v714 = vpop.permute.xlu0 %713
          %715 = vrot.lane.b32.xlu0 %v711, 112
          %v716 = vpop.permute.xlu0 %715
          %717 = vrot.lane.b32.xlu0 %v711, 104
          %v718 = vpop.permute.xlu0 %717
          %v719 = vld [vmem:[#allocation2] sm:$0xf]
          %v720 = vld [vmem:[#allocation2 + $0x4] sm:$0xf]
          %v721 = vld [vmem:[#allocation2 + $0x8] sm:$0xf]
          %v722 = vld [vmem:[#allocation2 + $0xc] sm:$0xf]
          %vm723 = vcmask 64512
          %v725 = vsel %vm723, %v719, 0
          %v728 = vsel %vm723, %v703, 0
          %730 = vmatprep.subr.bf16.mxu0 0
          %731 = vmatpush1.bf16.xpose.msra.mxu0 0
          %732 = vmatprep.subr.bf16.mxu0 0
          %733 = vmatpush1.bf16.xpose.msra.mxu0 0
          %734 = vmatprep.subr.bf16.mxu0 0
          %735 = vmatpush1.bf16.xpose.msra.mxu0 0
          %736 = vmatprep.subr.bf16.mxu0 0
          %737 = vmatpush1.bf16.xpose.msra.mxu0 0
          %738 = vmatprep.subr.bf16.mxu0 0
          %739 = vmatpush1.bf16.xpose.msra.mxu0 0
          %740 = vmatprep.subr.bf16.mxu0 0
          %741 = vmatpush1.bf16.xpose.msra.mxu0 0
          %742 = vmatprep.subr.bf16.mxu0 0
          %743 = vmatpush1.bf16.xpose.msra.mxu0 0
          %744 = vmatprep.subr.bf16.mxu0 0
          %745 = vmatpush1.bf16.xpose.msra.mxu0 %v728
          %746 = vmatprep.subr.bf16.mxu0 0
          %747 = vmatpush2.bf16.xpose.msra.mxu0 0
          %748 = vmatprep.subr.bf16.mxu0 0
          %749 = vmatpush2.bf16.xpose.msra.mxu0 0
          %750 = vmatprep.subr.bf16.mxu0 0
          %751 = vmatpush2.bf16.xpose.msra.mxu0 0
          %752 = vmatprep.subr.bf16.mxu0 0
          %753 = vmatpush2.bf16.xpose.msra.mxu0 0
          %754 = vmatprep.subr.bf16.mxu0 0
          %755 = vmatpush2.bf16.xpose.msra.mxu0 0
          %756 = vmatprep.subr.bf16.mxu0 0
          %757 = vmatpush2.bf16.xpose.msra.mxu0 0
          %758 = vmatprep.subr.bf16.mxu0 0
          %759 = vmatpush2.bf16.xpose.msra.mxu0 0
          %760 = vmatprep.subr.bf16.mxu0 0
          %761 = vmatpush2.bf16.xpose.msra.mxu0 0
          %762 = vmatprep.mubr.bf16.mxu0 0
          %763 = vmatmul.mubr.bf16.gmra.mxu0 %v725
          %v764 = vpop.f32.mrf.mxu0
          %v765 = vadd.f32 0.0, %v764
          %v766 = vpop.f32.mrf.mxu0
          %v767 = vpop.f32.mrf.mxu0
          %v768 = vpop.f32.mrf.mxu0
          %769 = vdwg.mxu0
          %v771 = vsel %vm723, %v720, 0
          %v774 = vsel %vm723, %v706, 0
          %776 = vmatprep.subr.bf16.mxu0 0
          %777 = vmatpush1.bf16.xpose.msra.mxu0 0
          %778 = vmatprep.subr.bf16.mxu0 0
          %779 = vmatpush1.bf16.xpose.msra.mxu0 0
          %780 = vmatprep.subr.bf16.mxu0 0
          %781 = vmatpush1.bf16.xpose.msra.mxu0 0
          %782 = vmatprep.subr.bf16.mxu0 0
          %783 = vmatpush1.bf16.xpose.msra.mxu0 0
          %784 = vmatprep.subr.bf16.mxu0 0
          %785 = vmatpush1.bf16.xpose.msra.mxu0 0
          %786 = vmatprep.subr.bf16.mxu0 0
          %787 = vmatpush1.bf16.xpose.msra.mxu0 0
          %788 = vmatprep.subr.bf16.mxu0 0
          %789 = vmatpush1.bf16.xpose.msra.mxu0 0
          %790 = vmatprep.subr.bf16.mxu0 0
          %791 = vmatpush1.bf16.xpose.msra.mxu0 %v774
          %792 = vmatprep.subr.bf16.mxu0 0
          %793 = vmatpush2.bf16.xpose.msra.mxu0 0
          %794 = vmatprep.subr.bf16.mxu0 0
          %795 = vmatpush2.bf16.xpose.msra.mxu0 0
          %796 = vmatprep.subr.bf16.mxu0 0
          %797 = vmatpush2.bf16.xpose.msra.mxu0 0
          %798 = vmatprep.subr.bf16.mxu0 0
          %799 = vmatpush2.bf16.xpose.msra.mxu0 0
          %800 = vmatprep.subr.bf16.mxu0 0
          %801 = vmatpush2.bf16.xpose.msra.mxu0 0
          %802 = vmatprep.subr.bf16.mxu0 0
          %803 = vmatpush2.bf16.xpose.msra.mxu0 0
          %804 = vmatprep.subr.bf16.mxu0 0
          %805 = vmatpush2.bf16.xpose.msra.mxu0 0
          %806 = vmatprep.subr.bf16.mxu0 0
          %807 = vmatpush2.bf16.xpose.msra.mxu0 0
          %808 = vmatprep.mubr.bf16.mxu0 0
          %809 = vmatmul.mubr.bf16.gmra.mxu0 %v771
          %v810 = vpop.f32.mrf.mxu0
          %v811 = vadd.f32 0.0, %v810
          %v812 = vpop.f32.mrf.mxu0
          %v813 = vpop.f32.mrf.mxu0
          %v814 = vpop.f32.mrf.mxu0
          %815 = vdwg.mxu0
          %v817 = vsel %vm723, %v721, 0
          %v820 = vsel %vm723, %v708, 0
          %822 = vmatprep.subr.bf16.mxu0 0
          %823 = vmatpush1.bf16.xpose.msra.mxu0 0
          %824 = vmatprep.subr.bf16.mxu0 0
          %825 = vmatpush1.bf16.xpose.msra.mxu0 0
          %826 = vmatprep.subr.bf16.mxu0 0
          %827 = vmatpush1.bf16.xpose.msra.mxu0 0
          %828 = vmatprep.subr.bf16.mxu0 0
          %829 = vmatpush1.bf16.xpose.msra.mxu0 0
          %830 = vmatprep.subr.bf16.mxu0 0
          %831 = vmatpush1.bf16.xpose.msra.mxu0 0
          %832 = vmatprep.subr.bf16.mxu0 0
          %833 = vmatpush1.bf16.xpose.msra.mxu0 0
          %834 = vmatprep.subr.bf16.mxu0 0
          %835 = vmatpush1.bf16.xpose.msra.mxu0 0
          %836 = vmatprep.subr.bf16.mxu0 0
          %837 = vmatpush1.bf16.xpose.msra.mxu0 %v820
          %838 = vmatprep.subr.bf16.mxu0 0
          %839 = vmatpush2.bf16.xpose.msra.mxu0 0
          %840 = vmatprep.subr.bf16.mxu0 0
          %841 = vmatpush2.bf16.xpose.msra.mxu0 0
          %842 = vmatprep.subr.bf16.mxu0 0
          %843 = vmatpush2.bf16.xpose.msra.mxu0 0
          %844 = vmatprep.subr.bf16.mxu0 0
          %845 = vmatpush2.bf16.xpose.msra.mxu0 0
          %846 = vmatprep.subr.bf16.mxu0 0
          %847 = vmatpush2.bf16.xpose.msra.mxu0 0
          %848 = vmatprep.subr.bf16.mxu0 0
          %849 = vmatpush2.bf16.xpose.msra.mxu0 0
          %850 = vmatprep.subr.bf16.mxu0 0
          %851 = vmatpush2.bf16.xpose.msra.mxu0 0
          %852 = vmatprep.subr.bf16.mxu0 0
          %853 = vmatpush2.bf16.xpose.msra.mxu0 0
          %854 = vmatprep.mubr.bf16.mxu0 0
          %855 = vmatmul.mubr.bf16.gmra.mxu0 %v817
          %v856 = vpop.f32.mrf.mxu0
          %v857 = vadd.f32 0.0, %v856
          %v858 = vpop.f32.mrf.mxu0
          %v859 = vpop.f32.mrf.mxu0
          %v860 = vpop.f32.mrf.mxu0
          %861 = vdwg.mxu0
          %v863 = vsel %vm723, %v722, 0
          %v866 = vsel %vm723, %v710, 0
          %868 = vmatprep.subr.bf16.mxu0 0
          %869 = vmatpush1.bf16.xpose.msra.mxu0 0
          %870 = vmatprep.subr.bf16.mxu0 0
          %871 = vmatpush1.bf16.xpose.msra.mxu0 0
          %872 = vmatprep.subr.bf16.mxu0 0
          %873 = vmatpush1.bf16.xpose.msra.mxu0 0
          %874 = vmatprep.subr.bf16.mxu0 0
          %875 = vmatpush1.bf16.xpose.msra.mxu0 0
          %876 = vmatprep.subr.bf16.mxu0 0
          %877 = vmatpush1.bf16.xpose.msra.mxu0 0
          %878 = vmatprep.subr.bf16.mxu0 0
          %879 = vmatpush1.bf16.xpose.msra.mxu0 0
          %880 = vmatprep.subr.bf16.mxu0 0
          %881 = vmatpush1.bf16.xpose.msra.mxu0 0
          %882 = vmatprep.subr.bf16.mxu0 0
          %883 = vmatpush1.bf16.xpose.msra.mxu0 %v866
          %884 = vmatprep.subr.bf16.mxu0 0
          %885 = vmatpush2.bf16.xpose.msra.mxu0 0
          %886 = vmatprep.subr.bf16.mxu0 0
          %887 = vmatpush2.bf16.xpose.msra.mxu0 0
          %888 = vmatprep.subr.bf16.mxu0 0
          %889 = vmatpush2.bf16.xpose.msra.mxu0 0
          %890 = vmatprep.subr.bf16.mxu0 0
          %891 = vmatpush2.bf16.xpose.msra.mxu0 0
          %892 = vmatprep.subr.bf16.mxu0 0
          %893 = vmatpush2.bf16.xpose.msra.mxu0 0
          %894 = vmatprep.subr.bf16.mxu0 0
          %895 = vmatpush2.bf16.xpose.msra.mxu0 0
          %896 = vmatprep.subr.bf16.mxu0 0
          %897 = vmatpush2.bf16.xpose.msra.mxu0 0
          %898 = vmatprep.subr.bf16.mxu0 0
          %899 = vmatpush2.bf16.xpose.msra.mxu0 0
          %900 = vmatprep.mubr.bf16.mxu0 0
          %901 = vmatmul.mubr.bf16.gmra.mxu0 %v863
          %v902 = vpop.f32.mrf.mxu0
          %v903 = vadd.f32 0.0, %v902
          %v904 = vpop.f32.mrf.mxu0
          %v905 = vpop.f32.mrf.mxu0
          %v906 = vpop.f32.mrf.mxu0
          %907 = vdwg.mxu0
          %v908 = vmul.f32 %v765, 0.35355338
          %v909 = vmul.f32 %v811, 0.35355338
          %v910 = vmul.f32 %v857, 0.35355338
          %v911 = vmul.f32 %v903, 0.35355338
          %v912 = vlaneseq
          %v913 = vshrl.u32 %v912, 7
          %v914 = vstv %s697
          %v915 = vadd.s32 %v914, %v913
          %v916 = vlaneseq
          %v917 = vand.u32 %v916, 127
          %v918 = vstv %s696
          %v919 = vadd.s32 %v918, %v917
          %vm920 = vcmp.le.s32.totalorder %v919, %v915
          %v921 = vsel %vm920, 1, 0
          %vm922 = vcmp.eq.s32.totalorder %v921, 1
          %v923 = vsel %vm922, %v908, -1e+30
          %v924 = vsel %vm922, %v909, -1e+30
          %v925 = vsel %vm922, %v910, -1e+30
          %v926 = vsel %vm922, %v911, -1e+30
          %v927 = vld [vmem:[#allocation3] sm:$0xff]
          %v928 = vld [vmem:[#allocation3 + $0x8] sm:$0xff]
          %v929 = vld [vmem:[#allocation3 + $0x10] sm:$0xff]
          %v930 = vld [vmem:[#allocation3 + $0x18] sm:$0xff]
          %v931 = vsel %vm723, %v923, -inf
          %932 = vmax.xlane.f32.xlu0 %v931
          %v933 = vpop.xlane.xlu0 %932
          %v934 = vsel %vm723, %v924, -inf
          %935 = vmax.xlane.f32.xlu0 %v934
          %v936 = vpop.xlane.xlu0 %935
          %v937 = vsel %vm723, %v925, -inf
          %938 = vmax.xlane.f32.xlu0 %v937
          %v939 = vpop.xlane.xlu0 %938
          %v940 = vsel %vm723, %v926, -inf
          %941 = vmax.xlane.f32.xlu0 %v940
          %v942 = vpop.xlane.xlu0 %941
          %v943 = vmax.f32 %v927, %v933
          %v944 = vmax.f32 %v928, %v936
          %v945 = vmax.f32 %v929, %v939
          %v946 = vmax.f32 %v930, %v942
          %v947 = vsub.f32 %v927, %v943
          %v948 = vsub.f32 %v928, %v944
          %v949 = vsub.f32 %v929, %v945
          %v950 = vsub.f32 %v930, %v946
          %v951 = vmul.f32 %v947, 1.442695
          %v952 = vpow.pop %v951
          %v953 = vmul.f32 %v948, 1.442695
          %v954 = vpow.pop %v953
          %v955 = vmul.f32 %v949, 1.442695
          %v956 = vpow.pop %v955
          %v957 = vmul.f32 %v950, 1.442695
          %v958 = vpow.pop %v957
          %960 = vset.pattern.permute.xlu0 0
          %961 = vperm.xlu0 %960, %v943
          %v962 = vpop.permute.xlu0 %961
          %965 = vset.pattern.permute.xlu0 0
          %966 = vperm.xlu0 %965, %v944
          %v967 = vpop.permute.xlu0 %966
          %970 = vset.pattern.permute.xlu0 0
          %971 = vperm.xlu0 %970, %v945
          %v972 = vpop.permute.xlu0 %971
          %975 = vset.pattern.permute.xlu0 0
          %976 = vperm.xlu0 %975, %v946
          %v977 = vpop.permute.xlu0 %976
          %v979 = vsub.f32 %v923, %v962
          %v980 = vsub.f32 %v924, %v967
          %v981 = vsub.f32 %v925, %v972
          %v982 = vsub.f32 %v926, %v977
          %v983 = vmul.f32 %v979, 1.442695
          %v984 = vpow.pop %v983
          %v985 = vmul.f32 %v980, 1.442695
          %v986 = vpow.pop %v985
          %v987 = vmul.f32 %v981, 1.442695
          %v988 = vpow.pop %v987
          %v989 = vmul.f32 %v982, 1.442695
          %v990 = vpow.pop %v989
          %v991 = vld [vmem:[#allocation4] sm:$0xff]
          %v992 = vld [vmem:[#allocation4 + $0x8] sm:$0xff]
          %v993 = vld [vmem:[#allocation4 + $0x10] sm:$0xff]
          %v994 = vld [vmem:[#allocation4 + $0x18] sm:$0xff]
          %v995 = vmul.f32 %v952, %v991
          %v996 = vmul.f32 %v954, %v992
          %v997 = vmul.f32 %v956, %v993
          %v998 = vmul.f32 %v958, %v994
          %v999 = vsel %vm723, %v984, 0.0
          %1000 = vadd.xlane.f32.xlu0 %v999
          %v1001 = vpop.xlane.xlu0 %1000
          %v1002 = vsel %vm723, %v986, 0.0
          %1003 = vadd.xlane.f32.xlu0 %v1002
          %v1004 = vpop.xlane.xlu0 %1003
          %v1005 = vsel %vm723, %v988, 0.0
          %1006 = vadd.xlane.f32.xlu0 %v1005
          %v1007 = vpop.xlane.xlu0 %1006
          %v1008 = vsel %vm723, %v990, 0.0
          %1009 = vadd.xlane.f32.xlu0 %v1008
          %v1010 = vpop.xlane.xlu0 %1009
          %v1011 = vadd.f32 %v995, %v1001
          %v1012 = vadd.f32 %v996, %v1004
          %v1013 = vadd.f32 %v997, %v1007
          %v1014 = vadd.f32 %v998, %v1010
          %vm1015 = vcmask 7168
          %1016 = vst.msk [vmem:[#allocation4] sm:$0xff] %vm1015, %v1011
          %1017 = vst.msk [vmem:[#allocation4 + $0x8] sm:$0xff] %vm1015, %v1012
          %1018 = vst.msk [vmem:[#allocation4 + $0x10] sm:$0xff] %vm1015, %v1013
          %1019 = vst.msk [vmem:[#allocation4 + $0x18] sm:$0xff] %vm1015, %v1014
          %v1020 = vld [vmem:[#allocation5] sm:$0xff]
          %v1021 = vld [vmem:[#allocation5 + $0x8] sm:$0xff]
          %v1022 = vld [vmem:[#allocation5 + $0x10] sm:$0xff]
          %v1023 = vld [vmem:[#allocation5 + $0x18] sm:$0xff]
          %1025 = vset.pattern.permute.xlu0 0
          %1026 = vperm.xlu0 %1025, %v952
          %v1027 = vpop.permute.xlu0 %1026
          %1030 = vset.pattern.permute.xlu0 0
          %1031 = vperm.xlu0 %1030, %v954
          %v1032 = vpop.permute.xlu0 %1031
          %1035 = vset.pattern.permute.xlu0 0
          %1036 = vperm.xlu0 %1035, %v956
          %v1037 = vpop.permute.xlu0 %1036
          %1040 = vset.pattern.permute.xlu0 0
          %1041 = vperm.xlu0 %1040, %v958
          %v1042 = vpop.permute.xlu0 %1041
          %v1044 = vmul.f32 %v1027, %v1020
          %v1045 = vmul.f32 %v1032, %v1021
          %v1046 = vmul.f32 %v1037, %v1022
          %v1047 = vmul.f32 %v1042, %v1023
          %v1048 = vpack.c.bf16 %v984, %v984
          %v1049 = vpack.c.bf16 %v986, %v986
          %v1050 = vpack.c.bf16 %v988, %v988
          %v1051 = vpack.c.bf16 %v990, %v990
          %v1053 = vsel %vm723, %v1048, 0
          %vm1055 = vcmask 1043456
          %v1057 = vsel %vm1055, %v711, 0
          %1059 = vmatprep.subr.bf16.mxu0 0
          %1060 = vmatpush1.bf16.msra.mxu0 0
          %1061 = vmatprep.subr.bf16.mxu0 0
          %1062 = vmatpush1.bf16.msra.mxu0 0
          %1063 = vmatprep.subr.bf16.mxu0 0
          %1064 = vmatpush1.bf16.msra.mxu0 0
          %1065 = vmatprep.subr.bf16.mxu0 0
          %1066 = vmatpush1.bf16.msra.mxu0 0
          %1067 = vmatprep.subr.bf16.mxu0 0
          %1068 = vmatpush1.bf16.msra.mxu0 0
          %1069 = vmatprep.subr.bf16.mxu0 0
          %1070 = vmatpush1.bf16.msra.mxu0 0
          %1071 = vmatprep.subr.bf16.mxu0 0
          %1072 = vmatpush1.bf16.msra.mxu0 0
          %1073 = vmatprep.subr.bf16.mxu0 0
          %1074 = vmatpush1.bf16.msra.mxu0 %v1057
          %1075 = vmatprep.subr.bf16.mxu0 0
          %1076 = vmatpush2.bf16.msra.mxu0 0
          %1077 = vmatprep.subr.bf16.mxu0 0
          %1078 = vmatpush2.bf16.msra.mxu0 0
          %1079 = vmatprep.subr.bf16.mxu0 0
          %1080 = vmatpush2.bf16.msra.mxu0 0
          %1081 = vmatprep.subr.bf16.mxu0 0
          %1082 = vmatpush2.bf16.msra.mxu0 0
          %1083 = vmatprep.subr.bf16.mxu0 0
          %1084 = vmatpush2.bf16.msra.mxu0 0
          %1085 = vmatprep.subr.bf16.mxu0 0
          %1086 = vmatpush2.bf16.msra.mxu0 0
          %1087 = vmatprep.subr.bf16.mxu0 0
          %1088 = vmatpush2.bf16.msra.mxu0 0
          %1089 = vmatprep.subr.bf16.mxu0 0
          %1090 = vmatpush2.bf16.msra.mxu0 0
          %1091 = vmatprep.mubr.bf16.mxu0 0
          %1092 = vmatmul.mubr.bf16.gmra.mxu0 %v1053
          %v1093 = vpop.f32.mrf.mxu0
          %v1094 = vadd.f32 0.0, %v1093
          %v1095 = vpop.f32.mrf.mxu0
          %v1096 = vpop.f32.mrf.mxu0
          %v1097 = vpop.f32.mrf.mxu0
          %1098 = vdwg.mxu0
          %v1100 = vsel %vm723, %v1049, 0
          %v1103 = vsel %vm1055, %v714, 0
          %1105 = vmatprep.subr.bf16.mxu0 0
          %1106 = vmatpush1.bf16.msra.mxu0 0
          %1107 = vmatprep.subr.bf16.mxu0 0
          %1108 = vmatpush1.bf16.msra.mxu0 0
          %1109 = vmatprep.subr.bf16.mxu0 0
          %1110 = vmatpush1.bf16.msra.mxu0 0
          %1111 = vmatprep.subr.bf16.mxu0 0
          %1112 = vmatpush1.bf16.msra.mxu0 0
          %1113 = vmatprep.subr.bf16.mxu0 0
          %1114 = vmatpush1.bf16.msra.mxu0 0
          %1115 = vmatprep.subr.bf16.mxu0 0
          %1116 = vmatpush1.bf16.msra.mxu0 0
          %1117 = vmatprep.subr.bf16.mxu0 0
          %1118 = vmatpush1.bf16.msra.mxu0 0
          %1119 = vmatprep.subr.bf16.mxu0 0
          %1120 = vmatpush1.bf16.msra.mxu0 %v1103
          %1121 = vmatprep.subr.bf16.mxu0 0
          %1122 = vmatpush2.bf16.msra.mxu0 0
          %1123 = vmatprep.subr.bf16.mxu0 0
          %1124 = vmatpush2.bf16.msra.mxu0 0
          %1125 = vmatprep.subr.bf16.mxu0 0
          %1126 = vmatpush2.bf16.msra.mxu0 0
          %1127 = vmatprep.subr.bf16.mxu0 0
          %1128 = vmatpush2.bf16.msra.mxu0 0
          %1129 = vmatprep.subr.bf16.mxu0 0
          %1130 = vmatpush2.bf16.msra.mxu0 0
          %1131 = vmatprep.subr.bf16.mxu0 0
          %1132 = vmatpush2.bf16.msra.mxu0 0
          %1133 = vmatprep.subr.bf16.mxu0 0
          %1134 = vmatpush2.bf16.msra.mxu0 0
          %1135 = vmatprep.subr.bf16.mxu0 0
          %1136 = vmatpush2.bf16.msra.mxu0 0
          %1137 = vmatprep.mubr.bf16.mxu0 0
          %1138 = vmatmul.mubr.bf16.gmra.mxu0 %v1100
          %v1139 = vpop.f32.mrf.mxu0
          %v1140 = vadd.f32 0.0, %v1139
          %v1141 = vpop.f32.mrf.mxu0
          %v1142 = vpop.f32.mrf.mxu0
          %v1143 = vpop.f32.mrf.mxu0
          %1144 = vdwg.mxu0
          %v1146 = vsel %vm723, %v1050, 0
          %v1149 = vsel %vm1055, %v716, 0
          %1151 = vmatprep.subr.bf16.mxu0 0
          %1152 = vmatpush1.bf16.msra.mxu0 0
          %1153 = vmatprep.subr.bf16.mxu0 0
          %1154 = vmatpush1.bf16.msra.mxu0 0
          %1155 = vmatprep.subr.bf16.mxu0 0
          %1156 = vmatpush1.bf16.msra.mxu0 0
          %1157 = vmatprep.subr.bf16.mxu0 0
          %1158 = vmatpush1.bf16.msra.mxu0 0
          %1159 = vmatprep.subr.bf16.mxu0 0
          %1160 = vmatpush1.bf16.msra.mxu0 0
          %1161 = vmatprep.subr.bf16.mxu0 0
          %1162 = vmatpush1.bf16.msra.mxu0 0
          %1163 = vmatprep.subr.bf16.mxu0 0
          %1164 = vmatpush1.bf16.msra.mxu0 0
          %1165 = vmatprep.subr.bf16.mxu0 0
          %1166 = vmatpush1.bf16.msra.mxu0 %v1149
          %1167 = vmatprep.subr.bf16.mxu0 0
          %1168 = vmatpush2.bf16.msra.mxu0 0
          %1169 = vmatprep.subr.bf16.mxu0 0
          %1170 = vmatpush2.bf16.msra.mxu0 0
          %1171 = vmatprep.subr.bf16.mxu0 0
          %1172 = vmatpush2.bf16.msra.mxu0 0
          %1173 = vmatprep.subr.bf16.mxu0 0
          %1174 = vmatpush2.bf16.msra.mxu0 0
          %1175 = vmatprep.subr.bf16.mxu0 0
          %1176 = vmatpush2.bf16.msra.mxu0 0
          %1177 = vmatprep.subr.bf16.mxu0 0
          %1178 = vmatpush2.bf16.msra.mxu0 0
          %1179 = vmatprep.subr.bf16.mxu0 0
          %1180 = vmatpush2.bf16.msra.mxu0 0
          %1181 = vmatprep.subr.bf16.mxu0 0
          %1182 = vmatpush2.bf16.msra.mxu0 0
          %1183 = vmatprep.mubr.bf16.mxu0 0
          %1184 = vmatmul.mubr.bf16.gmra.mxu0 %v1146
          %v1185 = vpop.f32.mrf.mxu0
          %v1186 = vadd.f32 0.0, %v1185
          %v1187 = vpop.f32.mrf.mxu0
          %v1188 = vpop.f32.mrf.mxu0
          %v1189 = vpop.f32.mrf.mxu0
          %1190 = vdwg.mxu0
          %v1192 = vsel %vm723, %v1051, 0
          %v1195 = vsel %vm1055, %v718, 0
          %1197 = vmatprep.subr.bf16.mxu0 0
          %1198 = vmatpush1.bf16.msra.mxu0 0
          %1199 = vmatprep.subr.bf16.mxu0 0
          %1200 = vmatpush1.bf16.msra.mxu0 0
          %1201 = vmatprep.subr.bf16.mxu0 0
          %1202 = vmatpush1.bf16.msra.mxu0 0
          %1203 = vmatprep.subr.bf16.mxu0 0
          %1204 = vmatpush1.bf16.msra.mxu0 0
          %1205 = vmatprep.subr.bf16.mxu0 0
          %1206 = vmatpush1.bf16.msra.mxu0 0
          %1207 = vmatprep.subr.bf16.mxu0 0
          %1208 = vmatpush1.bf16.msra.mxu0 0
          %1209 = vmatprep.subr.bf16.mxu0 0
          %1210 = vmatpush1.bf16.msra.mxu0 0
          %1211 = vmatprep.subr.bf16.mxu0 0
          %1212 = vmatpush1.bf16.msra.mxu0 %v1195
          %1213 = vmatprep.subr.bf16.mxu0 0
          %1214 = vmatpush2.bf16.msra.mxu0 0
          %1215 = vmatprep.subr.bf16.mxu0 0
          %1216 = vmatpush2.bf16.msra.mxu0 0
          %1217 = vmatprep.subr.bf16.mxu0 0
          %1218 = vmatpush2.bf16.msra.mxu0 0
          %1219 = vmatprep.subr.bf16.mxu0 0
          %1220 = vmatpush2.bf16.msra.mxu0 0
          %1221 = vmatprep.subr.bf16.mxu0 0
          %1222 = vmatpush2.bf16.msra.mxu0 0
          %1223 = vmatprep.subr.bf16.mxu0 0
          %1224 = vmatpush2.bf16.msra.mxu0 0
          %1225 = vmatprep.subr.bf16.mxu0 0
          %1226 = vmatpush2.bf16.msra.mxu0 0
          %1227 = vmatprep.subr.bf16.mxu0 0
          %1228 = vmatpush2.bf16.msra.mxu0 0
          %1229 = vmatprep.mubr.bf16.mxu0 0
          %1230 = vmatmul.mubr.bf16.gmra.mxu0 %v1192
          %v1231 = vpop.f32.mrf.mxu0
          %v1232 = vadd.f32 0.0, %v1231
          %v1233 = vpop.f32.mrf.mxu0
          %v1234 = vpop.f32.mrf.mxu0
          %v1235 = vpop.f32.mrf.mxu0
          %1236 = vdwg.mxu0
          %v1237 = vadd.f32 %v1044, %v1094
          %v1238 = vadd.f32 %v1045, %v1140
          %v1239 = vadd.f32 %v1046, %v1186
          %v1240 = vadd.f32 %v1047, %v1232
          %1241 = vst.msk [vmem:[#allocation5] sm:$0xff] %vm723, %v1237
          %1242 = vst.msk [vmem:[#allocation5 + $0x8] sm:$0xff] %vm723, %v1238
          %1243 = vst.msk [vmem:[#allocation5 + $0x10] sm:$0xff] %vm723, %v1239
          %1244 = vst.msk [vmem:[#allocation5 + $0x18] sm:$0xff] %vm723, %v1240
          %1245 = vst.msk [vmem:[#allocation3] sm:$0xff] %vm1015, %v943
          %1246 = vst.msk [vmem:[#allocation3 + $0x8] sm:$0xff] %vm1015, %v944
          %1247 = vst.msk [vmem:[#allocation3 + $0x10] sm:$0xff] %vm1015, %v945
          %1248 = vst.msk [vmem:[#allocation3 + $0x18] sm:$0xff] %vm1015, %v946
        $region92: #{gpt_forward.7} parent=83 // pred_fallthru
          _
        // Predicated region
        $region93: #{gpt_forward.7} parent=83 // pred_check
          %p1249 = pneg %p662
        $region94: #{gpt_forward.7} parent=83 // pred_check_branch
          %1251 = sbr.rel (%p1249) target = $region96
        $region95: #{gpt_forward.7} parent=83 // pred_region
          %v1252 = vld [vmem:[#allocation5] sm:$0xff]
          %v1253 = vld [vmem:[#allocation5 + $0x8] sm:$0xff]
          %v1254 = vld [vmem:[#allocation5 + $0x10] sm:$0xff]
          %v1255 = vld [vmem:[#allocation5 + $0x18] sm:$0xff]
          %v1256 = vld [vmem:[#allocation4] sm:$0xff]
          %v1257 = vld [vmem:[#allocation4 + $0x8] sm:$0xff]
          %v1258 = vld [vmem:[#allocation4 + $0x10] sm:$0xff]
          %v1259 = vld [vmem:[#allocation4 + $0x18] sm:$0xff]
          %v1260 = vrcp.pop %v1256
          %v1261 = vrcp.pop %v1257
          %v1262 = vrcp.pop %v1258
          %v1263 = vrcp.pop %v1259
          %1265 = vset.pattern.permute.xlu0 0
          %1266 = vperm.xlu0 %1265, %v1260
          %v1267 = vpop.permute.xlu0 %1266
          %1270 = vset.pattern.permute.xlu0 0
          %1271 = vperm.xlu0 %1270, %v1261
          %v1272 = vpop.permute.xlu0 %1271
          %1275 = vset.pattern.permute.xlu0 0
          %1276 = vperm.xlu0 %1275, %v1262
          %v1277 = vpop.permute.xlu0 %1276
          %1280 = vset.pattern.permute.xlu0 0
          %1281 = vperm.xlu0 %1280, %v1263
          %v1282 = vpop.permute.xlu0 %1281
          %v1284 = vmul.f32 %v1252, %v1267
          %v1285 = vmul.f32 %v1253, %v1272
          %v1286 = vmul.f32 %v1254, %v1277
          %v1287 = vmul.f32 %v1255, %v1282
          %1289 = vrot.lane.b32.xlu0 %v1285, 8
          %v1290 = vpop.permute.xlu0 %1289
          %1293 = vrot.lane.b32.xlu0 %v1286, 16
          %v1294 = vpop.permute.xlu0 %1293
          %1297 = vrot.lane.b32.xlu0 %v1287, 24
          %v1298 = vpop.permute.xlu0 %1297
          %vm1300 = vcmask 64512
          %v1301 = vsel %vm1300, %v1284, %v1290
          %vm1302 = vcmask 130048
          %v1303 = vsel %vm1302, %v1301, %v1294
          %vm1304 = vcmask 195584
          %v1305 = vsel %vm1304, %v1303, %v1298
          %v1306 = vpack.c.bf16 %v1305, %v1305
          %v1307 = vld [vmem:[%s6] sm:$0xf]
          %v1308 = vld [vmem:[%s6 + $0x4] sm:$0xf]
          %v1309 = vld [vmem:[%s6 + $0x8] sm:$0xf]
          %v1310 = vld [vmem:[%s6 + $0xc] sm:$0xf]
          %v1311 = vld [vmem:[%s7] sm:$0x1]
          %v1313 = vlaneseq
          %v1314 = vshrl.u32 %v1313, 7
          %v1315 = vsub.s32 0, %v1314
          %v1316 = vrot.slane %v1311, %v1315
          %v1322 = vunpack.c.l.b16 %v1307
          %v1323 = vunpack.c.l.b16 %v1308
          %v1324 = vunpack.c.l.b16 %v1309
          %v1325 = vunpack.c.l.b16 %v1310
          %v1326 = vpack.c.b16 %v1323, %v1322
          %v1327 = vpack.c.b16 %v1325, %v1324
          %vm1330 = vcmask 261120
          %v1332 = vsel %vm1330, %v1306, 0
          %1334 = vmatprep.subr.bf16.mxu0 0
          %1335 = vmatpush1.bf16.msra.mxu0 0
          %1336 = vmatprep.subr.bf16.mxu0 0
          %1337 = vmatpush1.bf16.msra.mxu0 0
          %1338 = vmatprep.subr.bf16.mxu0 0
          %1339 = vmatpush1.bf16.msra.mxu0 0
          %1340 = vmatprep.subr.bf16.mxu0 0
          %1341 = vmatpush1.bf16.msra.mxu0 0
          %1342 = vmatprep.subr.bf16.mxu0 0
          %1343 = vmatpush1.bf16.msra.mxu0 0
          %1344 = vmatprep.subr.bf16.mxu0 0
          %1345 = vmatpush1.bf16.msra.mxu0 0
          %1346 = vmatprep.subr.bf16.mxu0 0
          %1347 = vmatpush1.bf16.msra.mxu0 %v1327
          %1348 = vmatprep.subr.bf16.mxu0 0
          %1349 = vmatpush1.bf16.msra.mxu0 %v1326
          %1350 = vmatprep.subr.bf16.mxu0 0
          %1351 = vmatpush2.bf16.msra.mxu0 0
          %1352 = vmatprep.subr.bf16.mxu0 0
          %1353 = vmatpush2.bf16.msra.mxu0 0
          %1354 = vmatprep.subr.bf16.mxu0 0
          %1355 = vmatpush2.bf16.msra.mxu0 0
          %1356 = vmatprep.subr.bf16.mxu0 0
          %1357 = vmatpush2.bf16.msra.mxu0 0
          %1358 = vmatprep.subr.bf16.mxu0 0
          %1359 = vmatpush2.bf16.msra.mxu0 0
          %1360 = vmatprep.subr.bf16.mxu0 0
          %1361 = vmatpush2.bf16.msra.mxu0 0
          %1362 = vmatprep.subr.bf16.mxu0 0
          %1363 = vmatpush2.bf16.msra.mxu0 0
          %1364 = vmatprep.subr.bf16.mxu0 0
          %1365 = vmatpush2.bf16.msra.mxu0 0
          %1366 = vmatprep.mubr.bf16.mxu0 0
          %1367 = vmatmul.mubr.bf16.gmra.mxu0 %v1332
          %v1368 = vpop.f32.mrf.mxu0
          %v1369 = vadd.f32 %v1316, %v1368
          %v1370 = vpop.f32.mrf.mxu0
          %v1371 = vpop.f32.mrf.mxu0
          %v1372 = vpop.f32.mrf.mxu0
          %1373 = vdwg.mxu0
          %v1374 = vld [vmem:[%s631] sm:$0xff]
          %v1375 = vld [vmem:[%s4] sm:$0x1]
          %v1376 = vld [vmem:[%s5] sm:$0x1]
          %v1377 = vsel %vm1330, %v1374, 0.0
          %1378 = vadd.xlane.f32.xlu0 %v1377
          %v1379 = vpop.xlane.xlu0 %1378
          %v1380 = vrcp.pop 32.0
          %v1381 = vmul.f32 %v1379, %v1380
          %v1382 = vsub.f32 %v1374, %v1381
          %v1383 = vmul.f32 %v1382, %v1382
          %v1384 = vsel %vm1330, %v1383, 0.0
          %1385 = vadd.xlane.f32.xlu0 %v1384
          %v1386 = vpop.xlane.xlu0 %1385
          %v1387 = vmul.f32 %v1386, %v1380
          %v1388 = vadd.f32 %v1387, 1e-05
          %v1389 = vrsqrt.pop %v1388
          %v1390 = vmul.f32 %v1382, %v1389
          %v1392 = vlaneseq
          %v1393 = vshrl.u32 %v1392, 7
          %v1394 = vsub.s32 0, %v1393
          %v1395 = vrot.slane %v1375, %v1394
          %v1397 = vmul.f32 %v1390, %v1395
          %v1399 = vlaneseq
          %v1400 = vshrl.u32 %v1399, 7
          %v1401 = vsub.s32 0, %v1400
          %v1402 = vrot.slane %v1376, %v1401
          %v1404 = vadd.f32 %v1397, %v1402
          %v1405 = vadd.f32 %v1404, %v1369
          %v1406 = vld [vmem:[%s8] sm:$0x1]
          %v1407 = vld [vmem:[%s9] sm:$0x1]
          %v1408 = vsel %vm1330, %v1405, 0.0
          %1409 = vadd.xlane.f32.xlu0 %v1408
          %v1410 = vpop.xlane.xlu0 %1409
          %v1411 = vmul.f32 %v1410, %v1380
          %v1412 = vsub.f32 %v1405, %v1411
          %v1413 = vmul.f32 %v1412, %v1412
          %v1414 = vsel %vm1330, %v1413, 0.0
          %1415 = vadd.xlane.f32.xlu0 %v1414
          %v1416 = vpop.xlane.xlu0 %1415
          %v1417 = vmul.f32 %v1416, %v1380
          %v1418 = vadd.f32 %v1417, 1e-05
          %v1419 = vrsqrt.pop %v1418
          %v1420 = vmul.f32 %v1412, %v1419
          %v1422 = vlaneseq
          %v1423 = vshrl.u32 %v1422, 7
          %v1424 = vsub.s32 0, %v1423
          %v1425 = vrot.slane %v1406, %v1424
          %v1427 = vmul.f32 %v1420, %v1425
          %v1429 = vlaneseq
          %v1430 = vshrl.u32 %v1429, 7
          %v1431 = vsub.s32 0, %v1430
          %v1432 = vrot.slane %v1407, %v1431
          %v1434 = vadd.f32 %v1427, %v1432
          %v1435 = vpack.c.bf16 %v1434, %v1434
          %v1436 = vld [vmem:[%s10] sm:$0xf]
          %v1437 = vld [vmem:[%s10 + $0x4] sm:$0xf]
          %v1438 = vld [vmem:[%s10 + $0x8] sm:$0xf]
          %v1439 = vld [vmem:[%s10 + $0xc] sm:$0xf]
          %v1440 = vld [vmem:[%s11] sm:$0x1]
          %v1442 = vlaneseq
          %v1443 = vshrl.u32 %v1442, 7
          %v1444 = vsub.s32 0, %v1443
          %v1445 = vrot.slane %v1440, %v1444
          %v1451 = vunpack.c.l.b16 %v1436
          %v1452 = vunpack.c.l.b16 %v1437
          %v1453 = vunpack.c.l.b16 %v1438
          %v1454 = vunpack.c.l.b16 %v1439
          %v1455 = vpack.c.b16 %v1452, %v1451
          %v1456 = vpack.c.b16 %v1454, %v1453
          %v1460 = vsel %vm1330, %v1435, 0
          %1462 = vmatprep.subr.bf16.mxu0 0
          %1463 = vmatpush1.bf16.msra.mxu0 0
          %1464 = vmatprep.subr.bf16.mxu0 0
          %1465 = vmatpush1.bf16.msra.mxu0 0
          %1466 = vmatprep.subr.bf16.mxu0 0
          %1467 = vmatpush1.bf16.msra.mxu0 0
          %1468 = vmatprep.subr.bf16.mxu0 0
          %1469 = vmatpush1.bf16.msra.mxu0 0
          %1470 = vmatprep.subr.bf16.mxu0 0
          %1471 = vmatpush1.bf16.msra.mxu0 0
          %1472 = vmatprep.subr.bf16.mxu0 0
          %1473 = vmatpush1.bf16.msra.mxu0 0
          %1474 = vmatprep.subr.bf16.mxu0 0
          %1475 = vmatpush1.bf16.msra.mxu0 %v1456
          %1476 = vmatprep.subr.bf16.mxu0 0
          %1477 = vmatpush1.bf16.msra.mxu0 %v1455
          %1478 = vmatprep.subr.bf16.mxu0 0
          %1479 = vmatpush2.bf16.msra.mxu0 0
          %1480 = vmatprep.subr.bf16.mxu0 0
          %1481 = vmatpush2.bf16.msra.mxu0 0
          %1482 = vmatprep.subr.bf16.mxu0 0
          %1483 = vmatpush2.bf16.msra.mxu0 0
          %1484 = vmatprep.subr.bf16.mxu0 0
          %1485 = vmatpush2.bf16.msra.mxu0 0
          %1486 = vmatprep.subr.bf16.mxu0 0
          %1487 = vmatpush2.bf16.msra.mxu0 0
          %1488 = vmatprep.subr.bf16.mxu0 0
          %1489 = vmatpush2.bf16.msra.mxu0 0
          %1490 = vmatprep.subr.bf16.mxu0 0
          %1491 = vmatpush2.bf16.msra.mxu0 0
          %1492 = vmatprep.subr.bf16.mxu0 0
          %1493 = vmatpush2.bf16.msra.mxu0 0
          %1494 = vmatprep.mubr.bf16.mxu0 0
          %1495 = vmatmul.mubr.bf16.gmra.mxu0 %v1460
          %v1496 = vpop.f32.mrf.mxu0
          %v1497 = vadd.f32 %v1445, %v1496
          %v1498 = vpop.f32.mrf.mxu0
          %v1499 = vpop.f32.mrf.mxu0
          %v1500 = vpop.f32.mrf.mxu0
          %1501 = vdwg.mxu0
          %v1502 = vmul.f32 %v1497, 0.5
          %v1503 = vmul.f32 %v1497, 0.70710677
          %v1504 = verf.f32.pop %v1503
          %v1505 = vadd.f32 %v1504, 1.0
          %v1506 = vmul.f32 %v1502, %v1505
          %v1507 = vpack.c.bf16 %v1506, %v1506
          %v1508 = vld [vmem:[%s12] sm:$0xf]
          %v1509 = vld [vmem:[%s12 + $0x4] sm:$0xf]
          %v1510 = vld [vmem:[%s12 + $0x8] sm:$0xf]
          %v1511 = vld [vmem:[%s12 + $0xc] sm:$0xf]
          %v1512 = vld [vmem:[%s12 + $0x10] sm:$0xf]
          %v1513 = vld [vmem:[%s12 + $0x14] sm:$0xf]
          %v1514 = vld [vmem:[%s12 + $0x18] sm:$0xf]
          %v1515 = vld [vmem:[%s12 + $0x1c] sm:$0xf]
          %v1516 = vld [vmem:[%s12 + $0x20] sm:$0xf]
          %v1517 = vld [vmem:[%s12 + $0x24] sm:$0xf]
          %v1518 = vld [vmem:[%s12 + $0x28] sm:$0xf]
          %v1519 = vld [vmem:[%s12 + $0x2c] sm:$0xf]
          %v1520 = vld [vmem:[%s12 + $0x30] sm:$0xf]
          %v1521 = vld [vmem:[%s12 + $0x34] sm:$0xf]
          %v1522 = vld [vmem:[%s12 + $0x38] sm:$0xf]
          %v1523 = vld [vmem:[%s12 + $0x3c] sm:$0xf]
          %v1524 = vld [vmem:[%s13] sm:$0x1]
          %v1526 = vlaneseq
          %v1527 = vshrl.u32 %v1526, 7
          %v1528 = vsub.s32 0, %v1527
          %v1529 = vrot.slane %v1524, %v1528
          %v1547 = vunpack.c.l.b16 %v1508
          %v1548 = vunpack.c.l.b16 %v1509
          %v1549 = vunpack.c.l.b16 %v1510
          %v1550 = vunpack.c.l.b16 %v1511
          %v1551 = vunpack.c.l.b16 %v1512
          %v1552 = vunpack.c.l.b16 %v1513
          %v1553 = vunpack.c.l.b16 %v1514
          %v1554 = vunpack.c.l.b16 %v1515
          %v1555 = vunpack.c.l.b16 %v1516
          %v1556 = vunpack.c.l.b16 %v1517
          %v1557 = vunpack.c.l.b16 %v1518
          %v1558 = vunpack.c.l.b16 %v1519
          %v1559 = vunpack.c.l.b16 %v1520
          %v1560 = vunpack.c.l.b16 %v1521
          %v1561 = vunpack.c.l.b16 %v1522
          %v1562 = vunpack.c.l.b16 %v1523
          %v1563 = vpack.c.b16 %v1548, %v1547
          %v1564 = vpack.c.b16 %v1550, %v1549
          %v1565 = vpack.c.b16 %v1552, %v1551
          %v1566 = vpack.c.b16 %v1554, %v1553
          %v1567 = vpack.c.b16 %v1556, %v1555
          %v1568 = vpack.c.b16 %v1558, %v1557
          %v1569 = vpack.c.b16 %v1560, %v1559
          %v1570 = vpack.c.b16 %v1562, %v1561
          %1579 = vmatprep.subr.bf16.mxu0 0
          %1580 = vmatpush1.bf16.msra.mxu0 %v1570
          %1581 = vmatprep.subr.bf16.mxu0 0
          %1582 = vmatpush1.bf16.msra.mxu0 %v1569
          %1583 = vmatprep.subr.bf16.mxu0 0
          %1584 = vmatpush1.bf16.msra.mxu0 %v1568
          %1585 = vmatprep.subr.bf16.mxu0 0
          %1586 = vmatpush1.bf16.msra.mxu0 %v1567
          %1587 = vmatprep.subr.bf16.mxu0 0
          %1588 = vmatpush1.bf16.msra.mxu0 %v1566
          %1589 = vmatprep.subr.bf16.mxu0 0
          %1590 = vmatpush1.bf16.msra.mxu0 %v1565
          %1591 = vmatprep.subr.bf16.mxu0 0
          %1592 = vmatpush1.bf16.msra.mxu0 %v1564
          %1593 = vmatprep.subr.bf16.mxu0 0
          %1594 = vmatpush1.bf16.msra.mxu0 %v1563
          %1595 = vmatprep.subr.bf16.mxu0 0
          %1596 = vmatpush2.bf16.msra.mxu0 0
          %1597 = vmatprep.subr.bf16.mxu0 0
          %1598 = vmatpush2.bf16.msra.mxu0 0
          %1599 = vmatprep.subr.bf16.mxu0 0
          %1600 = vmatpush2.bf16.msra.mxu0 0
          %1601 = vmatprep.subr.bf16.mxu0 0
          %1602 = vmatpush2.bf16.msra.mxu0 0
          %1603 = vmatprep.subr.bf16.mxu0 0
          %1604 = vmatpush2.bf16.msra.mxu0 0
          %1605 = vmatprep.subr.bf16.mxu0 0
          %1606 = vmatpush2.bf16.msra.mxu0 0
          %1607 = vmatprep.subr.bf16.mxu0 0
          %1608 = vmatpush2.bf16.msra.mxu0 0
          %1609 = vmatprep.subr.bf16.mxu0 0
          %1610 = vmatpush2.bf16.msra.mxu0 0
          %1611 = vmatprep.mubr.bf16.mxu0 0
          %1612 = vmatmul.mubr.bf16.gmra.mxu0 %v1507
          %v1613 = vpop.f32.mrf.mxu0
          %v1614 = vadd.f32 %v1529, %v1613
          %v1615 = vpop.f32.mrf.mxu0
          %v1616 = vpop.f32.mrf.mxu0
          %v1617 = vpop.f32.mrf.mxu0
          %1618 = vdwg.mxu0
          %v1619 = vadd.f32 %v1434, %v1614
          %v1620 = vld [vmem:[%s14] sm:$0x1]
          %v1621 = vld [vmem:[%s15] sm:$0x1]
          %v1622 = vsel %vm1330, %v1619, 0.0
          %1623 = vadd.xlane.f32.xlu0 %v1622
          %v1624 = vpop.xlane.xlu0 %1623
          %v1625 = vmul.f32 %v1624, %v1380
          %v1626 = vsub.f32 %v1619, %v1625
          %v1627 = vmul.f32 %v1626, %v1626
          %v1628 = vsel %vm1330, %v1627, 0.0
          %1629 = vadd.xlane.f32.xlu0 %v1628
          %v1630 = vpop.xlane.xlu0 %1629
          %v1631 = vmul.f32 %v1630, %v1380
          %v1632 = vadd.f32 %v1631, 1e-05
          %v1633 = vrsqrt.pop %v1632
          %v1634 = vmul.f32 %v1626, %v1633
          %v1636 = vlaneseq
          %v1637 = vshrl.u32 %v1636, 7
          %v1638 = vsub.s32 0, %v1637
          %v1639 = vrot.slane %v1620, %v1638
          %v1641 = vmul.f32 %v1634, %v1639
          %v1643 = vlaneseq
          %v1644 = vshrl.u32 %v1643, 7
          %v1645 = vsub.s32 0, %v1644
          %v1646 = vrot.slane %v1621, %v1645
          %v1648 = vadd.f32 %v1641, %v1646
          %1649 = vst.msk [vmem:[%s624] sm:$0xff] %vm1330, %v1648
        $region96: #{gpt_forward.7} parent=83 // pred_fallthru
          _
        %s1650 = sand.u32 %s431, 1
        %s1651 = scalar_lea.sflag [#allocation7], %s1650
        %s1652 = sand.u32 %s431, 1
        %s1653 = smul.addr %s1652, 8
        %s1654 = scalar_lea.vmem [#allocation6], %s1653
        // Predicated region
        $region97: #{gpt_forward.7} parent=83 // pred_check
          %p1655 = pneg %p441
        $region98: #{gpt_forward.7} parent=83 // pred_check_branch
          %1657 = sbr.rel (%p1655) target = $region100
        $region99: #{gpt_forward.7} parent=83 // pred_region
          %s1659 = ssub.s32 128, 128
          %1660 = vsyncadd %s1651, %s1659
          %s1661 = sadd.s32 %s36, %s35
          %s1662 = smul.addr %s1661, 128
          %s1663 = scalar_lea.hbm %s16, %s1662
          %s1665 = sshll.u32 %s1654, 4
          %s1666 = int_to_ptr.vmem [resolvable:$true] %s1665
          %1668 = dma.vmem_to_hbm [thread:$0]  %s1666, 128, %s1663, %s1651
        $region100: #{gpt_forward.7} parent=83 // pred_fallthru
          _
      $region84: #{gpt_forward.7} parent=5 // pred_fallthru
        _
      %p1669 = scmp.le.s32.totalorder 2, %s25
      // Predicated region
      $region101: #{gpt_forward.7} parent=5 // pred_check
        %p1670 = pneg %p1669
      $region102: #{gpt_forward.7} parent=5 // pred_check_branch
        %1672 = sbr.rel (%p1670) target = $region104
      $region103: #{gpt_forward.7} parent=5 // pred_region
        %s1673 = ssub.s32 %s25, 2
        // Predicated region
        $region105: #{gpt_forward.7} parent=103 // pred_check
          %p1674 = pneg %p447
        $region106: #{gpt_forward.7} parent=103 // pred_check_branch
          %1676 = sbr.rel (%p1674) target = $region108
        $region107: #{gpt_forward.7} parent=103 // pred_region
          %s1677 = sand.u32 %s432, 1
          %s1678 = scalar_lea.sflag [#allocation7], %s1677
          %s1679 = sand.u32 %s432, 1
          %s1680 = smul.addr %s1679, 8
          %s1681 = scalar_lea.vmem [#allocation6], %s1680
          %1682 = dma.done %s1678, 128
        $region108: #{gpt_forward.7} parent=103 // pred_fallthru
          _
      $region104: #{gpt_forward.7} parent=5 // pred_fallthru
        _
    $region6: #{gpt_forward.7} parent=1 // loop_footer
      %s29 = sadd.s32 1, %s25
    $region7: #{gpt_forward.7} parent=1 // loop_footer_branch
      %24 = sbr.rel target = $region3
    $region8: #{gpt_forward.7} parent=1 // loop_exit
      _
    %1683 = vsyncpa [#allocation7], 1
    %s1684 = scalar_lea.sflag [#allocation7], 1
    %1685 = vsyncpa %s1684, 1

</llo_original>
